<compile_context>
chip_gen: v6e
topology: v6e:2x2x1
jax: 0.10.0
libtpu: 0.0.40
codegen_flags: <defaults>
</compile_context>

<pallas_src>
import functools

import jax
import jax.numpy as jnp
import numpy as np
from jax import lax
from jax.experimental import pallas as pl
from jax.experimental.pallas import tpu as pltpu

DROPOUT = 0.2          # eval-mode identity
BLOCK_SIZE = 128
N_HEAD = 6
PER_HEAD_DIM = 64
N_EMBD = N_HEAD * PER_HEAD_DIM  # 384


def _mha_fused_kernel(x_ref, wqkv_ref, wproj_ref, bproj_ref, o_ref,
                      *, n_head, head_dim):
    # x_ref:    (Bt, T, C)     f32
    # wqkv_ref: (C, 3*H*Hs)    bf16   [ Q(prescaled) heads | K heads | V heads ]
    # wproj_ref:(C, C)         bf16
    # bproj_ref:(1, C)         f32
    # o_ref:    (Bt, T, C)     f32    (lane-dense output block)
    H, Hs = n_head, head_dim
    Bt, T, C = x_ref.shape

    # One wide QKV matmul on the MXU: (Bt*T, C) @ (C, 3*H*Hs), f32 accumulation.
    # (Collapsing (Bt, T) is a layout no-op: T is a multiple of 8.)
    x2d = x_ref[...].reshape(Bt * T, C).astype(jnp.bfloat16)
    qkv = jnp.dot(x2d, wqkv_ref[...], preferred_element_type=jnp.float32)
    qkv_bf = qkv.astype(jnp.bfloat16)          # single lane-dense cast

    # Causal additive mask, built once, shared across Bt and all heads.
    row = lax.broadcasted_iota(jnp.int32, (T, T), 0)
    col = lax.broadcasted_iota(jnp.int32, (T, T), 1)
    neg = jnp.where(row >= col, 0.0, -1e30).astype(jnp.float32)

    # Per-head attention; output projection accumulated per head (no concat).
    acc = jnp.zeros((Bt * T, C), jnp.float32)
    for h in range(H):                                     # static unroll
        q = qkv_bf[:, h * Hs:(h + 1) * Hs].reshape(Bt, T, Hs)
        k = qkv_bf[:, (H + h) * Hs:(H + h + 1) * Hs].reshape(Bt, T, Hs)
        v = qkv_bf[:, (2 * H + h) * Hs:(2 * H + h + 1) * Hs].reshape(Bt, T, Hs)

        # q @ k^T per sequence (batched over Bt); scale already folded into q.
        s = jnp.einsum('bqd,bkd->bqk', q, k,
                       preferred_element_type=jnp.float32) + neg      # (Bt,T,T)

        # Softmax strictly in f32; divide via EUP reciprocal.
        m = jnp.max(s, axis=-1, keepdims=True)
        p = jnp.exp(s - m)
        inv = pl.reciprocal(jnp.sum(p, axis=-1, keepdims=True), approx=True)

        out_h = jnp.einsum('bqk,bkd->bqd', p.astype(jnp.bfloat16), v,
                           preferred_element_type=jnp.float32) * inv   # (Bt,T,Hs)

        # Accumulate output projection with a static, sublane-aligned slice of
        # w_proj; keeps live ranges to one head and the result lane-dense.
        acc = acc + jnp.dot(out_h.reshape(Bt * T, Hs).astype(jnp.bfloat16),
                            wproj_ref[h * Hs:(h + 1) * Hs, :],
                            preferred_element_type=jnp.float32)

    out = acc + bproj_ref[...]                             # (Bt*T, C) + (1, C)
    # TODO(synk): Dropout(p=0.2) skipped (eval-mode identity).
    o_ref[...] = out.reshape(Bt, T, C).astype(o_ref.dtype)


def init_mha_params(wq, wk, wv, w_proj, b_proj):
    """One-time weight prep (hoisted out of the forward path).

    wq/wk/wv: (H, C, Hs) per-head weights stored transposed (x @ w).
    Folds the reference's C**-0.5 score scale into the Q columns and casts the
    matmul weights to bf16 once.
    """
    H, C, Hs = wq.shape
    scale = C ** (-0.5)   # NOTE: reference scales by full embed dim C, not Hs.

    def _stack(w):  # (H, C, Hs) -> (C, H*Hs)
        return jnp.transpose(w, (1, 0, 2)).reshape(C, H * Hs)

    wqkv = jnp.concatenate([_stack(wq) * scale, _stack(wk), _stack(wv)],
                           axis=1).astype(jnp.bfloat16)
    return {
        "wqkv": wqkv,                                      # (C, 3*H*Hs) bf16
        "w_proj": w_proj.astype(jnp.bfloat16),             # (C, C)      bf16
        "b_proj": b_proj.reshape(1, C).astype(jnp.float32),  # (1, C)    f32
        "n_head": H,
        "head_dim": Hs,
    }


def _pick_batch_tile(B):
    # Largest power-of-two tile that still leaves a grid of length >= 2
    # (keeps both v7x TensorCores busy); otherwise 1.
    for bt in (8, 4, 2):
        if B % bt == 0 and (B // bt) >= 2:
            return bt
    return 1


def multi_head_attention(x, params, *, batch_tile=None):
    B, T, C = x.shape
    H, Hs = params["n_head"], params["head_dim"]
    wqkv, w_proj, b_proj = params["wqkv"], params["w_proj"], params["b_proj"]

    Bt = _pick_batch_tile(B) if batch_tile is None else batch_tile
    assert B % Bt == 0, "batch must be divisible by the batch tile"

    kernel = functools.partial(_mha_fused_kernel, n_head=H, head_dim=Hs)

    out = pl.pallas_call(
        kernel,
        out_shape=jax.ShapeDtypeStruct((B, T, C), x.dtype),
        grid=(B // Bt,),
        in_specs=[
            pl.BlockSpec((Bt, T, C), lambda b: (b, 0, 0)),
            pl.BlockSpec(wqkv.shape, lambda b: (0, 0)),
            pl.BlockSpec(w_proj.shape, lambda b: (0, 0)),
            pl.BlockSpec(b_proj.shape, lambda b: (0, 0)),
        ],
        out_specs=pl.BlockSpec((Bt, T, C), lambda b: (b, 0, 0)),
        compiler_params=pltpu.CompilerParams(
            dimension_semantics=("parallel",)),
    )(x, wqkv, w_proj, b_proj)
    return out


def _reference(x, wq, wk, wv, w_proj, b_proj):
    # Pure-JAX f32 reference mirroring the PyTorch forward (eval mode).
    B, T, C = x.shape
    outs = []
    for h in range(wq.shape[0]):
        q = x @ wq[h]
        k = x @ wk[h]
        v = x @ wv[h]
        wei = (q @ jnp.swapaxes(k, -2, -1)) * (C ** -0.5)
        mask = jnp.tril(jnp.ones((T, T)))
        wei = jnp.where(mask == 0, -jnp.inf, wei)
        wei = jax.nn.softmax(wei, axis=-1)
        outs.append(wei @ v)
    y = jnp.concatenate(outs, axis=-1)
    return y @ w_proj + b_proj[None, None, :]


if __name__ == "__main__":
    B, T = 2, 8
    C, H, Hs = N_EMBD, N_HEAD, PER_HEAD_DIM

    key = jax.random.PRNGKey(0)
    kx, kq, kk, kv, kw, kb = jax.random.split(key, 6)

    x = jax.random.normal(kx, (B, T, C), dtype=jnp.float32)
    # nn.Linear(N_EMBD, head_size, bias=False) weight is (Hs, C); store W.T per
    # head -> (H, C, Hs), init scaled like PyTorch's 1/sqrt(fan_in).
    s = 1.0 / np.sqrt(C)
    wq = jax.random.uniform(kq, (H, C, Hs), jnp.float32, -s, s)
    wk = jax.random.uniform(kk, (H, C, Hs), jnp.float32, -s, s)
    wv = jax.random.uniform(kv, (H, C, Hs), jnp.float32, -s, s)
    # nn.Linear(N_EMBD, N_EMBD) -> stored transposed as (C, C) plus bias (C,)
    w_proj = jax.random.uniform(kw, (C, C), jnp.float32, -s, s)
    b_proj = jax.random.uniform(kb, (C,), jnp.float32, -s, s)

    # One-time weight prep (would live alongside the module's parameters).
    params = init_mha_params(wq, wk, wv, w_proj, b_proj)
    params = jax.tree_util.tree_map(
        lambda a: jax.block_until_ready(a) if isinstance(a, jax.Array) else a,
        params)

    out = multi_head_attention(x, params)
    out = jax.block_until_ready(out)

    ref = _reference(x, wq, wk, wv, w_proj, b_proj)
    # Tolerance reflects bf16 MXU inputs (f32 accumulation); softmax is f32.
    np.testing.assert_allclose(np.asarray(out), np.asarray(ref),
                               rtol=1e-2, atol=1e-2)
    print("KERNEL_OK")
</pallas_src>

<mosaic_0001>
module attributes {stable_mosaic.version = 11 : i64} {
  func.func @_mha_fused_kernel(%arg0: i32, %arg1: memref<1x8x384xf32, #tpu.memory_space<vmem>>, %arg2: memref<384x1152xbf16, #tpu.memory_space<vmem>>, %arg3: memref<384x384xbf16, #tpu.memory_space<vmem>>, %arg4: memref<1x384xf32, #tpu.memory_space<vmem>>, %arg5: memref<1x8x384xf32, #tpu.memory_space<vmem>>) attributes {dimension_semantics = [#tpu.dimension_semantics<parallel>], iteration_bounds = array<i64: 2>, scalar_prefetch = 0 : i64, scratch_operands = 0 : i64, tpu.core_type = #tpu.core_type<tc>, window_params = [{transform_indices = @transform_0, window_bounds = array<i64: 1, 8, 384>}, {pipeline_mode = #tpu.pipeline_mode<synchronous>, transform_indices = @transform_1, window_bounds = array<i64: 384, 1152>}, {pipeline_mode = #tpu.pipeline_mode<synchronous>, transform_indices = @transform_2, window_bounds = array<i64: 384, 384>}, {pipeline_mode = #tpu.pipeline_mode<synchronous>, transform_indices = @transform_3, window_bounds = array<i64: 1, 384>}, {transform_indices = @transform_4, window_bounds = array<i64: 1, 8, 384>}]} {
    %c0 = arith.constant 0 : index
    %c0_0 = arith.constant 0 : index
    %c0_1 = arith.constant 0 : index
    %0 = vector.load %arg1[%c0, %c0_0, %c0_1] : memref<1x8x384xf32, #tpu.memory_space<vmem>>, vector<1x8x384xf32>
    %1 = vector.shape_cast %0 : vector<1x8x384xf32> to vector<8x384xf32>
    %2 = arith.truncf %1 : vector<8x384xf32> to vector<8x384xbf16>
    %c0_2 = arith.constant 0 : index
    %c0_3 = arith.constant 0 : index
    %3 = vector.load %arg2[%c0_2, %c0_3] : memref<384x1152xbf16, #tpu.memory_space<vmem>>, vector<384x1152xbf16>
    %cst = arith.constant dense<0.000000e+00> : vector<8x1152xf32>
    %4 = tpu.matmul %2, %3, %cst {dimension_numbers = #tpu.dot_dimension_numbers<[1], [0], [0], [1], [0, 0, 1, 1], [], []>} : vector<8x384xbf16>, vector<384x1152xbf16>, vector<8x1152xf32> -> vector<8x1152xf32>
    %5 = arith.truncf %4 : vector<8x1152xf32> to vector<8x1152xbf16>
    %6 = tpu.iota {dimensions = array<i32: 0>} : vector<8x8xi32>
    %7 = tpu.iota {dimensions = array<i32: 1>} : vector<8x8xi32>
    %8 = arith.cmpi sge, %6, %7 : vector<8x8xi32>
    %cst_4 = arith.constant 0.000000e+00 : f32
    %cst_5 = arith.constant -1.000000e+30 : f32
    %9 = vector.broadcast %cst_4 : f32 to vector<8x8xf32>
    %10 = vector.broadcast %cst_5 : f32 to vector<8x8xf32>
    %11 = arith.select %8, %9, %10 : vector<8x8xi1>, vector<8x8xf32>
    %cst_6 = arith.constant 0.000000e+00 : f32
    %12 = vector.broadcast %cst_6 : f32 to vector<8x384xf32>
    %13 = vector.extract_strided_slice %5 {offsets = [0, 0], sizes = [8, 64], strides = [1, 1]} : vector<8x1152xbf16> to vector<8x64xbf16>
    %14 = vector.shape_cast %13 : vector<8x64xbf16> to vector<1x8x64xbf16>
    %15 = vector.extract_strided_slice %5 {offsets = [0, 384], sizes = [8, 64], strides = [1, 1]} : vector<8x1152xbf16> to vector<8x64xbf16>
    %16 = vector.shape_cast %15 : vector<8x64xbf16> to vector<1x8x64xbf16>
    %17 = vector.extract_strided_slice %5 {offsets = [0, 768], sizes = [8, 64], strides = [1, 1]} : vector<8x1152xbf16> to vector<8x64xbf16>
    %18 = vector.shape_cast %17 : vector<8x64xbf16> to vector<1x8x64xbf16>
    "tpu.trace_start"() <{level = 10 : i32, message = "bqd,bkd->bqk"}> : () -> ()
    %cst_7 = arith.constant dense<0.000000e+00> : vector<1x8x8xf32>
    %19 = tpu.matmul %14, %16, %cst_7 {dimension_numbers = #tpu.dot_dimension_numbers<[2], [2], [1], [1], [0, 0, 0, 1, 1, 1], [0], [0]>} : vector<1x8x64xbf16>, vector<1x8x64xbf16>, vector<1x8x8xf32> -> vector<1x8x8xf32>
    "tpu.trace_stop"() : () -> ()
    %20 = vector.shape_cast %11 : vector<8x8xf32> to vector<1x8x8xf32>
    %21 = arith.addf %19, %20 : vector<1x8x8xf32>
    %cst_8 = arith.constant dense<0xFF800000> : vector<1x8xf32>
    %22 = vector.multi_reduction <maximumf>, %21, %cst_8 [2] : vector<1x8x8xf32> to vector<1x8xf32>
    %23 = vector.shape_cast %22 : vector<1x8xf32> to vector<1x8x1xf32>
    %24 = vector.broadcast %23 : vector<1x8x1xf32> to vector<1x8x8xf32>
    %25 = arith.subf %21, %24 : vector<1x8x8xf32>
    %26 = math.exp %25 : vector<1x8x8xf32>
    %cst_9 = arith.constant dense<0.000000e+00> : vector<1x8xf32>
    %27 = vector.multi_reduction <add>, %26, %cst_9 [2] : vector<1x8x8xf32> to vector<1x8xf32>
    %28 = vector.shape_cast %27 : vector<1x8xf32> to vector<1x8x1xf32>
    %29 = tpu.reciprocal %28 {approx = true} : vector<1x8x1xf32> -> vector<1x8x1xf32>
    %30 = arith.truncf %26 : vector<1x8x8xf32> to vector<1x8x8xbf16>
    "tpu.trace_start"() <{level = 10 : i32, message = "bqk,bkd->bqd"}> : () -> ()
    %cst_10 = arith.constant dense<0.000000e+00> : vector<1x8x64xf32>
    %31 = tpu.matmul %30, %18, %cst_10 {dimension_numbers = #tpu.dot_dimension_numbers<[2], [1], [1], [2], [0, 0, 0, 1, 1, 2], [0], [0]>} : vector<1x8x8xbf16>, vector<1x8x64xbf16>, vector<1x8x64xf32> -> vector<1x8x64xf32>
    "tpu.trace_stop"() : () -> ()
    %32 = vector.broadcast %29 : vector<1x8x1xf32> to vector<1x8x64xf32>
    %33 = arith.mulf %31, %32 : vector<1x8x64xf32>
    %34 = vector.shape_cast %33 : vector<1x8x64xf32> to vector<8x64xf32>
    %35 = arith.truncf %34 : vector<8x64xf32> to vector<8x64xbf16>
    %c0_11 = arith.constant 0 : index
    %c0_12 = arith.constant 0 : index
    %36 = vector.load %arg3[%c0_11, %c0_12] : memref<384x384xbf16, #tpu.memory_space<vmem>>, vector<64x384xbf16>
    %cst_13 = arith.constant dense<0.000000e+00> : vector<8x384xf32>
    %37 = tpu.matmul %35, %36, %cst_13 {dimension_numbers = #tpu.dot_dimension_numbers<[1], [0], [0], [1], [0, 0, 1, 1], [], []>} : vector<8x64xbf16>, vector<64x384xbf16>, vector<8x384xf32> -> vector<8x384xf32>
    %38 = arith.addf %12, %37 : vector<8x384xf32>
    %39 = vector.extract_strided_slice %5 {offsets = [0, 64], sizes = [8, 64], strides = [1, 1]} : vector<8x1152xbf16> to vector<8x64xbf16>
    %40 = vector.shape_cast %39 : vector<8x64xbf16> to vector<1x8x64xbf16>
    %41 = vector.extract_strided_slice %5 {offsets = [0, 448], sizes = [8, 64], strides = [1, 1]} : vector<8x1152xbf16> to vector<8x64xbf16>
    %42 = vector.shape_cast %41 : vector<8x64xbf16> to vector<1x8x64xbf16>
    %43 = vector.extract_strided_slice %5 {offsets = [0, 832], sizes = [8, 64], strides = [1, 1]} : vector<8x1152xbf16> to vector<8x64xbf16>
    %44 = vector.shape_cast %43 : vector<8x64xbf16> to vector<1x8x64xbf16>
    "tpu.trace_start"() <{level = 10 : i32, message = "bqd,bkd->bqk"}> : () -> ()
    %cst_14 = arith.constant dense<0.000000e+00> : vector<1x8x8xf32>
    %45 = tpu.matmul %40, %42, %cst_14 {dimension_numbers = #tpu.dot_dimension_numbers<[2], [2], [1], [1], [0, 0, 0, 1, 1, 1], [0], [0]>} : vector<1x8x64xbf16>, vector<1x8x64xbf16>, vector<1x8x8xf32> -> vector<1x8x8xf32>
    "tpu.trace_stop"() : () -> ()
    %46 = vector.shape_cast %11 : vector<8x8xf32> to vector<1x8x8xf32>
    %47 = arith.addf %45, %46 : vector<1x8x8xf32>
    %cst_15 = arith.constant dense<0xFF800000> : vector<1x8xf32>
    %48 = vector.multi_reduction <maximumf>, %47, %cst_15 [2] : vector<1x8x8xf32> to vector<1x8xf32>
    %49 = vector.shape_cast %48 : vector<1x8xf32> to vector<1x8x1xf32>
    %50 = vector.broadcast %49 : vector<1x8x1xf32> to vector<1x8x8xf32>
    %51 = arith.subf %47, %50 : vector<1x8x8xf32>
    %52 = math.exp %51 : vector<1x8x8xf32>
    %cst_16 = arith.constant dense<0.000000e+00> : vector<1x8xf32>
    %53 = vector.multi_reduction <add>, %52, %cst_16 [2] : vector<1x8x8xf32> to vector<1x8xf32>
    %54 = vector.shape_cast %53 : vector<1x8xf32> to vector<1x8x1xf32>
    %55 = tpu.reciprocal %54 {approx = true} : vector<1x8x1xf32> -> vector<1x8x1xf32>
    %56 = arith.truncf %52 : vector<1x8x8xf32> to vector<1x8x8xbf16>
    "tpu.trace_start"() <{level = 10 : i32, message = "bqk,bkd->bqd"}> : () -> ()
    %cst_17 = arith.constant dense<0.000000e+00> : vector<1x8x64xf32>
    %57 = tpu.matmul %56, %44, %cst_17 {dimension_numbers = #tpu.dot_dimension_numbers<[2], [1], [1], [2], [0, 0, 0, 1, 1, 2], [0], [0]>} : vector<1x8x8xbf16>, vector<1x8x64xbf16>, vector<1x8x64xf32> -> vector<1x8x64xf32>
    "tpu.trace_stop"() : () -> ()
    %58 = vector.broadcast %55 : vector<1x8x1xf32> to vector<1x8x64xf32>
    %59 = arith.mulf %57, %58 : vector<1x8x64xf32>
    %60 = vector.shape_cast %59 : vector<1x8x64xf32> to vector<8x64xf32>
    %61 = arith.truncf %60 : vector<8x64xf32> to vector<8x64xbf16>
    %c64 = arith.constant 64 : index
    %c0_18 = arith.constant 0 : index
    %62 = vector.load %arg3[%c64, %c0_18] : memref<384x384xbf16, #tpu.memory_space<vmem>>, vector<64x384xbf16>
    %cst_19 = arith.constant dense<0.000000e+00> : vector<8x384xf32>
    %63 = tpu.matmul %61, %62, %cst_19 {dimension_numbers = #tpu.dot_dimension_numbers<[1], [0], [0], [1], [0, 0, 1, 1], [], []>} : vector<8x64xbf16>, vector<64x384xbf16>, vector<8x384xf32> -> vector<8x384xf32>
    %64 = arith.addf %38, %63 : vector<8x384xf32>
    %65 = vector.extract_strided_slice %5 {offsets = [0, 128], sizes = [8, 64], strides = [1, 1]} : vector<8x1152xbf16> to vector<8x64xbf16>
    %66 = vector.shape_cast %65 : vector<8x64xbf16> to vector<1x8x64xbf16>
    %67 = vector.extract_strided_slice %5 {offsets = [0, 512], sizes = [8, 64], strides = [1, 1]} : vector<8x1152xbf16> to vector<8x64xbf16>
    %68 = vector.shape_cast %67 : vector<8x64xbf16> to vector<1x8x64xbf16>
    %69 = vector.extract_strided_slice %5 {offsets = [0, 896], sizes = [8, 64], strides = [1, 1]} : vector<8x1152xbf16> to vector<8x64xbf16>
    %70 = vector.shape_cast %69 : vector<8x64xbf16> to vector<1x8x64xbf16>
    "tpu.trace_start"() <{level = 10 : i32, message = "bqd,bkd->bqk"}> : () -> ()
    %cst_20 = arith.constant dense<0.000000e+00> : vector<1x8x8xf32>
    %71 = tpu.matmul %66, %68, %cst_20 {dimension_numbers = #tpu.dot_dimension_numbers<[2], [2], [1], [1], [0, 0, 0, 1, 1, 1], [0], [0]>} : vector<1x8x64xbf16>, vector<1x8x64xbf16>, vector<1x8x8xf32> -> vector<1x8x8xf32>
    "tpu.trace_stop"() : () -> ()
    %72 = vector.shape_cast %11 : vector<8x8xf32> to vector<1x8x8xf32>
    %73 = arith.addf %71, %72 : vector<1x8x8xf32>
    %cst_21 = arith.constant dense<0xFF800000> : vector<1x8xf32>
    %74 = vector.multi_reduction <maximumf>, %73, %cst_21 [2] : vector<1x8x8xf32> to vector<1x8xf32>
    %75 = vector.shape_cast %74 : vector<1x8xf32> to vector<1x8x1xf32>
    %76 = vector.broadcast %75 : vector<1x8x1xf32> to vector<1x8x8xf32>
    %77 = arith.subf %73, %76 : vector<1x8x8xf32>
    %78 = math.exp %77 : vector<1x8x8xf32>
    %cst_22 = arith.constant dense<0.000000e+00> : vector<1x8xf32>
    %79 = vector.multi_reduction <add>, %78, %cst_22 [2] : vector<1x8x8xf32> to vector<1x8xf32>
    %80 = vector.shape_cast %79 : vector<1x8xf32> to vector<1x8x1xf32>
    %81 = tpu.reciprocal %80 {approx = true} : vector<1x8x1xf32> -> vector<1x8x1xf32>
    %82 = arith.truncf %78 : vector<1x8x8xf32> to vector<1x8x8xbf16>
    "tpu.trace_start"() <{level = 10 : i32, message = "bqk,bkd->bqd"}> : () -> ()
    %cst_23 = arith.constant dense<0.000000e+00> : vector<1x8x64xf32>
    %83 = tpu.matmul %82, %70, %cst_23 {dimension_numbers = #tpu.dot_dimension_numbers<[2], [1], [1], [2], [0, 0, 0, 1, 1, 2], [0], [0]>} : vector<1x8x8xbf16>, vector<1x8x64xbf16>, vector<1x8x64xf32> -> vector<1x8x64xf32>
    "tpu.trace_stop"() : () -> ()
    %84 = vector.broadcast %81 : vector<1x8x1xf32> to vector<1x8x64xf32>
    %85 = arith.mulf %83, %84 : vector<1x8x64xf32>
    %86 = vector.shape_cast %85 : vector<1x8x64xf32> to vector<8x64xf32>
    %87 = arith.truncf %86 : vector<8x64xf32> to vector<8x64xbf16>
    %c128 = arith.constant 128 : index
    %c0_24 = arith.constant 0 : index
    %88 = vector.load %arg3[%c128, %c0_24] : memref<384x384xbf16, #tpu.memory_space<vmem>>, vector<64x384xbf16>
    %cst_25 = arith.constant dense<0.000000e+00> : vector<8x384xf32>
    %89 = tpu.matmul %87, %88, %cst_25 {dimension_numbers = #tpu.dot_dimension_numbers<[1], [0], [0], [1], [0, 0, 1, 1], [], []>} : vector<8x64xbf16>, vector<64x384xbf16>, vector<8x384xf32> -> vector<8x384xf32>
    %90 = arith.addf %64, %89 : vector<8x384xf32>
    %91 = vector.extract_strided_slice %5 {offsets = [0, 192], sizes = [8, 64], strides = [1, 1]} : vector<8x1152xbf16> to vector<8x64xbf16>
    %92 = vector.shape_cast %91 : vector<8x64xbf16> to vector<1x8x64xbf16>
    %93 = vector.extract_strided_slice %5 {offsets = [0, 576], sizes = [8, 64], strides = [1, 1]} : vector<8x1152xbf16> to vector<8x64xbf16>
    %94 = vector.shape_cast %93 : vector<8x64xbf16> to vector<1x8x64xbf16>
    %95 = vector.extract_strided_slice %5 {offsets = [0, 960], sizes = [8, 64], strides = [1, 1]} : vector<8x1152xbf16> to vector<8x64xbf16>
    %96 = vector.shape_cast %95 : vector<8x64xbf16> to vector<1x8x64xbf16>
    "tpu.trace_start"() <{level = 10 : i32, message = "bqd,bkd->bqk"}> : () -> ()
    %cst_26 = arith.constant dense<0.000000e+00> : vector<1x8x8xf32>
    %97 = tpu.matmul %92, %94, %cst_26 {dimension_numbers = #tpu.dot_dimension_numbers<[2], [2], [1], [1], [0, 0, 0, 1, 1, 1], [0], [0]>} : vector<1x8x64xbf16>, vector<1x8x64xbf16>, vector<1x8x8xf32> -> vector<1x8x8xf32>
    "tpu.trace_stop"() : () -> ()
    %98 = vector.shape_cast %11 : vector<8x8xf32> to vector<1x8x8xf32>
    %99 = arith.addf %97, %98 : vector<1x8x8xf32>
    %cst_27 = arith.constant dense<0xFF800000> : vector<1x8xf32>
    %100 = vector.multi_reduction <maximumf>, %99, %cst_27 [2] : vector<1x8x8xf32> to vector<1x8xf32>
    %101 = vector.shape_cast %100 : vector<1x8xf32> to vector<1x8x1xf32>
    %102 = vector.broadcast %101 : vector<1x8x1xf32> to vector<1x8x8xf32>
    %103 = arith.subf %99, %102 : vector<1x8x8xf32>
    %104 = math.exp %103 : vector<1x8x8xf32>
    %cst_28 = arith.constant dense<0.000000e+00> : vector<1x8xf32>
    %105 = vector.multi_reduction <add>, %104, %cst_28 [2] : vector<1x8x8xf32> to vector<1x8xf32>
    %106 = vector.shape_cast %105 : vector<1x8xf32> to vector<1x8x1xf32>
    %107 = tpu.reciprocal %106 {approx = true} : vector<1x8x1xf32> -> vector<1x8x1xf32>
    %108 = arith.truncf %104 : vector<1x8x8xf32> to vector<1x8x8xbf16>
    "tpu.trace_start"() <{level = 10 : i32, message = "bqk,bkd->bqd"}> : () -> ()
    %cst_29 = arith.constant dense<0.000000e+00> : vector<1x8x64xf32>
    %109 = tpu.matmul %108, %96, %cst_29 {dimension_numbers = #tpu.dot_dimension_numbers<[2], [1], [1], [2], [0, 0, 0, 1, 1, 2], [0], [0]>} : vector<1x8x8xbf16>, vector<1x8x64xbf16>, vector<1x8x64xf32> -> vector<1x8x64xf32>
    "tpu.trace_stop"() : () -> ()
    %110 = vector.broadcast %107 : vector<1x8x1xf32> to vector<1x8x64xf32>
    %111 = arith.mulf %109, %110 : vector<1x8x64xf32>
    %112 = vector.shape_cast %111 : vector<1x8x64xf32> to vector<8x64xf32>
    %113 = arith.truncf %112 : vector<8x64xf32> to vector<8x64xbf16>
    %c192 = arith.constant 192 : index
    %c0_30 = arith.constant 0 : index
    %114 = vector.load %arg3[%c192, %c0_30] : memref<384x384xbf16, #tpu.memory_space<vmem>>, vector<64x384xbf16>
    %cst_31 = arith.constant dense<0.000000e+00> : vector<8x384xf32>
    %115 = tpu.matmul %113, %114, %cst_31 {dimension_numbers = #tpu.dot_dimension_numbers<[1], [0], [0], [1], [0, 0, 1, 1], [], []>} : vector<8x64xbf16>, vector<64x384xbf16>, vector<8x384xf32> -> vector<8x384xf32>
    %116 = arith.addf %90, %115 : vector<8x384xf32>
    %117 = vector.extract_strided_slice %5 {offsets = [0, 256], sizes = [8, 64], strides = [1, 1]} : vector<8x1152xbf16> to vector<8x64xbf16>
    %118 = vector.shape_cast %117 : vector<8x64xbf16> to vector<1x8x64xbf16>
    %119 = vector.extract_strided_slice %5 {offsets = [0, 640], sizes = [8, 64], strides = [1, 1]} : vector<8x1152xbf16> to vector<8x64xbf16>
    %120 = vector.shape_cast %119 : vector<8x64xbf16> to vector<1x8x64xbf16>
    %121 = vector.extract_strided_slice %5 {offsets = [0, 1024], sizes = [8, 64], strides = [1, 1]} : vector<8x1152xbf16> to vector<8x64xbf16>
    %122 = vector.shape_cast %121 : vector<8x64xbf16> to vector<1x8x64xbf16>
    "tpu.trace_start"() <{level = 10 : i32, message = "bqd,bkd->bqk"}> : () -> ()
    %cst_32 = arith.constant dense<0.000000e+00> : vector<1x8x8xf32>
    %123 = tpu.matmul %118, %120, %cst_32 {dimension_numbers = #tpu.dot_dimension_numbers<[2], [2], [1], [1], [0, 0, 0, 1, 1, 1], [0], [0]>} : vector<1x8x64xbf16>, vector<1x8x64xbf16>, vector<1x8x8xf32> -> vector<1x8x8xf32>
    "tpu.trace_stop"() : () -> ()
    %124 = vector.shape_cast %11 : vector<8x8xf32> to vector<1x8x8xf32>
    %125 = arith.addf %123, %124 : vector<1x8x8xf32>
    %cst_33 = arith.constant dense<0xFF800000> : vector<1x8xf32>
    %126 = vector.multi_reduction <maximumf>, %125, %cst_33 [2] : vector<1x8x8xf32> to vector<1x8xf32>
    %127 = vector.shape_cast %126 : vector<1x8xf32> to vector<1x8x1xf32>
    %128 = vector.broadcast %127 : vector<1x8x1xf32> to vector<1x8x8xf32>
    %129 = arith.subf %125, %128 : vector<1x8x8xf32>
    %130 = math.exp %129 : vector<1x8x8xf32>
    %cst_34 = arith.constant dense<0.000000e+00> : vector<1x8xf32>
    %131 = vector.multi_reduction <add>, %130, %cst_34 [2] : vector<1x8x8xf32> to vector<1x8xf32>
    %132 = vector.shape_cast %131 : vector<1x8xf32> to vector<1x8x1xf32>
    %133 = tpu.reciprocal %132 {approx = true} : vector<1x8x1xf32> -> vector<1x8x1xf32>
    %134 = arith.truncf %130 : vector<1x8x8xf32> to vector<1x8x8xbf16>
    "tpu.trace_start"() <{level = 10 : i32, message = "bqk,bkd->bqd"}> : () -> ()
    %cst_35 = arith.constant dense<0.000000e+00> : vector<1x8x64xf32>
    %135 = tpu.matmul %134, %122, %cst_35 {dimension_numbers = #tpu.dot_dimension_numbers<[2], [1], [1], [2], [0, 0, 0, 1, 1, 2], [0], [0]>} : vector<1x8x8xbf16>, vector<1x8x64xbf16>, vector<1x8x64xf32> -> vector<1x8x64xf32>
    "tpu.trace_stop"() : () -> ()
    %136 = vector.broadcast %133 : vector<1x8x1xf32> to vector<1x8x64xf32>
    %137 = arith.mulf %135, %136 : vector<1x8x64xf32>
    %138 = vector.shape_cast %137 : vector<1x8x64xf32> to vector<8x64xf32>
    %139 = arith.truncf %138 : vector<8x64xf32> to vector<8x64xbf16>
    %c256 = arith.constant 256 : index
    %c0_36 = arith.constant 0 : index
    %140 = vector.load %arg3[%c256, %c0_36] : memref<384x384xbf16, #tpu.memory_space<vmem>>, vector<64x384xbf16>
    %cst_37 = arith.constant dense<0.000000e+00> : vector<8x384xf32>
    %141 = tpu.matmul %139, %140, %cst_37 {dimension_numbers = #tpu.dot_dimension_numbers<[1], [0], [0], [1], [0, 0, 1, 1], [], []>} : vector<8x64xbf16>, vector<64x384xbf16>, vector<8x384xf32> -> vector<8x384xf32>
    %142 = arith.addf %116, %141 : vector<8x384xf32>
    %143 = vector.extract_strided_slice %5 {offsets = [0, 320], sizes = [8, 64], strides = [1, 1]} : vector<8x1152xbf16> to vector<8x64xbf16>
    %144 = vector.shape_cast %143 : vector<8x64xbf16> to vector<1x8x64xbf16>
    %145 = vector.extract_strided_slice %5 {offsets = [0, 704], sizes = [8, 64], strides = [1, 1]} : vector<8x1152xbf16> to vector<8x64xbf16>
    %146 = vector.shape_cast %145 : vector<8x64xbf16> to vector<1x8x64xbf16>
    %147 = vector.extract_strided_slice %5 {offsets = [0, 1088], sizes = [8, 64], strides = [1, 1]} : vector<8x1152xbf16> to vector<8x64xbf16>
    %148 = vector.shape_cast %147 : vector<8x64xbf16> to vector<1x8x64xbf16>
    "tpu.trace_start"() <{level = 10 : i32, message = "bqd,bkd->bqk"}> : () -> ()
    %cst_38 = arith.constant dense<0.000000e+00> : vector<1x8x8xf32>
    %149 = tpu.matmul %144, %146, %cst_38 {dimension_numbers = #tpu.dot_dimension_numbers<[2], [2], [1], [1], [0, 0, 0, 1, 1, 1], [0], [0]>} : vector<1x8x64xbf16>, vector<1x8x64xbf16>, vector<1x8x8xf32> -> vector<1x8x8xf32>
    "tpu.trace_stop"() : () -> ()
    %150 = vector.shape_cast %11 : vector<8x8xf32> to vector<1x8x8xf32>
    %151 = arith.addf %149, %150 : vector<1x8x8xf32>
    %cst_39 = arith.constant dense<0xFF800000> : vector<1x8xf32>
    %152 = vector.multi_reduction <maximumf>, %151, %cst_39 [2] : vector<1x8x8xf32> to vector<1x8xf32>
    %153 = vector.shape_cast %152 : vector<1x8xf32> to vector<1x8x1xf32>
    %154 = vector.broadcast %153 : vector<1x8x1xf32> to vector<1x8x8xf32>
    %155 = arith.subf %151, %154 : vector<1x8x8xf32>
    %156 = math.exp %155 : vector<1x8x8xf32>
    %cst_40 = arith.constant dense<0.000000e+00> : vector<1x8xf32>
    %157 = vector.multi_reduction <add>, %156, %cst_40 [2] : vector<1x8x8xf32> to vector<1x8xf32>
    %158 = vector.shape_cast %157 : vector<1x8xf32> to vector<1x8x1xf32>
    %159 = tpu.reciprocal %158 {approx = true} : vector<1x8x1xf32> -> vector<1x8x1xf32>
    %160 = arith.truncf %156 : vector<1x8x8xf32> to vector<1x8x8xbf16>
    "tpu.trace_start"() <{level = 10 : i32, message = "bqk,bkd->bqd"}> : () -> ()
    %cst_41 = arith.constant dense<0.000000e+00> : vector<1x8x64xf32>
    %161 = tpu.matmul %160, %148, %cst_41 {dimension_numbers = #tpu.dot_dimension_numbers<[2], [1], [1], [2], [0, 0, 0, 1, 1, 2], [0], [0]>} : vector<1x8x8xbf16>, vector<1x8x64xbf16>, vector<1x8x64xf32> -> vector<1x8x64xf32>
    "tpu.trace_stop"() : () -> ()
    %162 = vector.broadcast %159 : vector<1x8x1xf32> to vector<1x8x64xf32>
    %163 = arith.mulf %161, %162 : vector<1x8x64xf32>
    %164 = vector.shape_cast %163 : vector<1x8x64xf32> to vector<8x64xf32>
    %165 = arith.truncf %164 : vector<8x64xf32> to vector<8x64xbf16>
    %c320 = arith.constant 320 : index
    %c0_42 = arith.constant 0 : index
    %166 = vector.load %arg3[%c320, %c0_42] : memref<384x384xbf16, #tpu.memory_space<vmem>>, vector<64x384xbf16>
    %cst_43 = arith.constant dense<0.000000e+00> : vector<8x384xf32>
    %167 = tpu.matmul %165, %166, %cst_43 {dimension_numbers = #tpu.dot_dimension_numbers<[1], [0], [0], [1], [0, 0, 1, 1], [], []>} : vector<8x64xbf16>, vector<64x384xbf16>, vector<8x384xf32> -> vector<8x384xf32>
    %168 = arith.addf %142, %167 : vector<8x384xf32>
    %c0_44 = arith.constant 0 : index
    %c0_45 = arith.constant 0 : index
    %169 = vector.load %arg4[%c0_44, %c0_45] : memref<1x384xf32, #tpu.memory_space<vmem>>, vector<1x384xf32>
    %170 = vector.broadcast %169 : vector<1x384xf32> to vector<8x384xf32>
    %171 = arith.addf %168, %170 : vector<8x384xf32>
    %172 = vector.shape_cast %171 : vector<8x384xf32> to vector<1x8x384xf32>
    %c0_46 = arith.constant 0 : index
    %c0_47 = arith.constant 0 : index
    %c0_48 = arith.constant 0 : index
    %173 = vector.load %arg5[%c0_46, %c0_47, %c0_48] : memref<1x8x384xf32, #tpu.memory_space<vmem>>, vector<1x8x384xf32>
    tpu.vector_store %arg5[%c0_46, %c0_47, %c0_48], %172 {strides = array<i32>} : memref<1x8x384xf32, #tpu.memory_space<vmem>>, vector<1x8x384xf32>,
    return
  }
  func.func @transform_0(%arg0: i32) -> (i32, i32, i32) {
    %c0_i32 = arith.constant 0 : i32
    %c0_i32_0 = arith.constant 0 : i32
    %c0_i32_1 = arith.constant 0 : i32
    return %arg0, %c0_i32, %c0_i32_0 : i32, i32, i32
  }
  func.func @transform_1(%arg0: i32) -> (i32, i32) {
    %c0_i32 = arith.constant 0 : i32
    %c0_i32_0 = arith.constant 0 : i32
    %c0_i32_1 = arith.constant 0 : i32
    return %c0_i32, %c0_i32_0 : i32, i32
  }
  func.func @transform_2(%arg0: i32) -> (i32, i32) {
    %c0_i32 = arith.constant 0 : i32
    %c0_i32_0 = arith.constant 0 : i32
    %c0_i32_1 = arith.constant 0 : i32
    return %c0_i32, %c0_i32_0 : i32, i32
  }
  func.func @transform_3(%arg0: i32) -> (i32, i32) {
    %c0_i32 = arith.constant 0 : i32
    %c0_i32_0 = arith.constant 0 : i32
    %c0_i32_1 = arith.constant 0 : i32
    return %c0_i32, %c0_i32_0 : i32, i32
  }
  func.func @transform_4(%arg0: i32) -> (i32, i32, i32) {
    %c0_i32 = arith.constant 0 : i32
    %c0_i32_0 = arith.constant 0 : i32
    %c0_i32_1 = arith.constant 0 : i32
    return %arg0, %c0_i32, %c0_i32_0 : i32, i32, i32
  }
}

</mosaic_0001>

<llo_original>
// kernel: tpu_custom_call.1
$region0: #{tpu_custom_call.1}
  #allocation0 [shape = 'u32[]', space=smem, size = 0x4, offset = 0x4, fixed_abs, tag = 'smem constant byte address 0x4 - core index']
  #allocation1 [shape = 'u32[144,128]{1,0:T(1,128)}', space=vmem, size = 0x12000, scoped, tag = 'internal scratch']
  %s0 = inlined_call_operand.hbm [shape: f32[2,8,384], index: 0, kind: input, shape index: {}]
  %s1 = inlined_call_operand.hbm [shape: bf16[384,1152], index: 1, kind: input, shape index: {}]
  %s2 = inlined_call_operand.hbm [shape: bf16[384,384], index: 2, kind: input, shape index: {}]
  %s3 = inlined_call_operand.vmem [shape: f32[1,384], index: 3, kind: input, shape index: {}]
  %s4 = inlined_call_operand.hbm [shape: f32[2,8,384], index: 4, kind: output, shape index: {}]
  %s5 = sld [smem:[#allocation0]]
  $region61: #{tpu_custom_call.1} parent=0
    _
  %s7 = ssub.s32 1, %s5
  %s8 = scalar_select 0, %s7, %s5
  $region1: #{tpu_custom_call.1} parent=0
    #allocation2 [shape = 'u8[24576]{0}', space=vmem, size = 0x6000, scoped, tag = 'input window, operand 0']
    #allocation3 [shape = 's32[2]{0}', space=sflag, size = 0x8, scoped, tag = 'scoped memory for tpu_custom_call.1']
    #allocation4 [shape = 's32[2]{0}', space=sflag, size = 0x8, scoped, tag = 'scoped memory for tpu_custom_call.1']
    #allocation5 [shape = 'u8[884736]{0}', space=vmem, size = 0xd8000, scoped, tag = 'input window, operand 1, single buffered']
    #allocation6 [shape = 's32[1]{0}', space=sflag, size = 0x4, scoped, tag = 'scoped memory for tpu_custom_call.1']
    #allocation7 [shape = 'u8[294912]{0}', space=vmem, size = 0x48000, scoped, tag = 'input window, operand 2, single buffered']
    #allocation8 [shape = 'u8[24576]{0}', space=vmem, size = 0x6000, scoped, tag = 'output window, operand 0']
    %9 = vsyncpa [#allocation3], 0
    %s10 = scalar_lea.sflag [#allocation3], 1
    %11 = vsyncpa %s10, 0
    %12 = vsyncpa [#allocation6], 0
    %13 = vsyncpa [#allocation4], 0
    %s14 = scalar_lea.sflag [#allocation4], 1
    %15 = vsyncpa %s14, 0
    loop: start=0, step=1, limit=4
    $region2: #{tpu_custom_call.1} parent=1 // loop_pre_header
      _
    $region3: #{tpu_custom_call.1} parent=1 // loop_header
      %s17 = sphi 0, %s21
      %p18 = scmp.ge.s32.totalorder %s17, 4
      %s27 = sphi 0, %s29
      %s30 = sphi 0, %s27
      %s31 = sphi 0, %s30
      %s47 = sphi 0, %s31
      %s51 = sphi 0, %s51
      %s53 = sphi 0, %s51
      %s54 = sphi 0, %s53
      %s68 = sphi 0, %s54
      %s72 = sphi 0, %s72
      %s74 = sphi 0, %s72
      %s75 = sphi 0, %s74
      %s89 = sphi 0, %s75
      %s93 = sphi 0, %s93
      %s95 = sphi 0, %s93
      %s96 = sphi 0, %s95
      %s110 = sphi 0, %s96
      %s116 = sphi 0, %s118
      %s119 = sphi 0, %s116
      %s120 = sphi 0, %s119
      %s136 = sphi 0, %s120
    $region4: #{tpu_custom_call.1} parent=1 // loop_header_branch
      %20 = sbr.rel (%p18) target = $region8
    $region5: #{tpu_custom_call.1} parent=1 // loop_body
      %s22 = ssub.s32 %s17, 1
      %s23 = ssub.s32 %s17, 2
      %s24 = sadd.s32 %s17, 1
      %s25 = ssub.s32 %s17, %s24
      %p26 = scmp.eq.s32.totalorder %s25, 0
      %s28 = sadd.s32 %s27, 1
      %s29 = scalar_select %p26, %s27, %s28
      %p32 = pneg %p26
      %p33 = scmp.eq.s32.totalorder %s17, 1
      %p34 = por %p32, %p33
      %p35 = scmp.ne.s32.totalorder %s27, %s30
      %p36 = scmp.eq.s32.totalorder %s17, 0
      %p37 = por %p35, %p36
      %p38 = scmp.ne.s32.totalorder %s27, %s30
      %p39 = scmp.eq.s32.totalorder %s22, 1
      %p40 = por %p38, %p39
      %p41 = scmp.ne.s32.totalorder %s30, %s31
      %p42 = scmp.eq.s32.totalorder %s22, 0
      %p43 = por %p41, %p42
      %p44 = scmp.ne.s32.totalorder %s30, %s31
      %p45 = scmp.eq.s32.totalorder %s23, 1
      %p46 = por %p44, %p45
      %p48 = scmp.ne.s32.totalorder %s31, %s47
      %p49 = scmp.eq.s32.totalorder %s23, 0
      %p50 = por %p48, %p49
      %s52 = sadd.s32 %s51, 1
      %p55 = scmp.eq.s32.totalorder %s17, 1
      %p56 = scmp.ne.s32.totalorder %s51, %s53
      %p57 = scmp.eq.s32.totalorder %s17, 0
      %p58 = por %p56, %p57
      %p59 = scmp.ne.s32.totalorder %s51, %s53
      %p60 = scmp.eq.s32.totalorder %s22, 1
      %p61 = por %p59, %p60
      %p62 = scmp.ne.s32.totalorder %s53, %s54
      %p63 = scmp.eq.s32.totalorder %s22, 0
      %p64 = por %p62, %p63
      %p65 = scmp.ne.s32.totalorder %s53, %s54
      %p66 = scmp.eq.s32.totalorder %s23, 1
      %p67 = por %p65, %p66
      %p69 = scmp.ne.s32.totalorder %s54, %s68
      %p70 = scmp.eq.s32.totalorder %s23, 0
      %p71 = por %p69, %p70
      %s73 = sadd.s32 %s72, 1
      %p76 = scmp.eq.s32.totalorder %s17, 1
      %p77 = scmp.ne.s32.totalorder %s72, %s74
      %p78 = scmp.eq.s32.totalorder %s17, 0
      %p79 = por %p77, %p78
      %p80 = scmp.ne.s32.totalorder %s72, %s74
      %p81 = scmp.eq.s32.totalorder %s22, 1
      %p82 = por %p80, %p81
      %p83 = scmp.ne.s32.totalorder %s74, %s75
      %p84 = scmp.eq.s32.totalorder %s22, 0
      %p85 = por %p83, %p84
      %p86 = scmp.ne.s32.totalorder %s74, %s75
      %p87 = scmp.eq.s32.totalorder %s23, 1
      %p88 = por %p86, %p87
      %p90 = scmp.ne.s32.totalorder %s75, %s89
      %p91 = scmp.eq.s32.totalorder %s23, 0
      %p92 = por %p90, %p91
      %s94 = sadd.s32 %s93, 1
      %p97 = scmp.eq.s32.totalorder %s17, 1
      %p98 = scmp.ne.s32.totalorder %s93, %s95
      %p99 = scmp.eq.s32.totalorder %s17, 0
      %p100 = por %p98, %p99
      %p101 = scmp.ne.s32.totalorder %s93, %s95
      %p102 = scmp.eq.s32.totalorder %s22, 1
      %p103 = por %p101, %p102
      %p104 = scmp.ne.s32.totalorder %s95, %s96
      %p105 = scmp.eq.s32.totalorder %s22, 0
      %p106 = por %p104, %p105
      %p107 = scmp.ne.s32.totalorder %s95, %s96
      %p108 = scmp.eq.s32.totalorder %s23, 1
      %p109 = por %p107, %p108
      %p111 = scmp.ne.s32.totalorder %s96, %s110
      %p112 = scmp.eq.s32.totalorder %s23, 0
      %p113 = por %p111, %p112
      %s114 = ssub.s32 %s17, %s24
      %p115 = scmp.eq.s32.totalorder %s114, 0
      %s117 = sadd.s32 %s116, 1
      %s118 = scalar_select %p115, %s116, %s117
      %p121 = pneg %p115
      %p122 = scmp.eq.s32.totalorder %s17, 1
      %p123 = por %p121, %p122
      %p124 = scmp.ne.s32.totalorder %s116, %s119
      %p125 = scmp.eq.s32.totalorder %s17, 0
      %p126 = por %p124, %p125
      %p127 = scmp.ne.s32.totalorder %s116, %s119
      %p128 = scmp.eq.s32.totalorder %s22, 1
      %p129 = por %p127, %p128
      %p130 = scmp.ne.s32.totalorder %s119, %s120
      %p131 = scmp.eq.s32.totalorder %s22, 0
      %p132 = por %p130, %p131
      %p133 = scmp.ne.s32.totalorder %s119, %s120
      %p134 = scmp.eq.s32.totalorder %s23, 1
      %p135 = por %p133, %p134
      %p137 = scmp.ne.s32.totalorder %s120, %s136
      %p138 = scmp.eq.s32.totalorder %s23, 0
      %p139 = por %p137, %p138
      %p140 = scmp.le.s32.totalorder 1, %s17
      %p141 = scmp.lt.s32.totalorder %s17, 3
      %p142 = pnand %p140, %p141
      %p143 = pneg %p142
      // Predicated region
      $region9: #{tpu_custom_call.1} parent=5 // pred_check
        _
      $region10: #{tpu_custom_call.1} parent=5 // pred_check_branch
        %145 = sbr.rel (%p142) target = $region12
      $region11: #{tpu_custom_call.1} parent=5 // pred_region
        %s146 = ssub.s32 %s17, 1
        // Predicated region
        $region13: #{tpu_custom_call.1} parent=11 // pred_check
          %p147 = pneg %p64
        $region14: #{tpu_custom_call.1} parent=11 // pred_check_branch
          %149 = sbr.rel (%p147) target = $region16
        $region15: #{tpu_custom_call.1} parent=11 // pred_region
          %s151 = ssub.s32 27648, 27648
          %152 = vsyncadd [#allocation6], %s151
          %s153 = sshll.u32 [#allocation5], 4
          %s154 = int_to_ptr.vmem [resolvable:$true] %s153
          %159 = dma.hbm_to_vmem [thread:$0]  %s1, 27648, %s154, [#allocation6], 576, 576, 36
        $region16: #{tpu_custom_call.1} parent=11 // pred_fallthru
          _
        // Predicated region
        $region17: #{tpu_custom_call.1} parent=11 // pred_check
          %p160 = pneg %p85
        $region18: #{tpu_custom_call.1} parent=11 // pred_check_branch
          %162 = sbr.rel (%p160) target = $region20
        $region19: #{tpu_custom_call.1} parent=11 // pred_region
          %s164 = ssub.s32 9216, 9216
          %165 = vsyncadd [#allocation6], %s164
          %s166 = sshll.u32 [#allocation7], 4
          %s167 = int_to_ptr.vmem [resolvable:$true] %s166
          %172 = dma.hbm_to_vmem [thread:$0]  %s2, 9216, %s167, [#allocation6], 192, 192, 12
        $region20: #{tpu_custom_call.1} parent=11 // pred_fallthru
          _
        // Predicated region
        $region21: #{tpu_custom_call.1} parent=11 // pred_check
          %p173 = pneg %p106
        $region22: #{tpu_custom_call.1} parent=11 // pred_check_branch
          %175 = sbr.rel (%p173) target = $region24
        $region23: #{tpu_custom_call.1} parent=11 // pred_region
          _
        $region24: #{tpu_custom_call.1} parent=11 // pred_fallthru
          _
      $region12: #{tpu_custom_call.1} parent=5 // pred_fallthru
        _
      %p176 = scmp.lt.s32.totalorder %s17, 2
      // Predicated region
      $region25: #{tpu_custom_call.1} parent=5 // pred_check
        %p177 = pneg %p176
      $region26: #{tpu_custom_call.1} parent=5 // pred_check_branch
        %179 = sbr.rel (%p177) target = $region28
      $region27: #{tpu_custom_call.1} parent=5 // pred_region
        // Predicated region
        $region29: #{tpu_custom_call.1} parent=27 // pred_check
          %p180 = pneg %p37
        $region30: #{tpu_custom_call.1} parent=27 // pred_check_branch
          %182 = sbr.rel (%p180) target = $region32
        $region31: #{tpu_custom_call.1} parent=27 // pred_region
          %s183 = sand.u32 %s27, 1
          %s184 = scalar_lea.sflag [#allocation3], %s183
          %s185 = sand.u32 %s27, 1
          %s186 = smul.addr %s185, 24
          %s187 = scalar_lea.vmem [#allocation2], %s186
          %s189 = ssub.s32 384, 384
          %190 = vsyncadd %s184, %s189
          %s191 = smul.addr %s17, 3
          %s192 = smul.addr %s191, 128
          %s193 = scalar_lea.hbm %s0, %s192
          %s195 = sshll.u32 %s187, 4
          %s196 = int_to_ptr.vmem [resolvable:$true] %s195
          %198 = dma.hbm_to_vmem [thread:$0]  %s193, 384, %s196, %s184
        $region32: #{tpu_custom_call.1} parent=27 // pred_fallthru
          _
      $region28: #{tpu_custom_call.1} parent=5 // pred_fallthru
        _
      %p199 = scmp.le.s32.totalorder 1, %s17
      %p200 = scmp.lt.s32.totalorder %s17, 3
      %p201 = pnand %p199, %p200
      %p202 = pneg %p201
      // Predicated region
      $region33: #{tpu_custom_call.1} parent=5 // pred_check
        _
      $region34: #{tpu_custom_call.1} parent=5 // pred_check_branch
        %204 = sbr.rel (%p201) target = $region36
      $region35: #{tpu_custom_call.1} parent=5 // pred_region
        %s205 = ssub.s32 %s17, 1
        %s206 = sand.u32 %s30, 1
        %s207 = scalar_lea.sflag [#allocation3], %s206
        %s208 = sand.u32 %s30, 1
        %s209 = smul.addr %s208, 24
        %s210 = scalar_lea.vmem [#allocation2], %s209
        // Predicated region
        $region37: #{tpu_custom_call.1} parent=35 // pred_check
          %p211 = pneg %p43
        $region38: #{tpu_custom_call.1} parent=35 // pred_check_branch
          %213 = sbr.rel (%p211) target = $region40
        $region39: #{tpu_custom_call.1} parent=35 // pred_region
          %214 = dma.done %s207, 384
        $region40: #{tpu_custom_call.1} parent=35 // pred_fallthru
          _
        // Predicated region
        $region41: #{tpu_custom_call.1} parent=35 // pred_check
          %p215 = pneg %p64
        $region42: #{tpu_custom_call.1} parent=35 // pred_check_branch
          %217 = sbr.rel (%p215) target = $region44
        $region43: #{tpu_custom_call.1} parent=35 // pred_region
          %218 = dma.done [#allocation6], 27648
        $region44: #{tpu_custom_call.1} parent=35 // pred_fallthru
          _
        // Predicated region
        $region45: #{tpu_custom_call.1} parent=35 // pred_check
          %p219 = pneg %p85
        $region46: #{tpu_custom_call.1} parent=35 // pred_check_branch
          %221 = sbr.rel (%p219) target = $region48
        $region47: #{tpu_custom_call.1} parent=35 // pred_region
          %222 = dma.done [#allocation6], 9216
        $region48: #{tpu_custom_call.1} parent=35 // pred_fallthru
          _
        %s223 = sand.u32 %s30, 1
        %s224 = scalar_lea.sflag [#allocation3], %s223
        %s225 = sand.u32 %s30, 1
        %s226 = smul.addr %s225, 24
        %s227 = scalar_lea.vmem [#allocation2], %s226
        %p228 = pneg %p43
        %p229 = pneg %p40
        %p230 = pneg %p64
        %p231 = pneg %p61
        %p232 = pneg %p85
        %p233 = pneg %p82
        %p234 = pneg %p106
        %p235 = pneg %p103
        %p236 = pneg %p132
        %p237 = pneg %p129
        %s238 = sand.u32 %s119, 1
        %s239 = scalar_lea.sflag [#allocation4], %s238
        %s240 = sand.u32 %s119, 1
        %s241 = smul.addr %s240, 24
        %s242 = scalar_lea.vmem [#allocation8], %s241
        %v244 = vld [vmem:[%s210] sm:$0xff]
        %v245 = vld [vmem:[%s210 + $0x8] sm:$0xff]
        %v246 = vld [vmem:[%s210 + $0x10] sm:$0xff]
        %v247 = vpack.c.bf16 %v244, %v244
        %v248 = vpack.c.bf16 %v245, %v245
        %v249 = vpack.c.bf16 %v246, %v246
        %v250 = vld [vmem:[#allocation5] sm:$0xff]
        %v251 = vld [vmem:[#allocation5 + $0x8] sm:$0xff]
        %v252 = vld [vmem:[#allocation5 + $0x10] sm:$0xff]
        %v253 = vld [vmem:[#allocation5 + $0x18] sm:$0xff]
        %v254 = vld [vmem:[#allocation5 + $0x20] sm:$0xf]
        %v255 = vld [vmem:[#allocation5 + $0x24] sm:$0xff]
        %v256 = vld [vmem:[#allocation5 + $0x2c] sm:$0xff]
        %v257 = vld [vmem:[#allocation5 + $0x34] sm:$0xff]
        %v258 = vld [vmem:[#allocation5 + $0x3c] sm:$0xff]
        %v259 = vld [vmem:[#allocation5 + $0x44] sm:$0xf]
        %v260 = vld [vmem:[#allocation5 + $0x48] sm:$0xff]
        %v261 = vld [vmem:[#allocation5 + $0x50] sm:$0xff]
        %v262 = vld [vmem:[#allocation5 + $0x58] sm:$0xff]
        %v263 = vld [vmem:[#allocation5 + $0x60] sm:$0xff]
        %v264 = vld [vmem:[#allocation5 + $0x68] sm:$0xf]
        %v265 = vld [vmem:[#allocation5 + $0x6c] sm:$0xff]
        %v266 = vld [vmem:[#allocation5 + $0x74] sm:$0xff]
        %v267 = vld [vmem:[#allocation5 + $0x7c] sm:$0xff]
        %v268 = vld [vmem:[#allocation5 + $0x84] sm:$0xff]
        %v269 = vld [vmem:[#allocation5 + $0x8c] sm:$0xf]
        %v270 = vld [vmem:[#allocation5 + $0x90] sm:$0xff]
        %v271 = vld [vmem:[#allocation5 + $0x98] sm:$0xff]
        %v272 = vld [vmem:[#allocation5 + $0xa0] sm:$0xff]
        %v273 = vld [vmem:[#allocation5 + $0xa8] sm:$0xff]
        %v274 = vld [vmem:[#allocation5 + $0xb0] sm:$0xf]
        %v275 = vld [vmem:[#allocation5 + $0xb4] sm:$0xff]
        %v276 = vld [vmem:[#allocation5 + $0xbc] sm:$0xff]
        %v277 = vld [vmem:[#allocation5 + $0xc4] sm:$0xff]
        %v278 = vld [vmem:[#allocation5 + $0xcc] sm:$0xff]
        %v279 = vld [vmem:[#allocation5 + $0xd4] sm:$0xf]
        %v280 = vld [vmem:[#allocation5 + $0xd8] sm:$0xff]
        %v281 = vld [vmem:[#allocation5 + $0xe0] sm:$0xff]
        %v282 = vld [vmem:[#allocation5 + $0xe8] sm:$0xff]
        %v283 = vld [vmem:[#allocation5 + $0xf0] sm:$0xff]
        %v284 = vld [vmem:[#allocation5 + $0xf8] sm:$0xf]
        %v285 = vld [vmem:[#allocation5 + $0xfc] sm:$0xff]
        %v286 = vld [vmem:[#allocation5 + $0x104] sm:$0xff]
        %v287 = vld [vmem:[#allocation5 + $0x10c] sm:$0xff]
        %v288 = vld [vmem:[#allocation5 + $0x114] sm:$0xff]
        %v289 = vld [vmem:[#allocation5 + $0x11c] sm:$0xf]
        %v290 = vld [vmem:[#allocation5 + $0x120] sm:$0xff]
        %v291 = vld [vmem:[#allocation5 + $0x128] sm:$0xff]
        %v292 = vld [vmem:[#allocation5 + $0x130] sm:$0xff]
        %v293 = vld [vmem:[#allocation5 + $0x138] sm:$0xff]
        %v294 = vld [vmem:[#allocation5 + $0x140] sm:$0xf]
        %v295 = vld [vmem:[#allocation5 + $0x144] sm:$0xff]
        %v296 = vld [vmem:[#allocation5 + $0x14c] sm:$0xff]
        %v297 = vld [vmem:[#allocation5 + $0x154] sm:$0xff]
        %v298 = vld [vmem:[#allocation5 + $0x15c] sm:$0xff]
        %v299 = vld [vmem:[#allocation5 + $0x164] sm:$0xf]
        %v300 = vld [vmem:[#allocation5 + $0x168] sm:$0xff]
        %v301 = vld [vmem:[#allocation5 + $0x170] sm:$0xff]
        %v302 = vld [vmem:[#allocation5 + $0x178] sm:$0xff]
        %v303 = vld [vmem:[#allocation5 + $0x180] sm:$0xff]
        %v304 = vld [vmem:[#allocation5 + $0x188] sm:$0xf]
        %v305 = vld [vmem:[#allocation5 + $0x18c] sm:$0xff]
        %v306 = vld [vmem:[#allocation5 + $0x194] sm:$0xff]
        %v307 = vld [vmem:[#allocation5 + $0x19c] sm:$0xff]
        %v308 = vld [vmem:[#allocation5 + $0x1a4] sm:$0xff]
        %v309 = vld [vmem:[#allocation5 + $0x1ac] sm:$0xf]
        %v310 = vld [vmem:[#allocation5 + $0x1b0] sm:$0xff]
        %v311 = vld [vmem:[#allocation5 + $0x1b8] sm:$0xff]
        %v312 = vld [vmem:[#allocation5 + $0x1c0] sm:$0xff]
        %v313 = vld [vmem:[#allocation5 + $0x1c8] sm:$0xff]
        %v314 = vld [vmem:[#allocation5 + $0x1d0] sm:$0xf]
        %v315 = vld [vmem:[#allocation5 + $0x1d4] sm:$0xff]
        %v316 = vld [vmem:[#allocation5 + $0x1dc] sm:$0xff]
        %v317 = vld [vmem:[#allocation5 + $0x1e4] sm:$0xff]
        %v318 = vld [vmem:[#allocation5 + $0x1ec] sm:$0xff]
        %v319 = vld [vmem:[#allocation5 + $0x1f4] sm:$0xf]
        %v320 = vld [vmem:[#allocation5 + $0x1f8] sm:$0xff]
        %v321 = vld [vmem:[#allocation5 + $0x200] sm:$0xff]
        %v322 = vld [vmem:[#allocation5 + $0x208] sm:$0xff]
        %v323 = vld [vmem:[#allocation5 + $0x210] sm:$0xff]
        %v324 = vld [vmem:[#allocation5 + $0x218] sm:$0xf]
        %v325 = vld [vmem:[#allocation5 + $0x21c] sm:$0xff]
        %v326 = vld [vmem:[#allocation5 + $0x224] sm:$0xff]
        %v327 = vld [vmem:[#allocation5 + $0x22c] sm:$0xff]
        %v328 = vld [vmem:[#allocation5 + $0x234] sm:$0xff]
        %v329 = vld [vmem:[#allocation5 + $0x23c] sm:$0xf]
        %v330 = vld [vmem:[#allocation5 + $0x240] sm:$0xff]
        %v331 = vld [vmem:[#allocation5 + $0x248] sm:$0xff]
        %v332 = vld [vmem:[#allocation5 + $0x250] sm:$0xff]
        %v333 = vld [vmem:[#allocation5 + $0x258] sm:$0xff]
        %v334 = vld [vmem:[#allocation5 + $0x260] sm:$0xf]
        %v335 = vld [vmem:[#allocation5 + $0x264] sm:$0xff]
        %v336 = vld [vmem:[#allocation5 + $0x26c] sm:$0xff]
        %v337 = vld [vmem:[#allocation5 + $0x274] sm:$0xff]
        %v338 = vld [vmem:[#allocation5 + $0x27c] sm:$0xff]
        %v339 = vld [vmem:[#allocation5 + $0x284] sm:$0xf]
        %v340 = vld [vmem:[#allocation5 + $0x288] sm:$0xff]
        %v341 = vld [vmem:[#allocation5 + $0x290] sm:$0xff]
        %v342 = vld [vmem:[#allocation5 + $0x298] sm:$0xff]
        %v343 = vld [vmem:[#allocation5 + $0x2a0] sm:$0xff]
        %v344 = vld [vmem:[#allocation5 + $0x2a8] sm:$0xf]
        %v345 = vld [vmem:[#allocation5 + $0x2ac] sm:$0xff]
        %v346 = vld [vmem:[#allocation5 + $0x2b4] sm:$0xff]
        %v347 = vld [vmem:[#allocation5 + $0x2bc] sm:$0xff]
        %v348 = vld [vmem:[#allocation5 + $0x2c4] sm:$0xff]
        %v349 = vld [vmem:[#allocation5 + $0x2cc] sm:$0xf]
        %v350 = vld [vmem:[#allocation5 + $0x2d0] sm:$0xff]
        %v351 = vld [vmem:[#allocation5 + $0x2d8] sm:$0xff]
        %v352 = vld [vmem:[#allocation5 + $0x2e0] sm:$0xff]
        %v353 = vld [vmem:[#allocation5 + $0x2e8] sm:$0xff]
        %v354 = vld [vmem:[#allocation5 + $0x2f0] sm:$0xf]
        %v355 = vld [vmem:[#allocation5 + $0x2f4] sm:$0xff]
        %v356 = vld [vmem:[#allocation5 + $0x2fc] sm:$0xff]
        %v357 = vld [vmem:[#allocation5 + $0x304] sm:$0xff]
        %v358 = vld [vmem:[#allocation5 + $0x30c] sm:$0xff]
        %v359 = vld [vmem:[#allocation5 + $0x314] sm:$0xf]
        %v360 = vld [vmem:[#allocation5 + $0x318] sm:$0xff]
        %v361 = vld [vmem:[#allocation5 + $0x320] sm:$0xff]
        %v362 = vld [vmem:[#allocation5 + $0x328] sm:$0xff]
        %v363 = vld [vmem:[#allocation5 + $0x330] sm:$0xff]
        %v364 = vld [vmem:[#allocation5 + $0x338] sm:$0xf]
        %v365 = vld [vmem:[#allocation5 + $0x33c] sm:$0xff]
        %v366 = vld [vmem:[#allocation5 + $0x344] sm:$0xff]
        %v367 = vld [vmem:[#allocation5 + $0x34c] sm:$0xff]
        %v368 = vld [vmem:[#allocation5 + $0x354] sm:$0xff]
        %v369 = vld [vmem:[#allocation5 + $0x35c] sm:$0xf]
        %v370 = vld [vmem:[#allocation5 + $0x360] sm:$0xff]
        %v371 = vld [vmem:[#allocation5 + $0x368] sm:$0xff]
        %v372 = vld [vmem:[#allocation5 + $0x370] sm:$0xff]
        %v373 = vld [vmem:[#allocation5 + $0x378] sm:$0xff]
        %v374 = vld [vmem:[#allocation5 + $0x380] sm:$0xf]
        %v375 = vld [vmem:[#allocation5 + $0x384] sm:$0xff]
        %v376 = vld [vmem:[#allocation5 + $0x38c] sm:$0xff]
        %v377 = vld [vmem:[#allocation5 + $0x394] sm:$0xff]
        %v378 = vld [vmem:[#allocation5 + $0x39c] sm:$0xff]
        %v379 = vld [vmem:[#allocation5 + $0x3a4] sm:$0xf]
        %v380 = vld [vmem:[#allocation5 + $0x3a8] sm:$0xff]
        %v381 = vld [vmem:[#allocation5 + $0x3b0] sm:$0xff]
        %v382 = vld [vmem:[#allocation5 + $0x3b8] sm:$0xff]
        %v383 = vld [vmem:[#allocation5 + $0x3c0] sm:$0xff]
        %v384 = vld [vmem:[#allocation5 + $0x3c8] sm:$0xf]
        %v385 = vld [vmem:[#allocation5 + $0x3cc] sm:$0xff]
        %v386 = vld [vmem:[#allocation5 + $0x3d4] sm:$0xff]
        %v387 = vld [vmem:[#allocation5 + $0x3dc] sm:$0xff]
        %v388 = vld [vmem:[#allocation5 + $0x3e4] sm:$0xff]
        %v389 = vld [vmem:[#allocation5 + $0x3ec] sm:$0xf]
        %v390 = vld [vmem:[#allocation5 + $0x3f0] sm:$0xff]
        %v391 = vld [vmem:[#allocation5 + $0x3f8] sm:$0xff]
        %v392 = vld [vmem:[#allocation5 + $0x400] sm:$0xff]
        %v393 = vld [vmem:[#allocation5 + $0x408] sm:$0xff]
        %v394 = vld [vmem:[#allocation5 + $0x410] sm:$0xf]
        %v395 = vld [vmem:[#allocation5 + $0x414] sm:$0xff]
        %v396 = vld [vmem:[#allocation5 + $0x41c] sm:$0xff]
        %v397 = vld [vmem:[#allocation5 + $0x424] sm:$0xff]
        %v398 = vld [vmem:[#allocation5 + $0x42c] sm:$0xff]
        %v399 = vld [vmem:[#allocation5 + $0x434] sm:$0xf]
        %v400 = vld [vmem:[#allocation5 + $0x438] sm:$0xff]
        %v401 = vld [vmem:[#allocation5 + $0x440] sm:$0xff]
        %v402 = vld [vmem:[#allocation5 + $0x448] sm:$0xff]
        %v403 = vld [vmem:[#allocation5 + $0x450] sm:$0xff]
        %v404 = vld [vmem:[#allocation5 + $0x458] sm:$0xf]
        %v405 = vld [vmem:[#allocation5 + $0x45c] sm:$0xff]
        %v406 = vld [vmem:[#allocation5 + $0x464] sm:$0xff]
        %v407 = vld [vmem:[#allocation5 + $0x46c] sm:$0xff]
        %v408 = vld [vmem:[#allocation5 + $0x474] sm:$0xff]
        %v409 = vld [vmem:[#allocation5 + $0x47c] sm:$0xf]
        %v410 = vld [vmem:[#allocation5 + $0x480] sm:$0xff]
        %v411 = vld [vmem:[#allocation5 + $0x488] sm:$0xff]
        %v412 = vld [vmem:[#allocation5 + $0x490] sm:$0xff]
        %v413 = vld [vmem:[#allocation5 + $0x498] sm:$0xff]
        %v414 = vld [vmem:[#allocation5 + $0x4a0] sm:$0xf]
        %v415 = vld [vmem:[#allocation5 + $0x4a4] sm:$0xff]
        %v416 = vld [vmem:[#allocation5 + $0x4ac] sm:$0xff]
        %v417 = vld [vmem:[#allocation5 + $0x4b4] sm:$0xff]
        %v418 = vld [vmem:[#allocation5 + $0x4bc] sm:$0xff]
        %v419 = vld [vmem:[#allocation5 + $0x4c4] sm:$0xf]
        %v420 = vld [vmem:[#allocation5 + $0x4c8] sm:$0xff]
        %v421 = vld [vmem:[#allocation5 + $0x4d0] sm:$0xff]
        %v422 = vld [vmem:[#allocation5 + $0x4d8] sm:$0xff]
        %v423 = vld [vmem:[#allocation5 + $0x4e0] sm:$0xff]
        %v424 = vld [vmem:[#allocation5 + $0x4e8] sm:$0xf]
        %v425 = vld [vmem:[#allocation5 + $0x4ec] sm:$0xff]
        %v426 = vld [vmem:[#allocation5 + $0x4f4] sm:$0xff]
        %v427 = vld [vmem:[#allocation5 + $0x4fc] sm:$0xff]
        %v428 = vld [vmem:[#allocation5 + $0x504] sm:$0xff]
        %v429 = vld [vmem:[#allocation5 + $0x50c] sm:$0xf]
        %v430 = vld [vmem:[#allocation5 + $0x510] sm:$0xff]
        %v431 = vld [vmem:[#allocation5 + $0x518] sm:$0xff]
        %v432 = vld [vmem:[#allocation5 + $0x520] sm:$0xff]
        %v433 = vld [vmem:[#allocation5 + $0x528] sm:$0xff]
        %v434 = vld [vmem:[#allocation5 + $0x530] sm:$0xf]
        %v435 = vld [vmem:[#allocation5 + $0x534] sm:$0xff]
        %v436 = vld [vmem:[#allocation5 + $0x53c] sm:$0xff]
        %v437 = vld [vmem:[#allocation5 + $0x544] sm:$0xff]
        %v438 = vld [vmem:[#allocation5 + $0x54c] sm:$0xff]
        %v439 = vld [vmem:[#allocation5 + $0x554] sm:$0xf]
        %v440 = vld [vmem:[#allocation5 + $0x558] sm:$0xff]
        %v441 = vld [vmem:[#allocation5 + $0x560] sm:$0xff]
        %v442 = vld [vmem:[#allocation5 + $0x568] sm:$0xff]
        %v443 = vld [vmem:[#allocation5 + $0x570] sm:$0xff]
        %v444 = vld [vmem:[#allocation5 + $0x578] sm:$0xf]
        %v445 = vld [vmem:[#allocation5 + $0x57c] sm:$0xff]
        %v446 = vld [vmem:[#allocation5 + $0x584] sm:$0xff]
        %v447 = vld [vmem:[#allocation5 + $0x58c] sm:$0xff]
        %v448 = vld [vmem:[#allocation5 + $0x594] sm:$0xff]
        %v449 = vld [vmem:[#allocation5 + $0x59c] sm:$0xf]
        %v450 = vld [vmem:[#allocation5 + $0x5a0] sm:$0xff]
        %v451 = vld [vmem:[#allocation5 + $0x5a8] sm:$0xff]
        %v452 = vld [vmem:[#allocation5 + $0x5b0] sm:$0xff]
        %v453 = vld [vmem:[#allocation5 + $0x5b8] sm:$0xff]
        %v454 = vld [vmem:[#allocation5 + $0x5c0] sm:$0xf]
        %v455 = vld [vmem:[#allocation5 + $0x5c4] sm:$0xff]
        %v456 = vld [vmem:[#allocation5 + $0x5cc] sm:$0xff]
        %v457 = vld [vmem:[#allocation5 + $0x5d4] sm:$0xff]
        %v458 = vld [vmem:[#allocation5 + $0x5dc] sm:$0xff]
        %v459 = vld [vmem:[#allocation5 + $0x5e4] sm:$0xf]
        %v460 = vld [vmem:[#allocation5 + $0x5e8] sm:$0xff]
        %v461 = vld [vmem:[#allocation5 + $0x5f0] sm:$0xff]
        %v462 = vld [vmem:[#allocation5 + $0x5f8] sm:$0xff]
        %v463 = vld [vmem:[#allocation5 + $0x600] sm:$0xff]
        %v464 = vld [vmem:[#allocation5 + $0x608] sm:$0xf]
        %v465 = vld [vmem:[#allocation5 + $0x60c] sm:$0xff]
        %v466 = vld [vmem:[#allocation5 + $0x614] sm:$0xff]
        %v467 = vld [vmem:[#allocation5 + $0x61c] sm:$0xff]
        %v468 = vld [vmem:[#allocation5 + $0x624] sm:$0xff]
        %v469 = vld [vmem:[#allocation5 + $0x62c] sm:$0xf]
        %v470 = vld [vmem:[#allocation5 + $0x630] sm:$0xff]
        %v471 = vld [vmem:[#allocation5 + $0x638] sm:$0xff]
        %v472 = vld [vmem:[#allocation5 + $0x640] sm:$0xff]
        %v473 = vld [vmem:[#allocation5 + $0x648] sm:$0xff]
        %v474 = vld [vmem:[#allocation5 + $0x650] sm:$0xf]
        %v475 = vld [vmem:[#allocation5 + $0x654] sm:$0xff]
        %v476 = vld [vmem:[#allocation5 + $0x65c] sm:$0xff]
        %v477 = vld [vmem:[#allocation5 + $0x664] sm:$0xff]
        %v478 = vld [vmem:[#allocation5 + $0x66c] sm:$0xff]
        %v479 = vld [vmem:[#allocation5 + $0x674] sm:$0xf]
        %v480 = vld [vmem:[#allocation5 + $0x678] sm:$0xff]
        %v481 = vld [vmem:[#allocation5 + $0x680] sm:$0xff]
        %v482 = vld [vmem:[#allocation5 + $0x688] sm:$0xff]
        %v483 = vld [vmem:[#allocation5 + $0x690] sm:$0xff]
        %v484 = vld [vmem:[#allocation5 + $0x698] sm:$0xf]
        %v485 = vld [vmem:[#allocation5 + $0x69c] sm:$0xff]
        %v486 = vld [vmem:[#allocation5 + $0x6a4] sm:$0xff]
        %v487 = vld [vmem:[#allocation5 + $0x6ac] sm:$0xff]
        %v488 = vld [vmem:[#allocation5 + $0x6b4] sm:$0xff]
        %v489 = vld [vmem:[#allocation5 + $0x6bc] sm:$0xf]
        %v730 = vunpack.c.l.b16 %v250
        %v731 = vunpack.c.h.b16 %v250
        %v732 = vunpack.c.l.b16 %v251
        %v733 = vunpack.c.h.b16 %v251
        %v734 = vunpack.c.l.b16 %v252
        %v735 = vunpack.c.h.b16 %v252
        %v736 = vunpack.c.l.b16 %v253
        %v737 = vunpack.c.h.b16 %v253
        %v738 = vunpack.c.l.b16 %v254
        %v739 = vunpack.c.l.b16 %v255
        %v740 = vunpack.c.h.b16 %v255
        %v741 = vunpack.c.l.b16 %v256
        %v742 = vunpack.c.h.b16 %v256
        %v743 = vunpack.c.l.b16 %v257
        %v744 = vunpack.c.h.b16 %v257
        %v745 = vunpack.c.l.b16 %v258
        %v746 = vunpack.c.h.b16 %v258
        %v747 = vunpack.c.l.b16 %v259
        %v748 = vunpack.c.l.b16 %v260
        %v749 = vunpack.c.h.b16 %v260
        %v750 = vunpack.c.l.b16 %v261
        %v751 = vunpack.c.h.b16 %v261
        %v752 = vunpack.c.l.b16 %v262
        %v753 = vunpack.c.h.b16 %v262
        %v754 = vunpack.c.l.b16 %v263
        %v755 = vunpack.c.h.b16 %v263
        %v756 = vunpack.c.l.b16 %v264
        %v757 = vunpack.c.l.b16 %v265
        %v758 = vunpack.c.h.b16 %v265
        %v759 = vunpack.c.l.b16 %v266
        %v760 = vunpack.c.h.b16 %v266
        %v761 = vunpack.c.l.b16 %v267
        %v762 = vunpack.c.h.b16 %v267
        %v763 = vunpack.c.l.b16 %v268
        %v764 = vunpack.c.h.b16 %v268
        %v765 = vunpack.c.l.b16 %v269
        %v766 = vunpack.c.l.b16 %v270
        %v767 = vunpack.c.h.b16 %v270
        %v768 = vunpack.c.l.b16 %v271
        %v769 = vunpack.c.h.b16 %v271
        %v770 = vunpack.c.l.b16 %v272
        %v771 = vunpack.c.h.b16 %v272
        %v772 = vunpack.c.l.b16 %v273
        %v773 = vunpack.c.h.b16 %v273
        %v774 = vunpack.c.l.b16 %v274
        %v775 = vunpack.c.l.b16 %v275
        %v776 = vunpack.c.h.b16 %v275
        %v777 = vunpack.c.l.b16 %v276
        %v778 = vunpack.c.h.b16 %v276
        %v779 = vunpack.c.l.b16 %v277
        %v780 = vunpack.c.h.b16 %v277
        %v781 = vunpack.c.l.b16 %v278
        %v782 = vunpack.c.h.b16 %v278
        %v783 = vunpack.c.l.b16 %v279
        %v784 = vunpack.c.l.b16 %v280
        %v785 = vunpack.c.h.b16 %v280
        %v786 = vunpack.c.l.b16 %v281
        %v787 = vunpack.c.h.b16 %v281
        %v788 = vunpack.c.l.b16 %v282
        %v789 = vunpack.c.h.b16 %v282
        %v790 = vunpack.c.l.b16 %v283
        %v791 = vunpack.c.h.b16 %v283
        %v792 = vunpack.c.l.b16 %v284
        %v793 = vunpack.c.l.b16 %v285
        %v794 = vunpack.c.h.b16 %v285
        %v795 = vunpack.c.l.b16 %v286
        %v796 = vunpack.c.h.b16 %v286
        %v797 = vunpack.c.l.b16 %v287
        %v798 = vunpack.c.h.b16 %v287
        %v799 = vunpack.c.l.b16 %v288
        %v800 = vunpack.c.h.b16 %v288
        %v801 = vunpack.c.l.b16 %v289
        %v802 = vunpack.c.l.b16 %v290
        %v803 = vunpack.c.h.b16 %v290
        %v804 = vunpack.c.l.b16 %v291
        %v805 = vunpack.c.h.b16 %v291
        %v806 = vunpack.c.l.b16 %v292
        %v807 = vunpack.c.h.b16 %v292
        %v808 = vunpack.c.l.b16 %v293
        %v809 = vunpack.c.h.b16 %v293
        %v810 = vunpack.c.l.b16 %v294
        %v811 = vunpack.c.l.b16 %v295
        %v812 = vunpack.c.h.b16 %v295
        %v813 = vunpack.c.l.b16 %v296
        %v814 = vunpack.c.h.b16 %v296
        %v815 = vunpack.c.l.b16 %v297
        %v816 = vunpack.c.h.b16 %v297
        %v817 = vunpack.c.l.b16 %v298
        %v818 = vunpack.c.h.b16 %v298
        %v819 = vunpack.c.l.b16 %v299
        %v820 = vunpack.c.l.b16 %v300
        %v821 = vunpack.c.h.b16 %v300
        %v822 = vunpack.c.l.b16 %v301
        %v823 = vunpack.c.h.b16 %v301
        %v824 = vunpack.c.l.b16 %v302
        %v825 = vunpack.c.h.b16 %v302
        %v826 = vunpack.c.l.b16 %v303
        %v827 = vunpack.c.h.b16 %v303
        %v828 = vunpack.c.l.b16 %v304
        %v829 = vunpack.c.l.b16 %v305
        %v830 = vunpack.c.h.b16 %v305
        %v831 = vunpack.c.l.b16 %v306
        %v832 = vunpack.c.h.b16 %v306
        %v833 = vunpack.c.l.b16 %v307
        %v834 = vunpack.c.h.b16 %v307
        %v835 = vunpack.c.l.b16 %v308
        %v836 = vunpack.c.h.b16 %v308
        %v837 = vunpack.c.l.b16 %v309
        %v838 = vunpack.c.l.b16 %v310
        %v839 = vunpack.c.h.b16 %v310
        %v840 = vunpack.c.l.b16 %v311
        %v841 = vunpack.c.h.b16 %v311
        %v842 = vunpack.c.l.b16 %v312
        %v843 = vunpack.c.h.b16 %v312
        %v844 = vunpack.c.l.b16 %v313
        %v845 = vunpack.c.h.b16 %v313
        %v846 = vunpack.c.l.b16 %v314
        %v847 = vunpack.c.l.b16 %v315
        %v848 = vunpack.c.h.b16 %v315
        %v849 = vunpack.c.l.b16 %v316
        %v850 = vunpack.c.h.b16 %v316
        %v851 = vunpack.c.l.b16 %v317
        %v852 = vunpack.c.h.b16 %v317
        %v853 = vunpack.c.l.b16 %v318
        %v854 = vunpack.c.h.b16 %v318
        %v855 = vunpack.c.l.b16 %v319
        %v856 = vunpack.c.l.b16 %v320
        %v857 = vunpack.c.h.b16 %v320
        %v858 = vunpack.c.l.b16 %v321
        %v859 = vunpack.c.h.b16 %v321
        %v860 = vunpack.c.l.b16 %v322
        %v861 = vunpack.c.h.b16 %v322
        %v862 = vunpack.c.l.b16 %v323
        %v863 = vunpack.c.h.b16 %v323
        %v864 = vunpack.c.l.b16 %v324
        %v865 = vunpack.c.l.b16 %v325
        %v866 = vunpack.c.h.b16 %v325
        %v867 = vunpack.c.l.b16 %v326
        %v868 = vunpack.c.h.b16 %v326
        %v869 = vunpack.c.l.b16 %v327
        %v870 = vunpack.c.h.b16 %v327
        %v871 = vunpack.c.l.b16 %v328
        %v872 = vunpack.c.h.b16 %v328
        %v873 = vunpack.c.l.b16 %v329
        %v874 = vunpack.c.l.b16 %v330
        %v875 = vunpack.c.h.b16 %v330
        %v876 = vunpack.c.l.b16 %v331
        %v877 = vunpack.c.h.b16 %v331
        %v878 = vunpack.c.l.b16 %v332
        %v879 = vunpack.c.h.b16 %v332
        %v880 = vunpack.c.l.b16 %v333
        %v881 = vunpack.c.h.b16 %v333
        %v882 = vunpack.c.l.b16 %v334
        %v883 = vunpack.c.l.b16 %v335
        %v884 = vunpack.c.h.b16 %v335
        %v885 = vunpack.c.l.b16 %v336
        %v886 = vunpack.c.h.b16 %v336
        %v887 = vunpack.c.l.b16 %v337
        %v888 = vunpack.c.h.b16 %v337
        %v889 = vunpack.c.l.b16 %v338
        %v890 = vunpack.c.h.b16 %v338
        %v891 = vunpack.c.l.b16 %v339
        %v892 = vunpack.c.l.b16 %v340
        %v893 = vunpack.c.h.b16 %v340
        %v894 = vunpack.c.l.b16 %v341
        %v895 = vunpack.c.h.b16 %v341
        %v896 = vunpack.c.l.b16 %v342
        %v897 = vunpack.c.h.b16 %v342
        %v898 = vunpack.c.l.b16 %v343
        %v899 = vunpack.c.h.b16 %v343
        %v900 = vunpack.c.l.b16 %v344
        %v901 = vunpack.c.l.b16 %v345
        %v902 = vunpack.c.h.b16 %v345
        %v903 = vunpack.c.l.b16 %v346
        %v904 = vunpack.c.h.b16 %v346
        %v905 = vunpack.c.l.b16 %v347
        %v906 = vunpack.c.h.b16 %v347
        %v907 = vunpack.c.l.b16 %v348
        %v908 = vunpack.c.h.b16 %v348
        %v909 = vunpack.c.l.b16 %v349
        %v910 = vunpack.c.l.b16 %v350
        %v911 = vunpack.c.h.b16 %v350
        %v912 = vunpack.c.l.b16 %v351
        %v913 = vunpack.c.h.b16 %v351
        %v914 = vunpack.c.l.b16 %v352
        %v915 = vunpack.c.h.b16 %v352
        %v916 = vunpack.c.l.b16 %v353
        %v917 = vunpack.c.h.b16 %v353
        %v918 = vunpack.c.l.b16 %v354
        %v919 = vunpack.c.l.b16 %v355
        %v920 = vunpack.c.h.b16 %v355
        %v921 = vunpack.c.l.b16 %v356
        %v922 = vunpack.c.h.b16 %v356
        %v923 = vunpack.c.l.b16 %v357
        %v924 = vunpack.c.h.b16 %v357
        %v925 = vunpack.c.l.b16 %v358
        %v926 = vunpack.c.h.b16 %v358
        %v927 = vunpack.c.l.b16 %v359
        %v928 = vunpack.c.l.b16 %v360
        %v929 = vunpack.c.h.b16 %v360
        %v930 = vunpack.c.l.b16 %v361
        %v931 = vunpack.c.h.b16 %v361
        %v932 = vunpack.c.l.b16 %v362
        %v933 = vunpack.c.h.b16 %v362
        %v934 = vunpack.c.l.b16 %v363
        %v935 = vunpack.c.h.b16 %v363
        %v936 = vunpack.c.l.b16 %v364
        %v937 = vunpack.c.l.b16 %v365
        %v938 = vunpack.c.h.b16 %v365
        %v939 = vunpack.c.l.b16 %v366
        %v940 = vunpack.c.h.b16 %v366
        %v941 = vunpack.c.l.b16 %v367
        %v942 = vunpack.c.h.b16 %v367
        %v943 = vunpack.c.l.b16 %v368
        %v944 = vunpack.c.h.b16 %v368
        %v945 = vunpack.c.l.b16 %v369
        %v946 = vunpack.c.l.b16 %v370
        %v947 = vunpack.c.h.b16 %v370
        %v948 = vunpack.c.l.b16 %v371
        %v949 = vunpack.c.h.b16 %v371
        %v950 = vunpack.c.l.b16 %v372
        %v951 = vunpack.c.h.b16 %v372
        %v952 = vunpack.c.l.b16 %v373
        %v953 = vunpack.c.h.b16 %v373
        %v954 = vunpack.c.l.b16 %v374
        %v955 = vunpack.c.l.b16 %v375
        %v956 = vunpack.c.h.b16 %v375
        %v957 = vunpack.c.l.b16 %v376
        %v958 = vunpack.c.h.b16 %v376
        %v959 = vunpack.c.l.b16 %v377
        %v960 = vunpack.c.h.b16 %v377
        %v961 = vunpack.c.l.b16 %v378
        %v962 = vunpack.c.h.b16 %v378
        %v963 = vunpack.c.l.b16 %v379
        %v964 = vunpack.c.l.b16 %v380
        %v965 = vunpack.c.h.b16 %v380
        %v966 = vunpack.c.l.b16 %v381
        %v967 = vunpack.c.h.b16 %v381
        %v968 = vunpack.c.l.b16 %v382
        %v969 = vunpack.c.h.b16 %v382
        %v970 = vunpack.c.l.b16 %v383
        %v971 = vunpack.c.h.b16 %v383
        %v972 = vunpack.c.l.b16 %v384
        %v973 = vunpack.c.l.b16 %v385
        %v974 = vunpack.c.h.b16 %v385
        %v975 = vunpack.c.l.b16 %v386
        %v976 = vunpack.c.h.b16 %v386
        %v977 = vunpack.c.l.b16 %v387
        %v978 = vunpack.c.h.b16 %v387
        %v979 = vunpack.c.l.b16 %v388
        %v980 = vunpack.c.h.b16 %v388
        %v981 = vunpack.c.l.b16 %v389
        %v982 = vunpack.c.l.b16 %v390
        %v983 = vunpack.c.h.b16 %v390
        %v984 = vunpack.c.l.b16 %v391
        %v985 = vunpack.c.h.b16 %v391
        %v986 = vunpack.c.l.b16 %v392
        %v987 = vunpack.c.h.b16 %v392
        %v988 = vunpack.c.l.b16 %v393
        %v989 = vunpack.c.h.b16 %v393
        %v990 = vunpack.c.l.b16 %v394
        %v991 = vunpack.c.l.b16 %v395
        %v992 = vunpack.c.h.b16 %v395
        %v993 = vunpack.c.l.b16 %v396
        %v994 = vunpack.c.h.b16 %v396
        %v995 = vunpack.c.l.b16 %v397
        %v996 = vunpack.c.h.b16 %v397
        %v997 = vunpack.c.l.b16 %v398
        %v998 = vunpack.c.h.b16 %v398
        %v999 = vunpack.c.l.b16 %v399
        %v1000 = vunpack.c.l.b16 %v400
        %v1001 = vunpack.c.h.b16 %v400
        %v1002 = vunpack.c.l.b16 %v401
        %v1003 = vunpack.c.h.b16 %v401
        %v1004 = vunpack.c.l.b16 %v402
        %v1005 = vunpack.c.h.b16 %v402
        %v1006 = vunpack.c.l.b16 %v403
        %v1007 = vunpack.c.h.b16 %v403
        %v1008 = vunpack.c.l.b16 %v404
        %v1009 = vunpack.c.l.b16 %v405
        %v1010 = vunpack.c.h.b16 %v405
        %v1011 = vunpack.c.l.b16 %v406
        %v1012 = vunpack.c.h.b16 %v406
        %v1013 = vunpack.c.l.b16 %v407
        %v1014 = vunpack.c.h.b16 %v407
        %v1015 = vunpack.c.l.b16 %v408
        %v1016 = vunpack.c.h.b16 %v408
        %v1017 = vunpack.c.l.b16 %v409
        %v1018 = vunpack.c.l.b16 %v410
        %v1019 = vunpack.c.h.b16 %v410
        %v1020 = vunpack.c.l.b16 %v411
        %v1021 = vunpack.c.h.b16 %v411
        %v1022 = vunpack.c.l.b16 %v412
        %v1023 = vunpack.c.h.b16 %v412
        %v1024 = vunpack.c.l.b16 %v413
        %v1025 = vunpack.c.h.b16 %v413
        %v1026 = vunpack.c.l.b16 %v414
        %v1027 = vunpack.c.l.b16 %v415
        %v1028 = vunpack.c.h.b16 %v415
        %v1029 = vunpack.c.l.b16 %v416
        %v1030 = vunpack.c.h.b16 %v416
        %v1031 = vunpack.c.l.b16 %v417
        %v1032 = vunpack.c.h.b16 %v417
        %v1033 = vunpack.c.l.b16 %v418
        %v1034 = vunpack.c.h.b16 %v418
        %v1035 = vunpack.c.l.b16 %v419
        %v1036 = vunpack.c.l.b16 %v420
        %v1037 = vunpack.c.h.b16 %v420
        %v1038 = vunpack.c.l.b16 %v421
        %v1039 = vunpack.c.h.b16 %v421
        %v1040 = vunpack.c.l.b16 %v422
        %v1041 = vunpack.c.h.b16 %v422
        %v1042 = vunpack.c.l.b16 %v423
        %v1043 = vunpack.c.h.b16 %v423
        %v1044 = vunpack.c.l.b16 %v424
        %v1045 = vunpack.c.l.b16 %v425
        %v1046 = vunpack.c.h.b16 %v425
        %v1047 = vunpack.c.l.b16 %v426
        %v1048 = vunpack.c.h.b16 %v426
        %v1049 = vunpack.c.l.b16 %v427
        %v1050 = vunpack.c.h.b16 %v427
        %v1051 = vunpack.c.l.b16 %v428
        %v1052 = vunpack.c.h.b16 %v428
        %v1053 = vunpack.c.l.b16 %v429
        %v1054 = vunpack.c.l.b16 %v430
        %v1055 = vunpack.c.h.b16 %v430
        %v1056 = vunpack.c.l.b16 %v431
        %v1057 = vunpack.c.h.b16 %v431
        %v1058 = vunpack.c.l.b16 %v432
        %v1059 = vunpack.c.h.b16 %v432
        %v1060 = vunpack.c.l.b16 %v433
        %v1061 = vunpack.c.h.b16 %v433
        %v1062 = vunpack.c.l.b16 %v434
        %v1063 = vunpack.c.l.b16 %v435
        %v1064 = vunpack.c.h.b16 %v435
        %v1065 = vunpack.c.l.b16 %v436
        %v1066 = vunpack.c.h.b16 %v436
        %v1067 = vunpack.c.l.b16 %v437
        %v1068 = vunpack.c.h.b16 %v437
        %v1069 = vunpack.c.l.b16 %v438
        %v1070 = vunpack.c.h.b16 %v438
        %v1071 = vunpack.c.l.b16 %v439
        %v1072 = vunpack.c.l.b16 %v440
        %v1073 = vunpack.c.h.b16 %v440
        %v1074 = vunpack.c.l.b16 %v441
        %v1075 = vunpack.c.h.b16 %v441
        %v1076 = vunpack.c.l.b16 %v442
        %v1077 = vunpack.c.h.b16 %v442
        %v1078 = vunpack.c.l.b16 %v443
        %v1079 = vunpack.c.h.b16 %v443
        %v1080 = vunpack.c.l.b16 %v444
        %v1081 = vunpack.c.l.b16 %v445
        %v1082 = vunpack.c.h.b16 %v445
        %v1083 = vunpack.c.l.b16 %v446
        %v1084 = vunpack.c.h.b16 %v446
        %v1085 = vunpack.c.l.b16 %v447
        %v1086 = vunpack.c.h.b16 %v447
        %v1087 = vunpack.c.l.b16 %v448
        %v1088 = vunpack.c.h.b16 %v448
        %v1089 = vunpack.c.l.b16 %v449
        %v1090 = vunpack.c.l.b16 %v450
        %v1091 = vunpack.c.h.b16 %v450
        %v1092 = vunpack.c.l.b16 %v451
        %v1093 = vunpack.c.h.b16 %v451
        %v1094 = vunpack.c.l.b16 %v452
        %v1095 = vunpack.c.h.b16 %v452
        %v1096 = vunpack.c.l.b16 %v453
        %v1097 = vunpack.c.h.b16 %v453
        %v1098 = vunpack.c.l.b16 %v454
        %v1099 = vunpack.c.l.b16 %v455
        %v1100 = vunpack.c.h.b16 %v455
        %v1101 = vunpack.c.l.b16 %v456
        %v1102 = vunpack.c.h.b16 %v456
        %v1103 = vunpack.c.l.b16 %v457
        %v1104 = vunpack.c.h.b16 %v457
        %v1105 = vunpack.c.l.b16 %v458
        %v1106 = vunpack.c.h.b16 %v458
        %v1107 = vunpack.c.l.b16 %v459
        %v1108 = vunpack.c.l.b16 %v460
        %v1109 = vunpack.c.h.b16 %v460
        %v1110 = vunpack.c.l.b16 %v461
        %v1111 = vunpack.c.h.b16 %v461
        %v1112 = vunpack.c.l.b16 %v462
        %v1113 = vunpack.c.h.b16 %v462
        %v1114 = vunpack.c.l.b16 %v463
        %v1115 = vunpack.c.h.b16 %v463
        %v1116 = vunpack.c.l.b16 %v464
        %v1117 = vunpack.c.l.b16 %v465
        %v1118 = vunpack.c.h.b16 %v465
        %v1119 = vunpack.c.l.b16 %v466
        %v1120 = vunpack.c.h.b16 %v466
        %v1121 = vunpack.c.l.b16 %v467
        %v1122 = vunpack.c.h.b16 %v467
        %v1123 = vunpack.c.l.b16 %v468
        %v1124 = vunpack.c.h.b16 %v468
        %v1125 = vunpack.c.l.b16 %v469
        %v1126 = vunpack.c.l.b16 %v470
        %v1127 = vunpack.c.h.b16 %v470
        %v1128 = vunpack.c.l.b16 %v471
        %v1129 = vunpack.c.h.b16 %v471
        %v1130 = vunpack.c.l.b16 %v472
        %v1131 = vunpack.c.h.b16 %v472
        %v1132 = vunpack.c.l.b16 %v473
        %v1133 = vunpack.c.h.b16 %v473
        %v1134 = vunpack.c.l.b16 %v474
        %v1135 = vunpack.c.l.b16 %v475
        %v1136 = vunpack.c.h.b16 %v475
        %v1137 = vunpack.c.l.b16 %v476
        %v1138 = vunpack.c.h.b16 %v476
        %v1139 = vunpack.c.l.b16 %v477
        %v1140 = vunpack.c.h.b16 %v477
        %v1141 = vunpack.c.l.b16 %v478
        %v1142 = vunpack.c.h.b16 %v478
        %v1143 = vunpack.c.l.b16 %v479
        %v1144 = vunpack.c.l.b16 %v480
        %v1145 = vunpack.c.h.b16 %v480
        %v1146 = vunpack.c.l.b16 %v481
        %v1147 = vunpack.c.h.b16 %v481
        %v1148 = vunpack.c.l.b16 %v482
        %v1149 = vunpack.c.h.b16 %v482
        %v1150 = vunpack.c.l.b16 %v483
        %v1151 = vunpack.c.h.b16 %v483
        %v1152 = vunpack.c.l.b16 %v484
        %v1153 = vunpack.c.l.b16 %v485
        %v1154 = vunpack.c.h.b16 %v485
        %v1155 = vunpack.c.l.b16 %v486
        %v1156 = vunpack.c.h.b16 %v486
        %v1157 = vunpack.c.l.b16 %v487
        %v1158 = vunpack.c.h.b16 %v487
        %v1159 = vunpack.c.l.b16 %v488
        %v1160 = vunpack.c.h.b16 %v488
        %v1161 = vunpack.c.l.b16 %v489
        %v1162 = vpack.c.b16 %v739, %v730
        %v1163 = vpack.c.b16 %v740, %v731
        %v1164 = vpack.c.b16 %v741, %v732
        %v1165 = vpack.c.b16 %v742, %v733
        %v1166 = vpack.c.b16 %v743, %v734
        %v1167 = vpack.c.b16 %v744, %v735
        %v1168 = vpack.c.b16 %v745, %v736
        %v1169 = vpack.c.b16 %v746, %v737
        %v1170 = vpack.c.b16 %v747, %v738
        %v1171 = vpack.c.b16 %v757, %v748
        %v1172 = vpack.c.b16 %v758, %v749
        %v1173 = vpack.c.b16 %v759, %v750
        %v1174 = vpack.c.b16 %v760, %v751
        %v1175 = vpack.c.b16 %v761, %v752
        %v1176 = vpack.c.b16 %v762, %v753
        %v1177 = vpack.c.b16 %v763, %v754
        %v1178 = vpack.c.b16 %v764, %v755
        %v1179 = vpack.c.b16 %v765, %v756
        %v1180 = vpack.c.b16 %v775, %v766
        %v1181 = vpack.c.b16 %v776, %v767
        %v1182 = vpack.c.b16 %v777, %v768
        %v1183 = vpack.c.b16 %v778, %v769
        %v1184 = vpack.c.b16 %v779, %v770
        %v1185 = vpack.c.b16 %v780, %v771
        %v1186 = vpack.c.b16 %v781, %v772
        %v1187 = vpack.c.b16 %v782, %v773
        %v1188 = vpack.c.b16 %v783, %v774
        %v1189 = vpack.c.b16 %v793, %v784
        %v1190 = vpack.c.b16 %v794, %v785
        %v1191 = vpack.c.b16 %v795, %v786
        %v1192 = vpack.c.b16 %v796, %v787
        %v1193 = vpack.c.b16 %v797, %v788
        %v1194 = vpack.c.b16 %v798, %v789
        %v1195 = vpack.c.b16 %v799, %v790
        %v1196 = vpack.c.b16 %v800, %v791
        %v1197 = vpack.c.b16 %v801, %v792
        %v1198 = vpack.c.b16 %v811, %v802
        %v1199 = vpack.c.b16 %v812, %v803
        %v1200 = vpack.c.b16 %v813, %v804
        %v1201 = vpack.c.b16 %v814, %v805
        %v1202 = vpack.c.b16 %v815, %v806
        %v1203 = vpack.c.b16 %v816, %v807
        %v1204 = vpack.c.b16 %v817, %v808
        %v1205 = vpack.c.b16 %v818, %v809
        %v1206 = vpack.c.b16 %v819, %v810
        %v1207 = vpack.c.b16 %v829, %v820
        %v1208 = vpack.c.b16 %v830, %v821
        %v1209 = vpack.c.b16 %v831, %v822
        %v1210 = vpack.c.b16 %v832, %v823
        %v1211 = vpack.c.b16 %v833, %v824
        %v1212 = vpack.c.b16 %v834, %v825
        %v1213 = vpack.c.b16 %v835, %v826
        %v1214 = vpack.c.b16 %v836, %v827
        %v1215 = vpack.c.b16 %v837, %v828
        %v1216 = vpack.c.b16 %v847, %v838
        %v1217 = vpack.c.b16 %v848, %v839
        %v1218 = vpack.c.b16 %v849, %v840
        %v1219 = vpack.c.b16 %v850, %v841
        %v1220 = vpack.c.b16 %v851, %v842
        %v1221 = vpack.c.b16 %v852, %v843
        %v1222 = vpack.c.b16 %v853, %v844
        %v1223 = vpack.c.b16 %v854, %v845
        %v1224 = vpack.c.b16 %v855, %v846
        %v1225 = vpack.c.b16 %v865, %v856
        %v1226 = vpack.c.b16 %v866, %v857
        %v1227 = vpack.c.b16 %v867, %v858
        %v1228 = vpack.c.b16 %v868, %v859
        %v1229 = vpack.c.b16 %v869, %v860
        %v1230 = vpack.c.b16 %v870, %v861
        %v1231 = vpack.c.b16 %v871, %v862
        %v1232 = vpack.c.b16 %v872, %v863
        %v1233 = vpack.c.b16 %v873, %v864
        %v1234 = vpack.c.b16 %v883, %v874
        %v1235 = vpack.c.b16 %v884, %v875
        %v1236 = vpack.c.b16 %v885, %v876
        %v1237 = vpack.c.b16 %v886, %v877
        %v1238 = vpack.c.b16 %v887, %v878
        %v1239 = vpack.c.b16 %v888, %v879
        %v1240 = vpack.c.b16 %v889, %v880
        %v1241 = vpack.c.b16 %v890, %v881
        %v1242 = vpack.c.b16 %v891, %v882
        %v1243 = vpack.c.b16 %v901, %v892
        %v1244 = vpack.c.b16 %v902, %v893
        %v1245 = vpack.c.b16 %v903, %v894
        %v1246 = vpack.c.b16 %v904, %v895
        %v1247 = vpack.c.b16 %v905, %v896
        %v1248 = vpack.c.b16 %v906, %v897
        %v1249 = vpack.c.b16 %v907, %v898
        %v1250 = vpack.c.b16 %v908, %v899
        %v1251 = vpack.c.b16 %v909, %v900
        %v1252 = vpack.c.b16 %v919, %v910
        %v1253 = vpack.c.b16 %v920, %v911
        %v1254 = vpack.c.b16 %v921, %v912
        %v1255 = vpack.c.b16 %v922, %v913
        %v1256 = vpack.c.b16 %v923, %v914
        %v1257 = vpack.c.b16 %v924, %v915
        %v1258 = vpack.c.b16 %v925, %v916
        %v1259 = vpack.c.b16 %v926, %v917
        %v1260 = vpack.c.b16 %v927, %v918
        %v1261 = vpack.c.b16 %v937, %v928
        %v1262 = vpack.c.b16 %v938, %v929
        %v1263 = vpack.c.b16 %v939, %v930
        %v1264 = vpack.c.b16 %v940, %v931
        %v1265 = vpack.c.b16 %v941, %v932
        %v1266 = vpack.c.b16 %v942, %v933
        %v1267 = vpack.c.b16 %v943, %v934
        %v1268 = vpack.c.b16 %v944, %v935
        %v1269 = vpack.c.b16 %v945, %v936
        %v1270 = vpack.c.b16 %v955, %v946
        %v1271 = vpack.c.b16 %v956, %v947
        %v1272 = vpack.c.b16 %v957, %v948
        %v1273 = vpack.c.b16 %v958, %v949
        %v1274 = vpack.c.b16 %v959, %v950
        %v1275 = vpack.c.b16 %v960, %v951
        %v1276 = vpack.c.b16 %v961, %v952
        %v1277 = vpack.c.b16 %v962, %v953
        %v1278 = vpack.c.b16 %v963, %v954
        %v1279 = vpack.c.b16 %v973, %v964
        %v1280 = vpack.c.b16 %v974, %v965
        %v1281 = vpack.c.b16 %v975, %v966
        %v1282 = vpack.c.b16 %v976, %v967
        %v1283 = vpack.c.b16 %v977, %v968
        %v1284 = vpack.c.b16 %v978, %v969
        %v1285 = vpack.c.b16 %v979, %v970
        %v1286 = vpack.c.b16 %v980, %v971
        %v1287 = vpack.c.b16 %v981, %v972
        %v1288 = vpack.c.b16 %v991, %v982
        %v1289 = vpack.c.b16 %v992, %v983
        %v1290 = vpack.c.b16 %v993, %v984
        %v1291 = vpack.c.b16 %v994, %v985
        %v1292 = vpack.c.b16 %v995, %v986
        %v1293 = vpack.c.b16 %v996, %v987
        %v1294 = vpack.c.b16 %v997, %v988
        %v1295 = vpack.c.b16 %v998, %v989
        %v1296 = vpack.c.b16 %v999, %v990
        %v1297 = vpack.c.b16 %v1009, %v1000
        %v1298 = vpack.c.b16 %v1010, %v1001
        %v1299 = vpack.c.b16 %v1011, %v1002
        %v1300 = vpack.c.b16 %v1012, %v1003
        %v1301 = vpack.c.b16 %v1013, %v1004
        %v1302 = vpack.c.b16 %v1014, %v1005
        %v1303 = vpack.c.b16 %v1015, %v1006
        %v1304 = vpack.c.b16 %v1016, %v1007
        %v1305 = vpack.c.b16 %v1017, %v1008
        %v1306 = vpack.c.b16 %v1027, %v1018
        %v1307 = vpack.c.b16 %v1028, %v1019
        %v1308 = vpack.c.b16 %v1029, %v1020
        %v1309 = vpack.c.b16 %v1030, %v1021
        %v1310 = vpack.c.b16 %v1031, %v1022
        %v1311 = vpack.c.b16 %v1032, %v1023
        %v1312 = vpack.c.b16 %v1033, %v1024
        %v1313 = vpack.c.b16 %v1034, %v1025
        %v1314 = vpack.c.b16 %v1035, %v1026
        %v1315 = vpack.c.b16 %v1045, %v1036
        %v1316 = vpack.c.b16 %v1046, %v1037
        %v1317 = vpack.c.b16 %v1047, %v1038
        %v1318 = vpack.c.b16 %v1048, %v1039
        %v1319 = vpack.c.b16 %v1049, %v1040
        %v1320 = vpack.c.b16 %v1050, %v1041
        %v1321 = vpack.c.b16 %v1051, %v1042
        %v1322 = vpack.c.b16 %v1052, %v1043
        %v1323 = vpack.c.b16 %v1053, %v1044
        %v1324 = vpack.c.b16 %v1063, %v1054
        %v1325 = vpack.c.b16 %v1064, %v1055
        %v1326 = vpack.c.b16 %v1065, %v1056
        %v1327 = vpack.c.b16 %v1066, %v1057
        %v1328 = vpack.c.b16 %v1067, %v1058
        %v1329 = vpack.c.b16 %v1068, %v1059
        %v1330 = vpack.c.b16 %v1069, %v1060
        %v1331 = vpack.c.b16 %v1070, %v1061
        %v1332 = vpack.c.b16 %v1071, %v1062
        %v1333 = vpack.c.b16 %v1081, %v1072
        %v1334 = vpack.c.b16 %v1082, %v1073
        %v1335 = vpack.c.b16 %v1083, %v1074
        %v1336 = vpack.c.b16 %v1084, %v1075
        %v1337 = vpack.c.b16 %v1085, %v1076
        %v1338 = vpack.c.b16 %v1086, %v1077
        %v1339 = vpack.c.b16 %v1087, %v1078
        %v1340 = vpack.c.b16 %v1088, %v1079
        %v1341 = vpack.c.b16 %v1089, %v1080
        %v1342 = vpack.c.b16 %v1099, %v1090
        %v1343 = vpack.c.b16 %v1100, %v1091
        %v1344 = vpack.c.b16 %v1101, %v1092
        %v1345 = vpack.c.b16 %v1102, %v1093
        %v1346 = vpack.c.b16 %v1103, %v1094
        %v1347 = vpack.c.b16 %v1104, %v1095
        %v1348 = vpack.c.b16 %v1105, %v1096
        %v1349 = vpack.c.b16 %v1106, %v1097
        %v1350 = vpack.c.b16 %v1107, %v1098
        %v1351 = vpack.c.b16 %v1117, %v1108
        %v1352 = vpack.c.b16 %v1118, %v1109
        %v1353 = vpack.c.b16 %v1119, %v1110
        %v1354 = vpack.c.b16 %v1120, %v1111
        %v1355 = vpack.c.b16 %v1121, %v1112
        %v1356 = vpack.c.b16 %v1122, %v1113
        %v1357 = vpack.c.b16 %v1123, %v1114
        %v1358 = vpack.c.b16 %v1124, %v1115
        %v1359 = vpack.c.b16 %v1125, %v1116
        %v1360 = vpack.c.b16 %v1135, %v1126
        %v1361 = vpack.c.b16 %v1136, %v1127
        %v1362 = vpack.c.b16 %v1137, %v1128
        %v1363 = vpack.c.b16 %v1138, %v1129
        %v1364 = vpack.c.b16 %v1139, %v1130
        %v1365 = vpack.c.b16 %v1140, %v1131
        %v1366 = vpack.c.b16 %v1141, %v1132
        %v1367 = vpack.c.b16 %v1142, %v1133
        %v1368 = vpack.c.b16 %v1143, %v1134
        %v1369 = vpack.c.b16 %v1153, %v1144
        %v1370 = vpack.c.b16 %v1154, %v1145
        %v1371 = vpack.c.b16 %v1155, %v1146
        %v1372 = vpack.c.b16 %v1156, %v1147
        %v1373 = vpack.c.b16 %v1157, %v1148
        %v1374 = vpack.c.b16 %v1158, %v1149
        %v1375 = vpack.c.b16 %v1159, %v1150
        %v1376 = vpack.c.b16 %v1160, %v1151
        %v1377 = vpack.c.b16 %v1161, %v1152
        %1594 = vmatprep.subr.bf16.mxu0 %v1226
        %1595 = vmatpush1.bf16.msra.mxu0 %v1225
        %1596 = vmatprep.subr.bf16.mxu0 %v1217
        %1597 = vmatpush1.bf16.msra.mxu0 %v1216
        %1598 = vmatprep.subr.bf16.mxu0 %v1208
        %1599 = vmatpush1.bf16.msra.mxu0 %v1207
        %1600 = vmatprep.subr.bf16.mxu0 %v1199
        %1601 = vmatpush1.bf16.msra.mxu0 %v1198
        %1602 = vmatprep.subr.bf16.mxu0 %v1190
        %1603 = vmatpush1.bf16.msra.mxu0 %v1189
        %1604 = vmatprep.subr.bf16.mxu0 %v1181
        %1605 = vmatpush1.bf16.msra.mxu0 %v1180
        %1606 = vmatprep.subr.bf16.mxu0 %v1172
        %1607 = vmatpush1.bf16.msra.mxu0 %v1171
        %1608 = vmatprep.subr.bf16.mxu0 %v1163
        %1609 = vmatpush1.bf16.msra.mxu0 %v1162
        %1610 = vmatprep.subr.bf16.mxu0 %v1298
        %1611 = vmatpush2.bf16.msra.mxu0 %v1297
        %1612 = vmatprep.subr.bf16.mxu0 %v1289
        %1613 = vmatpush2.bf16.msra.mxu0 %v1288
        %1614 = vmatprep.subr.bf16.mxu0 %v1280
        %1615 = vmatpush2.bf16.msra.mxu0 %v1279
        %1616 = vmatprep.subr.bf16.mxu0 %v1271
        %1617 = vmatpush2.bf16.msra.mxu0 %v1270
        %1618 = vmatprep.subr.bf16.mxu0 %v1262
        %1619 = vmatpush2.bf16.msra.mxu0 %v1261
        %1620 = vmatprep.subr.bf16.mxu0 %v1253
        %1621 = vmatpush2.bf16.msra.mxu0 %v1252
        %1622 = vmatprep.subr.bf16.mxu0 %v1244
        %1623 = vmatpush2.bf16.msra.mxu0 %v1243
        %1624 = vmatprep.subr.bf16.mxu0 %v1235
        %1625 = vmatpush2.bf16.msra.mxu0 %v1234
        %1626 = vmatprep.mubr.bf16.mxu0 %v248
        %1627 = vmatmul.mubr.bf16.gmra.mxu0 %v247
        %v1628 = vpop.f32.mrf.mxu0
        %v1629 = vadd.f32 0.0, %v1628
        %v1630 = vpop.f32.mrf.mxu0
        %v1631 = vadd.f32 0.0, %v1630
        %v1632 = vpop.f32.mrf.mxu0
        %v1633 = vpop.f32.mrf.mxu0
        %1634 = vdwg.mxu0
        %1635 = vmatprep.subr.bf16.mxu0 %v1370
        %1636 = vmatpush1.bf16.msra.mxu0 %v1369
        %1637 = vmatprep.subr.bf16.mxu0 %v1361
        %1638 = vmatpush1.bf16.msra.mxu0 %v1360
        %1639 = vmatprep.subr.bf16.mxu0 %v1352
        %1640 = vmatpush1.bf16.msra.mxu0 %v1351
        %1641 = vmatprep.subr.bf16.mxu0 %v1343
        %1642 = vmatpush1.bf16.msra.mxu0 %v1342
        %1643 = vmatprep.subr.bf16.mxu0 %v1334
        %1644 = vmatpush1.bf16.msra.mxu0 %v1333
        %1645 = vmatprep.subr.bf16.mxu0 %v1325
        %1646 = vmatpush1.bf16.msra.mxu0 %v1324
        %1647 = vmatprep.subr.bf16.mxu0 %v1316
        %1648 = vmatpush1.bf16.msra.mxu0 %v1315
        %1649 = vmatprep.subr.bf16.mxu0 %v1307
        %1650 = vmatpush1.bf16.msra.mxu0 %v1306
        %1651 = vmatprep.subr.bf16.mxu0 0
        %1652 = vmatpush2.bf16.msra.mxu0 0
        %1653 = vmatprep.subr.bf16.mxu0 0
        %1654 = vmatpush2.bf16.msra.mxu0 0
        %1655 = vmatprep.subr.bf16.mxu0 0
        %1656 = vmatpush2.bf16.msra.mxu0 0
        %1657 = vmatprep.subr.bf16.mxu0 0
        %1658 = vmatpush2.bf16.msra.mxu0 0
        %1659 = vmatprep.subr.bf16.mxu0 0
        %1660 = vmatpush2.bf16.msra.mxu0 0
        %1661 = vmatprep.subr.bf16.mxu0 0
        %1662 = vmatpush2.bf16.msra.mxu0 0
        %1663 = vmatprep.subr.bf16.mxu0 0
        %1664 = vmatpush2.bf16.msra.mxu0 0
        %1665 = vmatprep.subr.bf16.mxu0 0
        %1666 = vmatpush2.bf16.msra.mxu0 0
        %1667 = vmatprep.mubr.bf16.mxu0 0
        %1668 = vmatmul.mubr.bf16.gmra.mxu0 %v249
        %v1669 = vpop.f32.mrf.mxu0
        %v1670 = vadd.f32 %v1629, %v1669
        %v1671 = vpop.f32.mrf.mxu0
        %v1672 = vadd.f32 %v1631, %v1671
        %v1673 = vpop.f32.mrf.mxu0
        %v1674 = vpop.f32.mrf.mxu0
        %1675 = vdwg.mxu0
        %1676 = vmatprep.subr.bf16.mxu0 %v1228
        %1677 = vmatpush1.bf16.msra.mxu0 %v1227
        %1678 = vmatprep.subr.bf16.mxu0 %v1219
        %1679 = vmatpush1.bf16.msra.mxu0 %v1218
        %1680 = vmatprep.subr.bf16.mxu0 %v1210
        %1681 = vmatpush1.bf16.msra.mxu0 %v1209
        %1682 = vmatprep.subr.bf16.mxu0 %v1201
        %1683 = vmatpush1.bf16.msra.mxu0 %v1200
        %1684 = vmatprep.subr.bf16.mxu0 %v1192
        %1685 = vmatpush1.bf16.msra.mxu0 %v1191
        %1686 = vmatprep.subr.bf16.mxu0 %v1183
        %1687 = vmatpush1.bf16.msra.mxu0 %v1182
        %1688 = vmatprep.subr.bf16.mxu0 %v1174
        %1689 = vmatpush1.bf16.msra.mxu0 %v1173
        %1690 = vmatprep.subr.bf16.mxu0 %v1165
        %1691 = vmatpush1.bf16.msra.mxu0 %v1164
        %1692 = vmatprep.subr.bf16.mxu0 %v1300
        %1693 = vmatpush2.bf16.msra.mxu0 %v1299
        %1694 = vmatprep.subr.bf16.mxu0 %v1291
        %1695 = vmatpush2.bf16.msra.mxu0 %v1290
        %1696 = vmatprep.subr.bf16.mxu0 %v1282
        %1697 = vmatpush2.bf16.msra.mxu0 %v1281
        %1698 = vmatprep.subr.bf16.mxu0 %v1273
        %1699 = vmatpush2.bf16.msra.mxu0 %v1272
        %1700 = vmatprep.subr.bf16.mxu0 %v1264
        %1701 = vmatpush2.bf16.msra.mxu0 %v1263
        %1702 = vmatprep.subr.bf16.mxu0 %v1255
        %1703 = vmatpush2.bf16.msra.mxu0 %v1254
        %1704 = vmatprep.subr.bf16.mxu0 %v1246
        %1705 = vmatpush2.bf16.msra.mxu0 %v1245
        %1706 = vmatprep.subr.bf16.mxu0 %v1237
        %1707 = vmatpush2.bf16.msra.mxu0 %v1236
        %1708 = vmatprep.mubr.bf16.mxu0 %v248
        %1709 = vmatmul.mubr.bf16.gmra.mxu0 %v247
        %v1710 = vpop.f32.mrf.mxu0
        %v1711 = vadd.f32 0.0, %v1710
        %v1712 = vpop.f32.mrf.mxu0
        %v1713 = vadd.f32 0.0, %v1712
        %v1714 = vpop.f32.mrf.mxu0
        %v1715 = vpop.f32.mrf.mxu0
        %1716 = vdwg.mxu0
        %1717 = vmatprep.subr.bf16.mxu0 %v1372
        %1718 = vmatpush1.bf16.msra.mxu0 %v1371
        %1719 = vmatprep.subr.bf16.mxu0 %v1363
        %1720 = vmatpush1.bf16.msra.mxu0 %v1362
        %1721 = vmatprep.subr.bf16.mxu0 %v1354
        %1722 = vmatpush1.bf16.msra.mxu0 %v1353
        %1723 = vmatprep.subr.bf16.mxu0 %v1345
        %1724 = vmatpush1.bf16.msra.mxu0 %v1344
        %1725 = vmatprep.subr.bf16.mxu0 %v1336
        %1726 = vmatpush1.bf16.msra.mxu0 %v1335
        %1727 = vmatprep.subr.bf16.mxu0 %v1327
        %1728 = vmatpush1.bf16.msra.mxu0 %v1326
        %1729 = vmatprep.subr.bf16.mxu0 %v1318
        %1730 = vmatpush1.bf16.msra.mxu0 %v1317
        %1731 = vmatprep.subr.bf16.mxu0 %v1309
        %1732 = vmatpush1.bf16.msra.mxu0 %v1308
        %1733 = vmatprep.subr.bf16.mxu0 0
        %1734 = vmatpush2.bf16.msra.mxu0 0
        %1735 = vmatprep.subr.bf16.mxu0 0
        %1736 = vmatpush2.bf16.msra.mxu0 0
        %1737 = vmatprep.subr.bf16.mxu0 0
        %1738 = vmatpush2.bf16.msra.mxu0 0
        %1739 = vmatprep.subr.bf16.mxu0 0
        %1740 = vmatpush2.bf16.msra.mxu0 0
        %1741 = vmatprep.subr.bf16.mxu0 0
        %1742 = vmatpush2.bf16.msra.mxu0 0
        %1743 = vmatprep.subr.bf16.mxu0 0
        %1744 = vmatpush2.bf16.msra.mxu0 0
        %1745 = vmatprep.subr.bf16.mxu0 0
        %1746 = vmatpush2.bf16.msra.mxu0 0
        %1747 = vmatprep.subr.bf16.mxu0 0
        %1748 = vmatpush2.bf16.msra.mxu0 0
        %1749 = vmatprep.mubr.bf16.mxu0 0
        %1750 = vmatmul.mubr.bf16.gmra.mxu0 %v249
        %v1751 = vpop.f32.mrf.mxu0
        %v1752 = vadd.f32 %v1711, %v1751
        %v1753 = vpop.f32.mrf.mxu0
        %v1754 = vadd.f32 %v1713, %v1753
        %v1755 = vpop.f32.mrf.mxu0
        %v1756 = vpop.f32.mrf.mxu0
        %1757 = vdwg.mxu0
        %1758 = vmatprep.subr.bf16.mxu0 %v1230
        %1759 = vmatpush1.bf16.msra.mxu0 %v1229
        %1760 = vmatprep.subr.bf16.mxu0 %v1221
        %1761 = vmatpush1.bf16.msra.mxu0 %v1220
        %1762 = vmatprep.subr.bf16.mxu0 %v1212
        %1763 = vmatpush1.bf16.msra.mxu0 %v1211
        %1764 = vmatprep.subr.bf16.mxu0 %v1203
        %1765 = vmatpush1.bf16.msra.mxu0 %v1202
        %1766 = vmatprep.subr.bf16.mxu0 %v1194
        %1767 = vmatpush1.bf16.msra.mxu0 %v1193
        %1768 = vmatprep.subr.bf16.mxu0 %v1185
        %1769 = vmatpush1.bf16.msra.mxu0 %v1184
        %1770 = vmatprep.subr.bf16.mxu0 %v1176
        %1771 = vmatpush1.bf16.msra.mxu0 %v1175
        %1772 = vmatprep.subr.bf16.mxu0 %v1167
        %1773 = vmatpush1.bf16.msra.mxu0 %v1166
        %1774 = vmatprep.subr.bf16.mxu0 %v1302
        %1775 = vmatpush2.bf16.msra.mxu0 %v1301
        %1776 = vmatprep.subr.bf16.mxu0 %v1293
        %1777 = vmatpush2.bf16.msra.mxu0 %v1292
        %1778 = vmatprep.subr.bf16.mxu0 %v1284
        %1779 = vmatpush2.bf16.msra.mxu0 %v1283
        %1780 = vmatprep.subr.bf16.mxu0 %v1275
        %1781 = vmatpush2.bf16.msra.mxu0 %v1274
        %1782 = vmatprep.subr.bf16.mxu0 %v1266
        %1783 = vmatpush2.bf16.msra.mxu0 %v1265
        %1784 = vmatprep.subr.bf16.mxu0 %v1257
        %1785 = vmatpush2.bf16.msra.mxu0 %v1256
        %1786 = vmatprep.subr.bf16.mxu0 %v1248
        %1787 = vmatpush2.bf16.msra.mxu0 %v1247
        %1788 = vmatprep.subr.bf16.mxu0 %v1239
        %1789 = vmatpush2.bf16.msra.mxu0 %v1238
        %1790 = vmatprep.mubr.bf16.mxu0 %v248
        %1791 = vmatmul.mubr.bf16.gmra.mxu0 %v247
        %v1792 = vpop.f32.mrf.mxu0
        %v1793 = vadd.f32 0.0, %v1792
        %v1794 = vpop.f32.mrf.mxu0
        %v1795 = vadd.f32 0.0, %v1794
        %v1796 = vpop.f32.mrf.mxu0
        %v1797 = vpop.f32.mrf.mxu0
        %1798 = vdwg.mxu0
        %1799 = vmatprep.subr.bf16.mxu0 %v1374
        %1800 = vmatpush1.bf16.msra.mxu0 %v1373
        %1801 = vmatprep.subr.bf16.mxu0 %v1365
        %1802 = vmatpush1.bf16.msra.mxu0 %v1364
        %1803 = vmatprep.subr.bf16.mxu0 %v1356
        %1804 = vmatpush1.bf16.msra.mxu0 %v1355
        %1805 = vmatprep.subr.bf16.mxu0 %v1347
        %1806 = vmatpush1.bf16.msra.mxu0 %v1346
        %1807 = vmatprep.subr.bf16.mxu0 %v1338
        %1808 = vmatpush1.bf16.msra.mxu0 %v1337
        %1809 = vmatprep.subr.bf16.mxu0 %v1329
        %1810 = vmatpush1.bf16.msra.mxu0 %v1328
        %1811 = vmatprep.subr.bf16.mxu0 %v1320
        %1812 = vmatpush1.bf16.msra.mxu0 %v1319
        %1813 = vmatprep.subr.bf16.mxu0 %v1311
        %1814 = vmatpush1.bf16.msra.mxu0 %v1310
        %1815 = vmatprep.subr.bf16.mxu0 0
        %1816 = vmatpush2.bf16.msra.mxu0 0
        %1817 = vmatprep.subr.bf16.mxu0 0
        %1818 = vmatpush2.bf16.msra.mxu0 0
        %1819 = vmatprep.subr.bf16.mxu0 0
        %1820 = vmatpush2.bf16.msra.mxu0 0
        %1821 = vmatprep.subr.bf16.mxu0 0
        %1822 = vmatpush2.bf16.msra.mxu0 0
        %1823 = vmatprep.subr.bf16.mxu0 0
        %1824 = vmatpush2.bf16.msra.mxu0 0
        %1825 = vmatprep.subr.bf16.mxu0 0
        %1826 = vmatpush2.bf16.msra.mxu0 0
        %1827 = vmatprep.subr.bf16.mxu0 0
        %1828 = vmatpush2.bf16.msra.mxu0 0
        %1829 = vmatprep.subr.bf16.mxu0 0
        %1830 = vmatpush2.bf16.msra.mxu0 0
        %1831 = vmatprep.mubr.bf16.mxu0 0
        %1832 = vmatmul.mubr.bf16.gmra.mxu0 %v249
        %v1833 = vpop.f32.mrf.mxu0
        %v1834 = vadd.f32 %v1793, %v1833
        %v1835 = vpop.f32.mrf.mxu0
        %v1836 = vadd.f32 %v1795, %v1835
        %v1837 = vpop.f32.mrf.mxu0
        %v1838 = vpop.f32.mrf.mxu0
        %1839 = vdwg.mxu0
        %1840 = vmatprep.subr.bf16.mxu0 %v1232
        %1841 = vmatpush1.bf16.msra.mxu0 %v1231
        %1842 = vmatprep.subr.bf16.mxu0 %v1223
        %1843 = vmatpush1.bf16.msra.mxu0 %v1222
        %1844 = vmatprep.subr.bf16.mxu0 %v1214
        %1845 = vmatpush1.bf16.msra.mxu0 %v1213
        %1846 = vmatprep.subr.bf16.mxu0 %v1205
        %1847 = vmatpush1.bf16.msra.mxu0 %v1204
        %1848 = vmatprep.subr.bf16.mxu0 %v1196
        %1849 = vmatpush1.bf16.msra.mxu0 %v1195
        %1850 = vmatprep.subr.bf16.mxu0 %v1187
        %1851 = vmatpush1.bf16.msra.mxu0 %v1186
        %1852 = vmatprep.subr.bf16.mxu0 %v1178
        %1853 = vmatpush1.bf16.msra.mxu0 %v1177
        %1854 = vmatprep.subr.bf16.mxu0 %v1169
        %1855 = vmatpush1.bf16.msra.mxu0 %v1168
        %1856 = vmatprep.subr.bf16.mxu0 %v1304
        %1857 = vmatpush2.bf16.msra.mxu0 %v1303
        %1858 = vmatprep.subr.bf16.mxu0 %v1295
        %1859 = vmatpush2.bf16.msra.mxu0 %v1294
        %1860 = vmatprep.subr.bf16.mxu0 %v1286
        %1861 = vmatpush2.bf16.msra.mxu0 %v1285
        %1862 = vmatprep.subr.bf16.mxu0 %v1277
        %1863 = vmatpush2.bf16.msra.mxu0 %v1276
        %1864 = vmatprep.subr.bf16.mxu0 %v1268
        %1865 = vmatpush2.bf16.msra.mxu0 %v1267
        %1866 = vmatprep.subr.bf16.mxu0 %v1259
        %1867 = vmatpush2.bf16.msra.mxu0 %v1258
        %1868 = vmatprep.subr.bf16.mxu0 %v1250
        %1869 = vmatpush2.bf16.msra.mxu0 %v1249
        %1870 = vmatprep.subr.bf16.mxu0 %v1241
        %1871 = vmatpush2.bf16.msra.mxu0 %v1240
        %1872 = vmatprep.mubr.bf16.mxu0 %v248
        %1873 = vmatmul.mubr.bf16.gmra.mxu0 %v247
        %v1874 = vpop.f32.mrf.mxu0
        %v1875 = vadd.f32 0.0, %v1874
        %v1876 = vpop.f32.mrf.mxu0
        %v1877 = vadd.f32 0.0, %v1876
        %v1878 = vpop.f32.mrf.mxu0
        %v1879 = vpop.f32.mrf.mxu0
        %1880 = vdwg.mxu0
        %1881 = vmatprep.subr.bf16.mxu0 %v1376
        %1882 = vmatpush1.bf16.msra.mxu0 %v1375
        %1883 = vmatprep.subr.bf16.mxu0 %v1367
        %1884 = vmatpush1.bf16.msra.mxu0 %v1366
        %1885 = vmatprep.subr.bf16.mxu0 %v1358
        %1886 = vmatpush1.bf16.msra.mxu0 %v1357
        %1887 = vmatprep.subr.bf16.mxu0 %v1349
        %1888 = vmatpush1.bf16.msra.mxu0 %v1348
        %1889 = vmatprep.subr.bf16.mxu0 %v1340
        %1890 = vmatpush1.bf16.msra.mxu0 %v1339
        %1891 = vmatprep.subr.bf16.mxu0 %v1331
        %1892 = vmatpush1.bf16.msra.mxu0 %v1330
        %1893 = vmatprep.subr.bf16.mxu0 %v1322
        %1894 = vmatpush1.bf16.msra.mxu0 %v1321
        %1895 = vmatprep.subr.bf16.mxu0 %v1313
        %1896 = vmatpush1.bf16.msra.mxu0 %v1312
        %1897 = vmatprep.subr.bf16.mxu0 0
        %1898 = vmatpush2.bf16.msra.mxu0 0
        %1899 = vmatprep.subr.bf16.mxu0 0
        %1900 = vmatpush2.bf16.msra.mxu0 0
        %1901 = vmatprep.subr.bf16.mxu0 0
        %1902 = vmatpush2.bf16.msra.mxu0 0
        %1903 = vmatprep.subr.bf16.mxu0 0
        %1904 = vmatpush2.bf16.msra.mxu0 0
        %1905 = vmatprep.subr.bf16.mxu0 0
        %1906 = vmatpush2.bf16.msra.mxu0 0
        %1907 = vmatprep.subr.bf16.mxu0 0
        %1908 = vmatpush2.bf16.msra.mxu0 0
        %1909 = vmatprep.subr.bf16.mxu0 0
        %1910 = vmatpush2.bf16.msra.mxu0 0
        %1911 = vmatprep.subr.bf16.mxu0 0
        %1912 = vmatpush2.bf16.msra.mxu0 0
        %1913 = vmatprep.mubr.bf16.mxu0 0
        %1914 = vmatmul.mubr.bf16.gmra.mxu0 %v249
        %v1915 = vpop.f32.mrf.mxu0
        %v1916 = vadd.f32 %v1875, %v1915
        %v1917 = vpop.f32.mrf.mxu0
        %v1918 = vadd.f32 %v1877, %v1917
        %v1919 = vpop.f32.mrf.mxu0
        %v1920 = vpop.f32.mrf.mxu0
        %1921 = vdwg.mxu0
        %1922 = vmatprep.subr.bf16.mxu0 0
        %1923 = vmatpush1.bf16.msra.mxu0 %v1233
        %1924 = vmatprep.subr.bf16.mxu0 0
        %1925 = vmatpush1.bf16.msra.mxu0 %v1224
        %1926 = vmatprep.subr.bf16.mxu0 0
        %1927 = vmatpush1.bf16.msra.mxu0 %v1215
        %1928 = vmatprep.subr.bf16.mxu0 0
        %1929 = vmatpush1.bf16.msra.mxu0 %v1206
        %1930 = vmatprep.subr.bf16.mxu0 0
        %1931 = vmatpush1.bf16.msra.mxu0 %v1197
        %1932 = vmatprep.subr.bf16.mxu0 0
        %1933 = vmatpush1.bf16.msra.mxu0 %v1188
        %1934 = vmatprep.subr.bf16.mxu0 0
        %1935 = vmatpush1.bf16.msra.mxu0 %v1179
        %1936 = vmatprep.subr.bf16.mxu0 0
        %1937 = vmatpush1.bf16.msra.mxu0 %v1170
        %1938 = vmatprep.subr.bf16.mxu0 0
        %1939 = vmatpush2.bf16.msra.mxu0 %v1305
        %1940 = vmatprep.subr.bf16.mxu0 0
        %1941 = vmatpush2.bf16.msra.mxu0 %v1296
        %1942 = vmatprep.subr.bf16.mxu0 0
        %1943 = vmatpush2.bf16.msra.mxu0 %v1287
        %1944 = vmatprep.subr.bf16.mxu0 0
        %1945 = vmatpush2.bf16.msra.mxu0 %v1278
        %1946 = vmatprep.subr.bf16.mxu0 0
        %1947 = vmatpush2.bf16.msra.mxu0 %v1269
        %1948 = vmatprep.subr.bf16.mxu0 0
        %1949 = vmatpush2.bf16.msra.mxu0 %v1260
        %1950 = vmatprep.subr.bf16.mxu0 0
        %1951 = vmatpush2.bf16.msra.mxu0 %v1251
        %1952 = vmatprep.subr.bf16.mxu0 0
        %1953 = vmatpush2.bf16.msra.mxu0 %v1242
        %1954 = vmatprep.mubr.bf16.mxu0 %v248
        %1955 = vmatmul.mubr.bf16.gmra.mxu0 %v247
        %v1956 = vpop.f32.mrf.mxu0
        %v1957 = vadd.f32 0.0, %v1956
        %v1958 = vpop.f32.mrf.mxu0
        %v1959 = vpop.f32.mrf.mxu0
        %v1960 = vpop.f32.mrf.mxu0
        %1961 = vdwg.mxu0
        %1962 = vmatprep.subr.bf16.mxu0 0
        %1963 = vmatpush1.bf16.msra.mxu0 %v1377
        %1964 = vmatprep.subr.bf16.mxu0 0
        %1965 = vmatpush1.bf16.msra.mxu0 %v1368
        %1966 = vmatprep.subr.bf16.mxu0 0
        %1967 = vmatpush1.bf16.msra.mxu0 %v1359
        %1968 = vmatprep.subr.bf16.mxu0 0
        %1969 = vmatpush1.bf16.msra.mxu0 %v1350
        %1970 = vmatprep.subr.bf16.mxu0 0
        %1971 = vmatpush1.bf16.msra.mxu0 %v1341
        %1972 = vmatprep.subr.bf16.mxu0 0
        %1973 = vmatpush1.bf16.msra.mxu0 %v1332
        %1974 = vmatprep.subr.bf16.mxu0 0
        %1975 = vmatpush1.bf16.msra.mxu0 %v1323
        %1976 = vmatprep.subr.bf16.mxu0 0
        %1977 = vmatpush1.bf16.msra.mxu0 %v1314
        %1978 = vmatprep.subr.bf16.mxu0 0
        %1979 = vmatpush2.bf16.msra.mxu0 0
        %1980 = vmatprep.subr.bf16.mxu0 0
        %1981 = vmatpush2.bf16.msra.mxu0 0
        %1982 = vmatprep.subr.bf16.mxu0 0
        %1983 = vmatpush2.bf16.msra.mxu0 0
        %1984 = vmatprep.subr.bf16.mxu0 0
        %1985 = vmatpush2.bf16.msra.mxu0 0
        %1986 = vmatprep.subr.bf16.mxu0 0
        %1987 = vmatpush2.bf16.msra.mxu0 0
        %1988 = vmatprep.subr.bf16.mxu0 0
        %1989 = vmatpush2.bf16.msra.mxu0 0
        %1990 = vmatprep.subr.bf16.mxu0 0
        %1991 = vmatpush2.bf16.msra.mxu0 0
        %1992 = vmatprep.subr.bf16.mxu0 0
        %1993 = vmatpush2.bf16.msra.mxu0 0
        %1994 = vmatprep.mubr.bf16.mxu0 0
        %1995 = vmatmul.mubr.bf16.gmra.mxu0 %v249
        %v1996 = vpop.f32.mrf.mxu0
        %v1997 = vadd.f32 %v1957, %v1996
        %v1998 = vpop.f32.mrf.mxu0
        %v1999 = vpop.f32.mrf.mxu0
        %v2000 = vpop.f32.mrf.mxu0
        %2001 = vdwg.mxu0
        %v2002 = vpack.c.bf16 %v1670, %v1670
        %v2003 = vpack.c.bf16 %v1672, %v1672
        %v2004 = vpack.c.bf16 %v1752, %v1752
        %v2005 = vpack.c.bf16 %v1754, %v1754
        %v2006 = vpack.c.bf16 %v1834, %v1834
        %v2007 = vpack.c.bf16 %v1836, %v1836
        %v2008 = vpack.c.bf16 %v1916, %v1916
        %v2009 = vpack.c.bf16 %v1918, %v1918
        %v2010 = vpack.c.bf16 %v1997, %v1997
        %v2011 = vlaneseq
        %v2012 = vshrl.u32 %v2011, 7
        %v2013 = vlaneseq
        %v2014 = vand.u32 %v2013, 127
        %vm2015 = vcmp.ge.s32.totalorder %v2012, %v2014
        %v2016 = vsel %vm2015, 0.0, -1e+30
        %vm2017 = vcmask 523264
        %v2019 = vsel %vm2017, %v2002, 0
        %v2022 = vsel %vm2017, %v2005, 0
        %2024 = vmatprep.subr.bf16.mxu0 0
        %2025 = vmatpush1.bf16.xpose.msra.mxu0 0
        %2026 = vmatprep.subr.bf16.mxu0 0
        %2027 = vmatpush1.bf16.xpose.msra.mxu0 0
        %2028 = vmatprep.subr.bf16.mxu0 0
        %2029 = vmatpush1.bf16.xpose.msra.mxu0 0
        %2030 = vmatprep.subr.bf16.mxu0 0
        %2031 = vmatpush1.bf16.xpose.msra.mxu0 0
        %2032 = vmatprep.subr.bf16.mxu0 0
        %2033 = vmatpush1.bf16.xpose.msra.mxu0 0
        %2034 = vmatprep.subr.bf16.mxu0 0
        %2035 = vmatpush1.bf16.xpose.msra.mxu0 0
        %2036 = vmatprep.subr.bf16.mxu0 0
        %2037 = vmatpush1.bf16.xpose.msra.mxu0 0
        %2038 = vmatprep.subr.bf16.mxu0 0
        %2039 = vmatpush1.bf16.xpose.msra.mxu0 %v2022
        %2040 = vmatprep.subr.bf16.mxu0 0
        %2041 = vmatpush2.bf16.xpose.msra.mxu0 0
        %2042 = vmatprep.subr.bf16.mxu0 0
        %2043 = vmatpush2.bf16.xpose.msra.mxu0 0
        %2044 = vmatprep.subr.bf16.mxu0 0
        %2045 = vmatpush2.bf16.xpose.msra.mxu0 0
        %2046 = vmatprep.subr.bf16.mxu0 0
        %2047 = vmatpush2.bf16.xpose.msra.mxu0 0
        %2048 = vmatprep.subr.bf16.mxu0 0
        %2049 = vmatpush2.bf16.xpose.msra.mxu0 0
        %2050 = vmatprep.subr.bf16.mxu0 0
        %2051 = vmatpush2.bf16.xpose.msra.mxu0 0
        %2052 = vmatprep.subr.bf16.mxu0 0
        %2053 = vmatpush2.bf16.xpose.msra.mxu0 0
        %2054 = vmatprep.subr.bf16.mxu0 0
        %2055 = vmatpush2.bf16.xpose.msra.mxu0 0
        %2056 = vmatprep.mubr.bf16.mxu0 0
        %2057 = vmatmul.mubr.bf16.gmra.mxu0 %v2019
        %v2058 = vpop.f32.mrf.mxu0
        %v2059 = vadd.f32 %v2016, %v2058
        %v2060 = vpop.f32.mrf.mxu0
        %v2061 = vpop.f32.mrf.mxu0
        %v2062 = vpop.f32.mrf.mxu0
        %2063 = vdwg.mxu0
        %vm2064 = vcmask 64512
        %v2065 = vsel %vm2064, %v2059, -inf
        %2066 = vmax.xlane.f32.xlu0 %v2065
        %v2067 = vpop.xlane.xlu0 %2066
        %v2068 = vsub.f32 %v2059, %v2067
        %v2069 = vmul.f32 %v2068, 1.442695
        %v2070 = vpow.pop %v2069
        %v2071 = vsel %vm2064, %v2070, 0.0
        %2072 = vadd.xlane.f32.xlu0 %v2071
        %v2073 = vpop.xlane.xlu0 %2072
        %v2074 = vrcp.pop %v2073
        %v2075 = vpack.c.bf16 %v2070, %v2070
        %v2077 = vsel %vm2064, %v2075, 0
        %vm2079 = vcmask 1043456
        %v2081 = vsel %vm2079, %v2008, 0
        %2083 = vmatprep.subr.bf16.mxu0 0
        %2084 = vmatpush1.bf16.msra.mxu0 0
        %2085 = vmatprep.subr.bf16.mxu0 0
        %2086 = vmatpush1.bf16.msra.mxu0 0
        %2087 = vmatprep.subr.bf16.mxu0 0
        %2088 = vmatpush1.bf16.msra.mxu0 0
        %2089 = vmatprep.subr.bf16.mxu0 0
        %2090 = vmatpush1.bf16.msra.mxu0 0
        %2091 = vmatprep.subr.bf16.mxu0 0
        %2092 = vmatpush1.bf16.msra.mxu0 0
        %2093 = vmatprep.subr.bf16.mxu0 0
        %2094 = vmatpush1.bf16.msra.mxu0 0
        %2095 = vmatprep.subr.bf16.mxu0 0
        %2096 = vmatpush1.bf16.msra.mxu0 0
        %2097 = vmatprep.subr.bf16.mxu0 0
        %2098 = vmatpush1.bf16.msra.mxu0 %v2081
        %2099 = vmatprep.subr.bf16.mxu0 0
        %2100 = vmatpush2.bf16.msra.mxu0 0
        %2101 = vmatprep.subr.bf16.mxu0 0
        %2102 = vmatpush2.bf16.msra.mxu0 0
        %2103 = vmatprep.subr.bf16.mxu0 0
        %2104 = vmatpush2.bf16.msra.mxu0 0
        %2105 = vmatprep.subr.bf16.mxu0 0
        %2106 = vmatpush2.bf16.msra.mxu0 0
        %2107 = vmatprep.subr.bf16.mxu0 0
        %2108 = vmatpush2.bf16.msra.mxu0 0
        %2109 = vmatprep.subr.bf16.mxu0 0
        %2110 = vmatpush2.bf16.msra.mxu0 0
        %2111 = vmatprep.subr.bf16.mxu0 0
        %2112 = vmatpush2.bf16.msra.mxu0 0
        %2113 = vmatprep.subr.bf16.mxu0 0
        %2114 = vmatpush2.bf16.msra.mxu0 0
        %2115 = vmatprep.mubr.bf16.mxu0 0
        %2116 = vmatmul.mubr.bf16.gmra.mxu0 %v2077
        %v2117 = vpop.f32.mrf.mxu0
        %v2118 = vadd.f32 0.0, %v2117
        %v2119 = vpop.f32.mrf.mxu0
        %v2120 = vpop.f32.mrf.mxu0
        %v2121 = vpop.f32.mrf.mxu0
        %2122 = vdwg.mxu0
        %v2123 = vmul.f32 %v2118, %v2074
        %v2124 = vpack.c.bf16 %v2123, %v2123
        %v2125 = vld [vmem:[#allocation7] sm:$0xff]
        %v2126 = vld [vmem:[#allocation7 + $0x8] sm:$0xf]
        %v2127 = vld [vmem:[#allocation7 + $0xc] sm:$0xff]
        %v2128 = vld [vmem:[#allocation7 + $0x14] sm:$0xf]
        %v2129 = vld [vmem:[#allocation7 + $0x18] sm:$0xff]
        %v2130 = vld [vmem:[#allocation7 + $0x20] sm:$0xf]
        %v2131 = vld [vmem:[#allocation7 + $0x24] sm:$0xff]
        %v2132 = vld [vmem:[#allocation7 + $0x2c] sm:$0xf]
        %v2133 = vld [vmem:[#allocation7 + $0x30] sm:$0xff]
        %v2134 = vld [vmem:[#allocation7 + $0x38] sm:$0xf]
        %v2135 = vld [vmem:[#allocation7 + $0x3c] sm:$0xff]
        %v2136 = vld [vmem:[#allocation7 + $0x44] sm:$0xf]
        %v2137 = vld [vmem:[#allocation7 + $0x48] sm:$0xff]
        %v2138 = vld [vmem:[#allocation7 + $0x50] sm:$0xf]
        %v2139 = vld [vmem:[#allocation7 + $0x54] sm:$0xff]
        %v2140 = vld [vmem:[#allocation7 + $0x5c] sm:$0xf]
        %2142 = vrot.lane.b32.xlu0 %v2002, 64
        %v2143 = vpop.permute.xlu0 %2142
        %2145 = vrot.lane.b32.xlu0 %v2005, 64
        %v2146 = vpop.permute.xlu0 %2145
        %v2148 = vsel %vm2017, %v2143, 0
        %v2151 = vsel %vm2017, %v2146, 0
        %2153 = vmatprep.subr.bf16.mxu0 0
        %2154 = vmatpush1.bf16.xpose.msra.mxu0 0
        %2155 = vmatprep.subr.bf16.mxu0 0
        %2156 = vmatpush1.bf16.xpose.msra.mxu0 0
        %2157 = vmatprep.subr.bf16.mxu0 0
        %2158 = vmatpush1.bf16.xpose.msra.mxu0 0
        %2159 = vmatprep.subr.bf16.mxu0 0
        %2160 = vmatpush1.bf16.xpose.msra.mxu0 0
        %2161 = vmatprep.subr.bf16.mxu0 0
        %2162 = vmatpush1.bf16.xpose.msra.mxu0 0
        %2163 = vmatprep.subr.bf16.mxu0 0
        %2164 = vmatpush1.bf16.xpose.msra.mxu0 0
        %2165 = vmatprep.subr.bf16.mxu0 0
        %2166 = vmatpush1.bf16.xpose.msra.mxu0 0
        %2167 = vmatprep.subr.bf16.mxu0 0
        %2168 = vmatpush1.bf16.xpose.msra.mxu0 %v2151
        %2169 = vmatprep.subr.bf16.mxu0 0
        %2170 = vmatpush2.bf16.xpose.msra.mxu0 0
        %2171 = vmatprep.subr.bf16.mxu0 0
        %2172 = vmatpush2.bf16.xpose.msra.mxu0 0
        %2173 = vmatprep.subr.bf16.mxu0 0
        %2174 = vmatpush2.bf16.xpose.msra.mxu0 0
        %2175 = vmatprep.subr.bf16.mxu0 0
        %2176 = vmatpush2.bf16.xpose.msra.mxu0 0
        %2177 = vmatprep.subr.bf16.mxu0 0
        %2178 = vmatpush2.bf16.xpose.msra.mxu0 0
        %2179 = vmatprep.subr.bf16.mxu0 0
        %2180 = vmatpush2.bf16.xpose.msra.mxu0 0
        %2181 = vmatprep.subr.bf16.mxu0 0
        %2182 = vmatpush2.bf16.xpose.msra.mxu0 0
        %2183 = vmatprep.subr.bf16.mxu0 0
        %2184 = vmatpush2.bf16.xpose.msra.mxu0 0
        %2185 = vmatprep.mubr.bf16.mxu0 0
        %2186 = vmatmul.mubr.bf16.gmra.mxu0 %v2148
        %v2187 = vpop.f32.mrf.mxu0
        %v2188 = vadd.f32 %v2016, %v2187
        %v2189 = vpop.f32.mrf.mxu0
        %v2190 = vpop.f32.mrf.mxu0
        %v2191 = vpop.f32.mrf.mxu0
        %2192 = vdwg.mxu0
        %v2193 = vsel %vm2064, %v2188, -inf
        %2194 = vmax.xlane.f32.xlu0 %v2193
        %v2195 = vpop.xlane.xlu0 %2194
        %v2196 = vsub.f32 %v2188, %v2195
        %v2197 = vmul.f32 %v2196, 1.442695
        %v2198 = vpow.pop %v2197
        %v2199 = vsel %vm2064, %v2198, 0.0
        %2200 = vadd.xlane.f32.xlu0 %v2199
        %v2201 = vpop.xlane.xlu0 %2200
        %v2202 = vrcp.pop %v2201
        %v2203 = vpack.c.bf16 %v2198, %v2198
        %2205 = vrot.lane.b32.xlu0 %v2008, 64
        %v2206 = vpop.permute.xlu0 %2205
        %v2208 = vsel %vm2064, %v2203, 0
        %v2211 = vsel %vm2079, %v2206, 0
        %2213 = vmatprep.subr.bf16.mxu0 0
        %2214 = vmatpush1.bf16.msra.mxu0 0
        %2215 = vmatprep.subr.bf16.mxu0 0
        %2216 = vmatpush1.bf16.msra.mxu0 0
        %2217 = vmatprep.subr.bf16.mxu0 0
        %2218 = vmatpush1.bf16.msra.mxu0 0
        %2219 = vmatprep.subr.bf16.mxu0 0
        %2220 = vmatpush1.bf16.msra.mxu0 0
        %2221 = vmatprep.subr.bf16.mxu0 0
        %2222 = vmatpush1.bf16.msra.mxu0 0
        %2223 = vmatprep.subr.bf16.mxu0 0
        %2224 = vmatpush1.bf16.msra.mxu0 0
        %2225 = vmatprep.subr.bf16.mxu0 0
        %2226 = vmatpush1.bf16.msra.mxu0 0
        %2227 = vmatprep.subr.bf16.mxu0 0
        %2228 = vmatpush1.bf16.msra.mxu0 %v2211
        %2229 = vmatprep.subr.bf16.mxu0 0
        %2230 = vmatpush2.bf16.msra.mxu0 0
        %2231 = vmatprep.subr.bf16.mxu0 0
        %2232 = vmatpush2.bf16.msra.mxu0 0
        %2233 = vmatprep.subr.bf16.mxu0 0
        %2234 = vmatpush2.bf16.msra.mxu0 0
        %2235 = vmatprep.subr.bf16.mxu0 0
        %2236 = vmatpush2.bf16.msra.mxu0 0
        %2237 = vmatprep.subr.bf16.mxu0 0
        %2238 = vmatpush2.bf16.msra.mxu0 0
        %2239 = vmatprep.subr.bf16.mxu0 0
        %2240 = vmatpush2.bf16.msra.mxu0 0
        %2241 = vmatprep.subr.bf16.mxu0 0
        %2242 = vmatpush2.bf16.msra.mxu0 0
        %2243 = vmatprep.subr.bf16.mxu0 0
        %2244 = vmatpush2.bf16.msra.mxu0 0
        %2245 = vmatprep.mubr.bf16.mxu0 0
        %2246 = vmatmul.mubr.bf16.gmra.mxu0 %v2208
        %v2247 = vpop.f32.mrf.mxu0
        %v2248 = vadd.f32 0.0, %v2247
        %v2249 = vpop.f32.mrf.mxu0
        %v2250 = vpop.f32.mrf.mxu0
        %v2251 = vpop.f32.mrf.mxu0
        %2252 = vdwg.mxu0
        %v2253 = vmul.f32 %v2248, %v2202
        %v2254 = vpack.c.bf16 %v2253, %v2253
        %v2255 = vld [vmem:[#allocation7 + $0x60] sm:$0xff]
        %v2256 = vld [vmem:[#allocation7 + $0x68] sm:$0xf]
        %v2257 = vld [vmem:[#allocation7 + $0x6c] sm:$0xff]
        %v2258 = vld [vmem:[#allocation7 + $0x74] sm:$0xf]
        %v2259 = vld [vmem:[#allocation7 + $0x78] sm:$0xff]
        %v2260 = vld [vmem:[#allocation7 + $0x80] sm:$0xf]
        %v2261 = vld [vmem:[#allocation7 + $0x84] sm:$0xff]
        %v2262 = vld [vmem:[#allocation7 + $0x8c] sm:$0xf]
        %v2263 = vld [vmem:[#allocation7 + $0x90] sm:$0xff]
        %v2264 = vld [vmem:[#allocation7 + $0x98] sm:$0xf]
        %v2265 = vld [vmem:[#allocation7 + $0x9c] sm:$0xff]
        %v2266 = vld [vmem:[#allocation7 + $0xa4] sm:$0xf]
        %v2267 = vld [vmem:[#allocation7 + $0xa8] sm:$0xff]
        %v2268 = vld [vmem:[#allocation7 + $0xb0] sm:$0xf]
        %v2269 = vld [vmem:[#allocation7 + $0xb4] sm:$0xff]
        %v2270 = vld [vmem:[#allocation7 + $0xbc] sm:$0xf]
        %v2287 = vunpack.c.l.b16 %v2255
        %v2288 = vunpack.c.h.b16 %v2255
        %v2289 = vunpack.c.l.b16 %v2256
        %v2290 = vunpack.c.l.b16 %v2257
        %v2291 = vunpack.c.h.b16 %v2257
        %v2292 = vunpack.c.l.b16 %v2258
        %v2293 = vunpack.c.l.b16 %v2259
        %v2294 = vunpack.c.h.b16 %v2259
        %v2295 = vunpack.c.l.b16 %v2260
        %v2296 = vunpack.c.l.b16 %v2261
        %v2297 = vunpack.c.h.b16 %v2261
        %v2298 = vunpack.c.l.b16 %v2262
        %v2299 = vunpack.c.l.b16 %v2263
        %v2300 = vunpack.c.h.b16 %v2263
        %v2301 = vunpack.c.l.b16 %v2264
        %v2302 = vunpack.c.l.b16 %v2265
        %v2303 = vunpack.c.h.b16 %v2265
        %v2304 = vunpack.c.l.b16 %v2266
        %v2305 = vunpack.c.l.b16 %v2267
        %v2306 = vunpack.c.h.b16 %v2267
        %v2307 = vunpack.c.l.b16 %v2268
        %v2308 = vunpack.c.l.b16 %v2269
        %v2309 = vunpack.c.h.b16 %v2269
        %v2310 = vunpack.c.l.b16 %v2270
        %v2311 = vpack.c.b16 %v2290, %v2287
        %v2312 = vpack.c.b16 %v2291, %v2288
        %v2313 = vpack.c.b16 %v2292, %v2289
        %v2314 = vpack.c.b16 %v2296, %v2293
        %v2315 = vpack.c.b16 %v2297, %v2294
        %v2316 = vpack.c.b16 %v2298, %v2295
        %v2317 = vpack.c.b16 %v2302, %v2299
        %v2318 = vpack.c.b16 %v2303, %v2300
        %v2319 = vpack.c.b16 %v2304, %v2301
        %v2320 = vpack.c.b16 %v2308, %v2305
        %v2321 = vpack.c.b16 %v2309, %v2306
        %v2322 = vpack.c.b16 %v2310, %v2307
        %v2336 = vsel %vm2017, %v2254, 0
        %2338 = vmatprep.subr.bf16.mxu0 0
        %2339 = vmatpush1.bf16.msra.mxu0 0
        %2340 = vmatprep.subr.bf16.mxu0 0
        %2341 = vmatpush1.bf16.msra.mxu0 0
        %2342 = vmatprep.subr.bf16.mxu0 0
        %2343 = vmatpush1.bf16.msra.mxu0 0
        %2344 = vmatprep.subr.bf16.mxu0 0
        %2345 = vmatpush1.bf16.msra.mxu0 0
        %2346 = vmatprep.subr.bf16.mxu0 %v2321
        %2347 = vmatpush1.bf16.msra.mxu0 %v2320
        %2348 = vmatprep.subr.bf16.mxu0 %v2318
        %2349 = vmatpush1.bf16.msra.mxu0 %v2317
        %2350 = vmatprep.subr.bf16.mxu0 %v2315
        %2351 = vmatpush1.bf16.msra.mxu0 %v2314
        %2352 = vmatprep.subr.bf16.mxu0 %v2312
        %2353 = vmatpush1.bf16.msra.mxu0 %v2311
        %2354 = vmatprep.subr.bf16.mxu0 0
        %2355 = vmatpush2.bf16.msra.mxu0 0
        %2356 = vmatprep.subr.bf16.mxu0 0
        %2357 = vmatpush2.bf16.msra.mxu0 0
        %2358 = vmatprep.subr.bf16.mxu0 0
        %2359 = vmatpush2.bf16.msra.mxu0 0
        %2360 = vmatprep.subr.bf16.mxu0 0
        %2361 = vmatpush2.bf16.msra.mxu0 0
        %2362 = vmatprep.subr.bf16.mxu0 0
        %2363 = vmatpush2.bf16.msra.mxu0 0
        %2364 = vmatprep.subr.bf16.mxu0 0
        %2365 = vmatpush2.bf16.msra.mxu0 0
        %2366 = vmatprep.subr.bf16.mxu0 0
        %2367 = vmatpush2.bf16.msra.mxu0 0
        %2368 = vmatprep.subr.bf16.mxu0 0
        %2369 = vmatpush2.bf16.msra.mxu0 0
        %2370 = vmatprep.mubr.bf16.mxu0 0
        %2371 = vmatmul.mubr.bf16.gmra.mxu0 %v2336
        %v2372 = vpop.f32.mrf.mxu0
        %v2373 = vadd.f32 0.0, %v2372
        %v2374 = vpop.f32.mrf.mxu0
        %v2375 = vadd.f32 0.0, %v2374
        %v2376 = vpop.f32.mrf.mxu0
        %v2377 = vpop.f32.mrf.mxu0
        %2378 = vdwg.mxu0
        %2379 = vmatprep.subr.bf16.mxu0 0
        %2380 = vmatpush1.bf16.msra.mxu0 0
        %2381 = vmatprep.subr.bf16.mxu0 0
        %2382 = vmatpush1.bf16.msra.mxu0 0
        %2383 = vmatprep.subr.bf16.mxu0 0
        %2384 = vmatpush1.bf16.msra.mxu0 0
        %2385 = vmatprep.subr.bf16.mxu0 0
        %2386 = vmatpush1.bf16.msra.mxu0 0
        %2387 = vmatprep.subr.bf16.mxu0 0
        %2388 = vmatpush1.bf16.msra.mxu0 %v2322
        %2389 = vmatprep.subr.bf16.mxu0 0
        %2390 = vmatpush1.bf16.msra.mxu0 %v2319
        %2391 = vmatprep.subr.bf16.mxu0 0
        %2392 = vmatpush1.bf16.msra.mxu0 %v2316
        %2393 = vmatprep.subr.bf16.mxu0 0
        %2394 = vmatpush1.bf16.msra.mxu0 %v2313
        %2395 = vmatprep.subr.bf16.mxu0 0
        %2396 = vmatpush2.bf16.msra.mxu0 0
        %2397 = vmatprep.subr.bf16.mxu0 0
        %2398 = vmatpush2.bf16.msra.mxu0 0
        %2399 = vmatprep.subr.bf16.mxu0 0
        %2400 = vmatpush2.bf16.msra.mxu0 0
        %2401 = vmatprep.subr.bf16.mxu0 0
        %2402 = vmatpush2.bf16.msra.mxu0 0
        %2403 = vmatprep.subr.bf16.mxu0 0
        %2404 = vmatpush2.bf16.msra.mxu0 0
        %2405 = vmatprep.subr.bf16.mxu0 0
        %2406 = vmatpush2.bf16.msra.mxu0 0
        %2407 = vmatprep.subr.bf16.mxu0 0
        %2408 = vmatpush2.bf16.msra.mxu0 0
        %2409 = vmatprep.subr.bf16.mxu0 0
        %2410 = vmatpush2.bf16.msra.mxu0 0
        %2411 = vmatprep.mubr.bf16.mxu0 0
        %2412 = vmatmul.mubr.bf16.gmra.mxu0 %v2336
        %v2413 = vpop.f32.mrf.mxu0
        %v2414 = vadd.f32 0.0, %v2413
        %v2415 = vpop.f32.mrf.mxu0
        %v2416 = vpop.f32.mrf.mxu0
        %v2417 = vpop.f32.mrf.mxu0
        %2418 = vdwg.mxu0
        %v2435 = vunpack.c.l.b16 %v2125
        %v2436 = vunpack.c.h.b16 %v2125
        %v2437 = vunpack.c.l.b16 %v2126
        %v2438 = vunpack.c.l.b16 %v2127
        %v2439 = vunpack.c.h.b16 %v2127
        %v2440 = vunpack.c.l.b16 %v2128
        %v2441 = vunpack.c.l.b16 %v2129
        %v2442 = vunpack.c.h.b16 %v2129
        %v2443 = vunpack.c.l.b16 %v2130
        %v2444 = vunpack.c.l.b16 %v2131
        %v2445 = vunpack.c.h.b16 %v2131
        %v2446 = vunpack.c.l.b16 %v2132
        %v2447 = vunpack.c.l.b16 %v2133
        %v2448 = vunpack.c.h.b16 %v2133
        %v2449 = vunpack.c.l.b16 %v2134
        %v2450 = vunpack.c.l.b16 %v2135
        %v2451 = vunpack.c.h.b16 %v2135
        %v2452 = vunpack.c.l.b16 %v2136
        %v2453 = vunpack.c.l.b16 %v2137
        %v2454 = vunpack.c.h.b16 %v2137
        %v2455 = vunpack.c.l.b16 %v2138
        %v2456 = vunpack.c.l.b16 %v2139
        %v2457 = vunpack.c.h.b16 %v2139
        %v2458 = vunpack.c.l.b16 %v2140
        %v2459 = vpack.c.b16 %v2438, %v2435
        %v2460 = vpack.c.b16 %v2439, %v2436
        %v2461 = vpack.c.b16 %v2440, %v2437
        %v2462 = vpack.c.b16 %v2444, %v2441
        %v2463 = vpack.c.b16 %v2445, %v2442
        %v2464 = vpack.c.b16 %v2446, %v2443
        %v2465 = vpack.c.b16 %v2450, %v2447
        %v2466 = vpack.c.b16 %v2451, %v2448
        %v2467 = vpack.c.b16 %v2452, %v2449
        %v2468 = vpack.c.b16 %v2456, %v2453
        %v2469 = vpack.c.b16 %v2457, %v2454
        %v2470 = vpack.c.b16 %v2458, %v2455
        %v2484 = vsel %vm2017, %v2124, 0
        %2486 = vmatprep.subr.bf16.mxu0 0
        %2487 = vmatpush1.bf16.msra.mxu0 0
        %2488 = vmatprep.subr.bf16.mxu0 0
        %2489 = vmatpush1.bf16.msra.mxu0 0
        %2490 = vmatprep.subr.bf16.mxu0 0
        %2491 = vmatpush1.bf16.msra.mxu0 0
        %2492 = vmatprep.subr.bf16.mxu0 0
        %2493 = vmatpush1.bf16.msra.mxu0 0
        %2494 = vmatprep.subr.bf16.mxu0 %v2469
        %2495 = vmatpush1.bf16.msra.mxu0 %v2468
        %2496 = vmatprep.subr.bf16.mxu0 %v2466
        %2497 = vmatpush1.bf16.msra.mxu0 %v2465
        %2498 = vmatprep.subr.bf16.mxu0 %v2463
        %2499 = vmatpush1.bf16.msra.mxu0 %v2462
        %2500 = vmatprep.subr.bf16.mxu0 %v2460
        %2501 = vmatpush1.bf16.msra.mxu0 %v2459
        %2502 = vmatprep.subr.bf16.mxu0 0
        %2503 = vmatpush2.bf16.msra.mxu0 0
        %2504 = vmatprep.subr.bf16.mxu0 0
        %2505 = vmatpush2.bf16.msra.mxu0 0
        %2506 = vmatprep.subr.bf16.mxu0 0
        %2507 = vmatpush2.bf16.msra.mxu0 0
        %2508 = vmatprep.subr.bf16.mxu0 0
        %2509 = vmatpush2.bf16.msra.mxu0 0
        %2510 = vmatprep.subr.bf16.mxu0 0
        %2511 = vmatpush2.bf16.msra.mxu0 0
        %2512 = vmatprep.subr.bf16.mxu0 0
        %2513 = vmatpush2.bf16.msra.mxu0 0
        %2514 = vmatprep.subr.bf16.mxu0 0
        %2515 = vmatpush2.bf16.msra.mxu0 0
        %2516 = vmatprep.subr.bf16.mxu0 0
        %2517 = vmatpush2.bf16.msra.mxu0 0
        %2518 = vmatprep.mubr.bf16.mxu0 0
        %2519 = vmatmul.mubr.bf16.gmra.mxu0 %v2484
        %v2520 = vpop.f32.mrf.mxu0
        %v2521 = vadd.f32 %v2373, %v2520
        %v2522 = vpop.f32.mrf.mxu0
        %v2523 = vadd.f32 %v2375, %v2522
        %v2524 = vpop.f32.mrf.mxu0
        %v2525 = vpop.f32.mrf.mxu0
        %2526 = vdwg.mxu0
        %2527 = vmatprep.subr.bf16.mxu0 0
        %2528 = vmatpush1.bf16.msra.mxu0 0
        %2529 = vmatprep.subr.bf16.mxu0 0
        %2530 = vmatpush1.bf16.msra.mxu0 0
        %2531 = vmatprep.subr.bf16.mxu0 0
        %2532 = vmatpush1.bf16.msra.mxu0 0
        %2533 = vmatprep.subr.bf16.mxu0 0
        %2534 = vmatpush1.bf16.msra.mxu0 0
        %2535 = vmatprep.subr.bf16.mxu0 0
        %2536 = vmatpush1.bf16.msra.mxu0 %v2470
        %2537 = vmatprep.subr.bf16.mxu0 0
        %2538 = vmatpush1.bf16.msra.mxu0 %v2467
        %2539 = vmatprep.subr.bf16.mxu0 0
        %2540 = vmatpush1.bf16.msra.mxu0 %v2464
        %2541 = vmatprep.subr.bf16.mxu0 0
        %2542 = vmatpush1.bf16.msra.mxu0 %v2461
        %2543 = vmatprep.subr.bf16.mxu0 0
        %2544 = vmatpush2.bf16.msra.mxu0 0
        %2545 = vmatprep.subr.bf16.mxu0 0
        %2546 = vmatpush2.bf16.msra.mxu0 0
        %2547 = vmatprep.subr.bf16.mxu0 0
        %2548 = vmatpush2.bf16.msra.mxu0 0
        %2549 = vmatprep.subr.bf16.mxu0 0
        %2550 = vmatpush2.bf16.msra.mxu0 0
        %2551 = vmatprep.subr.bf16.mxu0 0
        %2552 = vmatpush2.bf16.msra.mxu0 0
        %2553 = vmatprep.subr.bf16.mxu0 0
        %2554 = vmatpush2.bf16.msra.mxu0 0
        %2555 = vmatprep.subr.bf16.mxu0 0
        %2556 = vmatpush2.bf16.msra.mxu0 0
        %2557 = vmatprep.subr.bf16.mxu0 0
        %2558 = vmatpush2.bf16.msra.mxu0 0
        %2559 = vmatprep.mubr.bf16.mxu0 0
        %2560 = vmatmul.mubr.bf16.gmra.mxu0 %v2484
        %v2561 = vpop.f32.mrf.mxu0
        %v2562 = vadd.f32 %v2414, %v2561
        %v2563 = vpop.f32.mrf.mxu0
        %v2564 = vpop.f32.mrf.mxu0
        %v2565 = vpop.f32.mrf.mxu0
        %2566 = vdwg.mxu0
        %v2568 = vsel %vm2017, %v2003, 0
        %v2571 = vsel %vm2017, %v2006, 0
        %2573 = vmatprep.subr.bf16.mxu0 0
        %2574 = vmatpush1.bf16.xpose.msra.mxu0 0
        %2575 = vmatprep.subr.bf16.mxu0 0
        %2576 = vmatpush1.bf16.xpose.msra.mxu0 0
        %2577 = vmatprep.subr.bf16.mxu0 0
        %2578 = vmatpush1.bf16.xpose.msra.mxu0 0
        %2579 = vmatprep.subr.bf16.mxu0 0
        %2580 = vmatpush1.bf16.xpose.msra.mxu0 0
        %2581 = vmatprep.subr.bf16.mxu0 0
        %2582 = vmatpush1.bf16.xpose.msra.mxu0 0
        %2583 = vmatprep.subr.bf16.mxu0 0
        %2584 = vmatpush1.bf16.xpose.msra.mxu0 0
        %2585 = vmatprep.subr.bf16.mxu0 0
        %2586 = vmatpush1.bf16.xpose.msra.mxu0 0
        %2587 = vmatprep.subr.bf16.mxu0 0
        %2588 = vmatpush1.bf16.xpose.msra.mxu0 %v2571
        %2589 = vmatprep.subr.bf16.mxu0 0
        %2590 = vmatpush2.bf16.xpose.msra.mxu0 0
        %2591 = vmatprep.subr.bf16.mxu0 0
        %2592 = vmatpush2.bf16.xpose.msra.mxu0 0
        %2593 = vmatprep.subr.bf16.mxu0 0
        %2594 = vmatpush2.bf16.xpose.msra.mxu0 0
        %2595 = vmatprep.subr.bf16.mxu0 0
        %2596 = vmatpush2.bf16.xpose.msra.mxu0 0
        %2597 = vmatprep.subr.bf16.mxu0 0
        %2598 = vmatpush2.bf16.xpose.msra.mxu0 0
        %2599 = vmatprep.subr.bf16.mxu0 0
        %2600 = vmatpush2.bf16.xpose.msra.mxu0 0
        %2601 = vmatprep.subr.bf16.mxu0 0
        %2602 = vmatpush2.bf16.xpose.msra.mxu0 0
        %2603 = vmatprep.subr.bf16.mxu0 0
        %2604 = vmatpush2.bf16.xpose.msra.mxu0 0
        %2605 = vmatprep.mubr.bf16.mxu0 0
        %2606 = vmatmul.mubr.bf16.gmra.mxu0 %v2568
        %v2607 = vpop.f32.mrf.mxu0
        %v2608 = vadd.f32 %v2016, %v2607
        %v2609 = vpop.f32.mrf.mxu0
        %v2610 = vpop.f32.mrf.mxu0
        %v2611 = vpop.f32.mrf.mxu0
        %2612 = vdwg.mxu0
        %v2613 = vsel %vm2064, %v2608, -inf
        %2614 = vmax.xlane.f32.xlu0 %v2613
        %v2615 = vpop.xlane.xlu0 %2614
        %v2616 = vsub.f32 %v2608, %v2615
        %v2617 = vmul.f32 %v2616, 1.442695
        %v2618 = vpow.pop %v2617
        %v2619 = vsel %vm2064, %v2618, 0.0
        %2620 = vadd.xlane.f32.xlu0 %v2619
        %v2621 = vpop.xlane.xlu0 %2620
        %v2622 = vrcp.pop %v2621
        %v2623 = vpack.c.bf16 %v2618, %v2618
        %v2625 = vsel %vm2064, %v2623, 0
        %v2628 = vsel %vm2079, %v2009, 0
        %2630 = vmatprep.subr.bf16.mxu0 0
        %2631 = vmatpush1.bf16.msra.mxu0 0
        %2632 = vmatprep.subr.bf16.mxu0 0
        %2633 = vmatpush1.bf16.msra.mxu0 0
        %2634 = vmatprep.subr.bf16.mxu0 0
        %2635 = vmatpush1.bf16.msra.mxu0 0
        %2636 = vmatprep.subr.bf16.mxu0 0
        %2637 = vmatpush1.bf16.msra.mxu0 0
        %2638 = vmatprep.subr.bf16.mxu0 0
        %2639 = vmatpush1.bf16.msra.mxu0 0
        %2640 = vmatprep.subr.bf16.mxu0 0
        %2641 = vmatpush1.bf16.msra.mxu0 0
        %2642 = vmatprep.subr.bf16.mxu0 0
        %2643 = vmatpush1.bf16.msra.mxu0 0
        %2644 = vmatprep.subr.bf16.mxu0 0
        %2645 = vmatpush1.bf16.msra.mxu0 %v2628
        %2646 = vmatprep.subr.bf16.mxu0 0
        %2647 = vmatpush2.bf16.msra.mxu0 0
        %2648 = vmatprep.subr.bf16.mxu0 0
        %2649 = vmatpush2.bf16.msra.mxu0 0
        %2650 = vmatprep.subr.bf16.mxu0 0
        %2651 = vmatpush2.bf16.msra.mxu0 0
        %2652 = vmatprep.subr.bf16.mxu0 0
        %2653 = vmatpush2.bf16.msra.mxu0 0
        %2654 = vmatprep.subr.bf16.mxu0 0
        %2655 = vmatpush2.bf16.msra.mxu0 0
        %2656 = vmatprep.subr.bf16.mxu0 0
        %2657 = vmatpush2.bf16.msra.mxu0 0
        %2658 = vmatprep.subr.bf16.mxu0 0
        %2659 = vmatpush2.bf16.msra.mxu0 0
        %2660 = vmatprep.subr.bf16.mxu0 0
        %2661 = vmatpush2.bf16.msra.mxu0 0
        %2662 = vmatprep.mubr.bf16.mxu0 0
        %2663 = vmatmul.mubr.bf16.gmra.mxu0 %v2625
        %v2664 = vpop.f32.mrf.mxu0
        %v2665 = vadd.f32 0.0, %v2664
        %v2666 = vpop.f32.mrf.mxu0
        %v2667 = vpop.f32.mrf.mxu0
        %v2668 = vpop.f32.mrf.mxu0
        %2669 = vdwg.mxu0
        %v2670 = vmul.f32 %v2665, %v2622
        %v2671 = vpack.c.bf16 %v2670, %v2670
        %v2672 = vld [vmem:[#allocation7 + $0xc0] sm:$0xff]
        %v2673 = vld [vmem:[#allocation7 + $0xc8] sm:$0xf]
        %v2674 = vld [vmem:[#allocation7 + $0xcc] sm:$0xff]
        %v2675 = vld [vmem:[#allocation7 + $0xd4] sm:$0xf]
        %v2676 = vld [vmem:[#allocation7 + $0xd8] sm:$0xff]
        %v2677 = vld [vmem:[#allocation7 + $0xe0] sm:$0xf]
        %v2678 = vld [vmem:[#allocation7 + $0xe4] sm:$0xff]
        %v2679 = vld [vmem:[#allocation7 + $0xec] sm:$0xf]
        %v2680 = vld [vmem:[#allocation7 + $0xf0] sm:$0xff]
        %v2681 = vld [vmem:[#allocation7 + $0xf8] sm:$0xf]
        %v2682 = vld [vmem:[#allocation7 + $0xfc] sm:$0xff]
        %v2683 = vld [vmem:[#allocation7 + $0x104] sm:$0xf]
        %v2684 = vld [vmem:[#allocation7 + $0x108] sm:$0xff]
        %v2685 = vld [vmem:[#allocation7 + $0x110] sm:$0xf]
        %v2686 = vld [vmem:[#allocation7 + $0x114] sm:$0xff]
        %v2687 = vld [vmem:[#allocation7 + $0x11c] sm:$0xf]
        %v2704 = vunpack.c.l.b16 %v2672
        %v2705 = vunpack.c.h.b16 %v2672
        %v2706 = vunpack.c.l.b16 %v2673
        %v2707 = vunpack.c.l.b16 %v2674
        %v2708 = vunpack.c.h.b16 %v2674
        %v2709 = vunpack.c.l.b16 %v2675
        %v2710 = vunpack.c.l.b16 %v2676
        %v2711 = vunpack.c.h.b16 %v2676
        %v2712 = vunpack.c.l.b16 %v2677
        %v2713 = vunpack.c.l.b16 %v2678
        %v2714 = vunpack.c.h.b16 %v2678
        %v2715 = vunpack.c.l.b16 %v2679
        %v2716 = vunpack.c.l.b16 %v2680
        %v2717 = vunpack.c.h.b16 %v2680
        %v2718 = vunpack.c.l.b16 %v2681
        %v2719 = vunpack.c.l.b16 %v2682
        %v2720 = vunpack.c.h.b16 %v2682
        %v2721 = vunpack.c.l.b16 %v2683
        %v2722 = vunpack.c.l.b16 %v2684
        %v2723 = vunpack.c.h.b16 %v2684
        %v2724 = vunpack.c.l.b16 %v2685
        %v2725 = vunpack.c.l.b16 %v2686
        %v2726 = vunpack.c.h.b16 %v2686
        %v2727 = vunpack.c.l.b16 %v2687
        %v2728 = vpack.c.b16 %v2707, %v2704
        %v2729 = vpack.c.b16 %v2708, %v2705
        %v2730 = vpack.c.b16 %v2709, %v2706
        %v2731 = vpack.c.b16 %v2713, %v2710
        %v2732 = vpack.c.b16 %v2714, %v2711
        %v2733 = vpack.c.b16 %v2715, %v2712
        %v2734 = vpack.c.b16 %v2719, %v2716
        %v2735 = vpack.c.b16 %v2720, %v2717
        %v2736 = vpack.c.b16 %v2721, %v2718
        %v2737 = vpack.c.b16 %v2725, %v2722
        %v2738 = vpack.c.b16 %v2726, %v2723
        %v2739 = vpack.c.b16 %v2727, %v2724
        %v2753 = vsel %vm2017, %v2671, 0
        %2755 = vmatprep.subr.bf16.mxu0 0
        %2756 = vmatpush1.bf16.msra.mxu0 0
        %2757 = vmatprep.subr.bf16.mxu0 0
        %2758 = vmatpush1.bf16.msra.mxu0 0
        %2759 = vmatprep.subr.bf16.mxu0 0
        %2760 = vmatpush1.bf16.msra.mxu0 0
        %2761 = vmatprep.subr.bf16.mxu0 0
        %2762 = vmatpush1.bf16.msra.mxu0 0
        %2763 = vmatprep.subr.bf16.mxu0 %v2738
        %2764 = vmatpush1.bf16.msra.mxu0 %v2737
        %2765 = vmatprep.subr.bf16.mxu0 %v2735
        %2766 = vmatpush1.bf16.msra.mxu0 %v2734
        %2767 = vmatprep.subr.bf16.mxu0 %v2732
        %2768 = vmatpush1.bf16.msra.mxu0 %v2731
        %2769 = vmatprep.subr.bf16.mxu0 %v2729
        %2770 = vmatpush1.bf16.msra.mxu0 %v2728
        %2771 = vmatprep.subr.bf16.mxu0 0
        %2772 = vmatpush2.bf16.msra.mxu0 0
        %2773 = vmatprep.subr.bf16.mxu0 0
        %2774 = vmatpush2.bf16.msra.mxu0 0
        %2775 = vmatprep.subr.bf16.mxu0 0
        %2776 = vmatpush2.bf16.msra.mxu0 0
        %2777 = vmatprep.subr.bf16.mxu0 0
        %2778 = vmatpush2.bf16.msra.mxu0 0
        %2779 = vmatprep.subr.bf16.mxu0 0
        %2780 = vmatpush2.bf16.msra.mxu0 0
        %2781 = vmatprep.subr.bf16.mxu0 0
        %2782 = vmatpush2.bf16.msra.mxu0 0
        %2783 = vmatprep.subr.bf16.mxu0 0
        %2784 = vmatpush2.bf16.msra.mxu0 0
        %2785 = vmatprep.subr.bf16.mxu0 0
        %2786 = vmatpush2.bf16.msra.mxu0 0
        %2787 = vmatprep.mubr.bf16.mxu0 0
        %2788 = vmatmul.mubr.bf16.gmra.mxu0 %v2753
        %v2789 = vpop.f32.mrf.mxu0
        %v2790 = vadd.f32 0.0, %v2789
        %v2791 = vpop.f32.mrf.mxu0
        %v2792 = vadd.f32 0.0, %v2791
        %v2793 = vpop.f32.mrf.mxu0
        %v2794 = vpop.f32.mrf.mxu0
        %2795 = vdwg.mxu0
        %2796 = vmatprep.subr.bf16.mxu0 0
        %2797 = vmatpush1.bf16.msra.mxu0 0
        %2798 = vmatprep.subr.bf16.mxu0 0
        %2799 = vmatpush1.bf16.msra.mxu0 0
        %2800 = vmatprep.subr.bf16.mxu0 0
        %2801 = vmatpush1.bf16.msra.mxu0 0
        %2802 = vmatprep.subr.bf16.mxu0 0
        %2803 = vmatpush1.bf16.msra.mxu0 0
        %2804 = vmatprep.subr.bf16.mxu0 0
        %2805 = vmatpush1.bf16.msra.mxu0 %v2739
        %2806 = vmatprep.subr.bf16.mxu0 0
        %2807 = vmatpush1.bf16.msra.mxu0 %v2736
        %2808 = vmatprep.subr.bf16.mxu0 0
        %2809 = vmatpush1.bf16.msra.mxu0 %v2733
        %2810 = vmatprep.subr.bf16.mxu0 0
        %2811 = vmatpush1.bf16.msra.mxu0 %v2730
        %2812 = vmatprep.subr.bf16.mxu0 0
        %2813 = vmatpush2.bf16.msra.mxu0 0
        %2814 = vmatprep.subr.bf16.mxu0 0
        %2815 = vmatpush2.bf16.msra.mxu0 0
        %2816 = vmatprep.subr.bf16.mxu0 0
        %2817 = vmatpush2.bf16.msra.mxu0 0
        %2818 = vmatprep.subr.bf16.mxu0 0
        %2819 = vmatpush2.bf16.msra.mxu0 0
        %2820 = vmatprep.subr.bf16.mxu0 0
        %2821 = vmatpush2.bf16.msra.mxu0 0
        %2822 = vmatprep.subr.bf16.mxu0 0
        %2823 = vmatpush2.bf16.msra.mxu0 0
        %2824 = vmatprep.subr.bf16.mxu0 0
        %2825 = vmatpush2.bf16.msra.mxu0 0
        %2826 = vmatprep.subr.bf16.mxu0 0
        %2827 = vmatpush2.bf16.msra.mxu0 0
        %2828 = vmatprep.mubr.bf16.mxu0 0
        %2829 = vmatmul.mubr.bf16.gmra.mxu0 %v2753
        %v2830 = vpop.f32.mrf.mxu0
        %v2831 = vadd.f32 0.0, %v2830
        %v2832 = vpop.f32.mrf.mxu0
        %v2833 = vpop.f32.mrf.mxu0
        %v2834 = vpop.f32.mrf.mxu0
        %2835 = vdwg.mxu0
        %v2836 = vadd.f32 %v2521, %v2790
        %v2837 = vadd.f32 %v2523, %v2792
        %v2838 = vadd.f32 %v2562, %v2831
        %2840 = vrot.lane.b32.xlu0 %v2003, 64
        %v2841 = vpop.permute.xlu0 %2840
        %2843 = vrot.lane.b32.xlu0 %v2006, 64
        %v2844 = vpop.permute.xlu0 %2843
        %v2846 = vsel %vm2017, %v2841, 0
        %v2849 = vsel %vm2017, %v2844, 0
        %2851 = vmatprep.subr.bf16.mxu0 0
        %2852 = vmatpush1.bf16.xpose.msra.mxu0 0
        %2853 = vmatprep.subr.bf16.mxu0 0
        %2854 = vmatpush1.bf16.xpose.msra.mxu0 0
        %2855 = vmatprep.subr.bf16.mxu0 0
        %2856 = vmatpush1.bf16.xpose.msra.mxu0 0
        %2857 = vmatprep.subr.bf16.mxu0 0
        %2858 = vmatpush1.bf16.xpose.msra.mxu0 0
        %2859 = vmatprep.subr.bf16.mxu0 0
        %2860 = vmatpush1.bf16.xpose.msra.mxu0 0
        %2861 = vmatprep.subr.bf16.mxu0 0
        %2862 = vmatpush1.bf16.xpose.msra.mxu0 0
        %2863 = vmatprep.subr.bf16.mxu0 0
        %2864 = vmatpush1.bf16.xpose.msra.mxu0 0
        %2865 = vmatprep.subr.bf16.mxu0 0
        %2866 = vmatpush1.bf16.xpose.msra.mxu0 %v2849
        %2867 = vmatprep.subr.bf16.mxu0 0
        %2868 = vmatpush2.bf16.xpose.msra.mxu0 0
        %2869 = vmatprep.subr.bf16.mxu0 0
        %2870 = vmatpush2.bf16.xpose.msra.mxu0 0
        %2871 = vmatprep.subr.bf16.mxu0 0
        %2872 = vmatpush2.bf16.xpose.msra.mxu0 0
        %2873 = vmatprep.subr.bf16.mxu0 0
        %2874 = vmatpush2.bf16.xpose.msra.mxu0 0
        %2875 = vmatprep.subr.bf16.mxu0 0
        %2876 = vmatpush2.bf16.xpose.msra.mxu0 0
        %2877 = vmatprep.subr.bf16.mxu0 0
        %2878 = vmatpush2.bf16.xpose.msra.mxu0 0
        %2879 = vmatprep.subr.bf16.mxu0 0
        %2880 = vmatpush2.bf16.xpose.msra.mxu0 0
        %2881 = vmatprep.subr.bf16.mxu0 0
        %2882 = vmatpush2.bf16.xpose.msra.mxu0 0
        %2883 = vmatprep.mubr.bf16.mxu0 0
        %2884 = vmatmul.mubr.bf16.gmra.mxu0 %v2846
        %v2885 = vpop.f32.mrf.mxu0
        %v2886 = vadd.f32 %v2016, %v2885
        %v2887 = vpop.f32.mrf.mxu0
        %v2888 = vpop.f32.mrf.mxu0
        %v2889 = vpop.f32.mrf.mxu0
        %2890 = vdwg.mxu0
        %v2891 = vsel %vm2064, %v2886, -inf
        %2892 = vmax.xlane.f32.xlu0 %v2891
        %v2893 = vpop.xlane.xlu0 %2892
        %v2894 = vsub.f32 %v2886, %v2893
        %v2895 = vmul.f32 %v2894, 1.442695
        %v2896 = vpow.pop %v2895
        %v2897 = vsel %vm2064, %v2896, 0.0
        %2898 = vadd.xlane.f32.xlu0 %v2897
        %v2899 = vpop.xlane.xlu0 %2898
        %v2900 = vrcp.pop %v2899
        %v2901 = vpack.c.bf16 %v2896, %v2896
        %2903 = vrot.lane.b32.xlu0 %v2009, 64
        %v2904 = vpop.permute.xlu0 %2903
        %v2906 = vsel %vm2064, %v2901, 0
        %v2909 = vsel %vm2079, %v2904, 0
        %2911 = vmatprep.subr.bf16.mxu0 0
        %2912 = vmatpush1.bf16.msra.mxu0 0
        %2913 = vmatprep.subr.bf16.mxu0 0
        %2914 = vmatpush1.bf16.msra.mxu0 0
        %2915 = vmatprep.subr.bf16.mxu0 0
        %2916 = vmatpush1.bf16.msra.mxu0 0
        %2917 = vmatprep.subr.bf16.mxu0 0
        %2918 = vmatpush1.bf16.msra.mxu0 0
        %2919 = vmatprep.subr.bf16.mxu0 0
        %2920 = vmatpush1.bf16.msra.mxu0 0
        %2921 = vmatprep.subr.bf16.mxu0 0
        %2922 = vmatpush1.bf16.msra.mxu0 0
        %2923 = vmatprep.subr.bf16.mxu0 0
        %2924 = vmatpush1.bf16.msra.mxu0 0
        %2925 = vmatprep.subr.bf16.mxu0 0
        %2926 = vmatpush1.bf16.msra.mxu0 %v2909
        %2927 = vmatprep.subr.bf16.mxu0 0
        %2928 = vmatpush2.bf16.msra.mxu0 0
        %2929 = vmatprep.subr.bf16.mxu0 0
        %2930 = vmatpush2.bf16.msra.mxu0 0
        %2931 = vmatprep.subr.bf16.mxu0 0
        %2932 = vmatpush2.bf16.msra.mxu0 0
        %2933 = vmatprep.subr.bf16.mxu0 0
        %2934 = vmatpush2.bf16.msra.mxu0 0
        %2935 = vmatprep.subr.bf16.mxu0 0
        %2936 = vmatpush2.bf16.msra.mxu0 0
        %2937 = vmatprep.subr.bf16.mxu0 0
        %2938 = vmatpush2.bf16.msra.mxu0 0
        %2939 = vmatprep.subr.bf16.mxu0 0
        %2940 = vmatpush2.bf16.msra.mxu0 0
        %2941 = vmatprep.subr.bf16.mxu0 0
        %2942 = vmatpush2.bf16.msra.mxu0 0
        %2943 = vmatprep.mubr.bf16.mxu0 0
        %2944 = vmatmul.mubr.bf16.gmra.mxu0 %v2906
        %v2945 = vpop.f32.mrf.mxu0
        %v2946 = vadd.f32 0.0, %v2945
        %v2947 = vpop.f32.mrf.mxu0
        %v2948 = vpop.f32.mrf.mxu0
        %v2949 = vpop.f32.mrf.mxu0
        %2950 = vdwg.mxu0
        %v2951 = vmul.f32 %v2946, %v2900
        %v2952 = vpack.c.bf16 %v2951, %v2951
        %v2953 = vld [vmem:[#allocation7 + $0x120] sm:$0xff]
        %v2954 = vld [vmem:[#allocation7 + $0x128] sm:$0xf]
        %v2955 = vld [vmem:[#allocation7 + $0x12c] sm:$0xff]
        %v2956 = vld [vmem:[#allocation7 + $0x134] sm:$0xf]
        %v2957 = vld [vmem:[#allocation7 + $0x138] sm:$0xff]
        %v2958 = vld [vmem:[#allocation7 + $0x140] sm:$0xf]
        %v2959 = vld [vmem:[#allocation7 + $0x144] sm:$0xff]
        %v2960 = vld [vmem:[#allocation7 + $0x14c] sm:$0xf]
        %v2961 = vld [vmem:[#allocation7 + $0x150] sm:$0xff]
        %v2962 = vld [vmem:[#allocation7 + $0x158] sm:$0xf]
        %v2963 = vld [vmem:[#allocation7 + $0x15c] sm:$0xff]
        %v2964 = vld [vmem:[#allocation7 + $0x164] sm:$0xf]
        %v2965 = vld [vmem:[#allocation7 + $0x168] sm:$0xff]
        %v2966 = vld [vmem:[#allocation7 + $0x170] sm:$0xf]
        %v2967 = vld [vmem:[#allocation7 + $0x174] sm:$0xff]
        %v2968 = vld [vmem:[#allocation7 + $0x17c] sm:$0xf]
        %v2985 = vunpack.c.l.b16 %v2953
        %v2986 = vunpack.c.h.b16 %v2953
        %v2987 = vunpack.c.l.b16 %v2954
        %v2988 = vunpack.c.l.b16 %v2955
        %v2989 = vunpack.c.h.b16 %v2955
        %v2990 = vunpack.c.l.b16 %v2956
        %v2991 = vunpack.c.l.b16 %v2957
        %v2992 = vunpack.c.h.b16 %v2957
        %v2993 = vunpack.c.l.b16 %v2958
        %v2994 = vunpack.c.l.b16 %v2959
        %v2995 = vunpack.c.h.b16 %v2959
        %v2996 = vunpack.c.l.b16 %v2960
        %v2997 = vunpack.c.l.b16 %v2961
        %v2998 = vunpack.c.h.b16 %v2961
        %v2999 = vunpack.c.l.b16 %v2962
        %v3000 = vunpack.c.l.b16 %v2963
        %v3001 = vunpack.c.h.b16 %v2963
        %v3002 = vunpack.c.l.b16 %v2964
        %v3003 = vunpack.c.l.b16 %v2965
        %v3004 = vunpack.c.h.b16 %v2965
        %v3005 = vunpack.c.l.b16 %v2966
        %v3006 = vunpack.c.l.b16 %v2967
        %v3007 = vunpack.c.h.b16 %v2967
        %v3008 = vunpack.c.l.b16 %v2968
        %v3009 = vpack.c.b16 %v2988, %v2985
        %v3010 = vpack.c.b16 %v2989, %v2986
        %v3011 = vpack.c.b16 %v2990, %v2987
        %v3012 = vpack.c.b16 %v2994, %v2991
        %v3013 = vpack.c.b16 %v2995, %v2992
        %v3014 = vpack.c.b16 %v2996, %v2993
        %v3015 = vpack.c.b16 %v3000, %v2997
        %v3016 = vpack.c.b16 %v3001, %v2998
        %v3017 = vpack.c.b16 %v3002, %v2999
        %v3018 = vpack.c.b16 %v3006, %v3003
        %v3019 = vpack.c.b16 %v3007, %v3004
        %v3020 = vpack.c.b16 %v3008, %v3005
        %v3034 = vsel %vm2017, %v2952, 0
        %3036 = vmatprep.subr.bf16.mxu0 0
        %3037 = vmatpush1.bf16.msra.mxu0 0
        %3038 = vmatprep.subr.bf16.mxu0 0
        %3039 = vmatpush1.bf16.msra.mxu0 0
        %3040 = vmatprep.subr.bf16.mxu0 0
        %3041 = vmatpush1.bf16.msra.mxu0 0
        %3042 = vmatprep.subr.bf16.mxu0 0
        %3043 = vmatpush1.bf16.msra.mxu0 0
        %3044 = vmatprep.subr.bf16.mxu0 %v3019
        %3045 = vmatpush1.bf16.msra.mxu0 %v3018
        %3046 = vmatprep.subr.bf16.mxu0 %v3016
        %3047 = vmatpush1.bf16.msra.mxu0 %v3015
        %3048 = vmatprep.subr.bf16.mxu0 %v3013
        %3049 = vmatpush1.bf16.msra.mxu0 %v3012
        %3050 = vmatprep.subr.bf16.mxu0 %v3010
        %3051 = vmatpush1.bf16.msra.mxu0 %v3009
        %3052 = vmatprep.subr.bf16.mxu0 0
        %3053 = vmatpush2.bf16.msra.mxu0 0
        %3054 = vmatprep.subr.bf16.mxu0 0
        %3055 = vmatpush2.bf16.msra.mxu0 0
        %3056 = vmatprep.subr.bf16.mxu0 0
        %3057 = vmatpush2.bf16.msra.mxu0 0
        %3058 = vmatprep.subr.bf16.mxu0 0
        %3059 = vmatpush2.bf16.msra.mxu0 0
        %3060 = vmatprep.subr.bf16.mxu0 0
        %3061 = vmatpush2.bf16.msra.mxu0 0
        %3062 = vmatprep.subr.bf16.mxu0 0
        %3063 = vmatpush2.bf16.msra.mxu0 0
        %3064 = vmatprep.subr.bf16.mxu0 0
        %3065 = vmatpush2.bf16.msra.mxu0 0
        %3066 = vmatprep.subr.bf16.mxu0 0
        %3067 = vmatpush2.bf16.msra.mxu0 0
        %3068 = vmatprep.mubr.bf16.mxu0 0
        %3069 = vmatmul.mubr.bf16.gmra.mxu0 %v3034
        %v3070 = vpop.f32.mrf.mxu0
        %v3071 = vadd.f32 0.0, %v3070
        %v3072 = vpop.f32.mrf.mxu0
        %v3073 = vadd.f32 0.0, %v3072
        %v3074 = vpop.f32.mrf.mxu0
        %v3075 = vpop.f32.mrf.mxu0
        %3076 = vdwg.mxu0
        %3077 = vmatprep.subr.bf16.mxu0 0
        %3078 = vmatpush1.bf16.msra.mxu0 0
        %3079 = vmatprep.subr.bf16.mxu0 0
        %3080 = vmatpush1.bf16.msra.mxu0 0
        %3081 = vmatprep.subr.bf16.mxu0 0
        %3082 = vmatpush1.bf16.msra.mxu0 0
        %3083 = vmatprep.subr.bf16.mxu0 0
        %3084 = vmatpush1.bf16.msra.mxu0 0
        %3085 = vmatprep.subr.bf16.mxu0 0
        %3086 = vmatpush1.bf16.msra.mxu0 %v3020
        %3087 = vmatprep.subr.bf16.mxu0 0
        %3088 = vmatpush1.bf16.msra.mxu0 %v3017
        %3089 = vmatprep.subr.bf16.mxu0 0
        %3090 = vmatpush1.bf16.msra.mxu0 %v3014
        %3091 = vmatprep.subr.bf16.mxu0 0
        %3092 = vmatpush1.bf16.msra.mxu0 %v3011
        %3093 = vmatprep.subr.bf16.mxu0 0
        %3094 = vmatpush2.bf16.msra.mxu0 0
        %3095 = vmatprep.subr.bf16.mxu0 0
        %3096 = vmatpush2.bf16.msra.mxu0 0
        %3097 = vmatprep.subr.bf16.mxu0 0
        %3098 = vmatpush2.bf16.msra.mxu0 0
        %3099 = vmatprep.subr.bf16.mxu0 0
        %3100 = vmatpush2.bf16.msra.mxu0 0
        %3101 = vmatprep.subr.bf16.mxu0 0
        %3102 = vmatpush2.bf16.msra.mxu0 0
        %3103 = vmatprep.subr.bf16.mxu0 0
        %3104 = vmatpush2.bf16.msra.mxu0 0
        %3105 = vmatprep.subr.bf16.mxu0 0
        %3106 = vmatpush2.bf16.msra.mxu0 0
        %3107 = vmatprep.subr.bf16.mxu0 0
        %3108 = vmatpush2.bf16.msra.mxu0 0
        %3109 = vmatprep.mubr.bf16.mxu0 0
        %3110 = vmatmul.mubr.bf16.gmra.mxu0 %v3034
        %v3111 = vpop.f32.mrf.mxu0
        %v3112 = vadd.f32 0.0, %v3111
        %v3113 = vpop.f32.mrf.mxu0
        %v3114 = vpop.f32.mrf.mxu0
        %v3115 = vpop.f32.mrf.mxu0
        %3116 = vdwg.mxu0
        %v3117 = vadd.f32 %v2836, %v3071
        %v3118 = vadd.f32 %v2837, %v3073
        %v3119 = vadd.f32 %v2838, %v3112
        %v3121 = vsel %vm2017, %v2004, 0
        %v3124 = vsel %vm2017, %v2007, 0
        %3126 = vmatprep.subr.bf16.mxu0 0
        %3127 = vmatpush1.bf16.xpose.msra.mxu0 0
        %3128 = vmatprep.subr.bf16.mxu0 0
        %3129 = vmatpush1.bf16.xpose.msra.mxu0 0
        %3130 = vmatprep.subr.bf16.mxu0 0
        %3131 = vmatpush1.bf16.xpose.msra.mxu0 0
        %3132 = vmatprep.subr.bf16.mxu0 0
        %3133 = vmatpush1.bf16.xpose.msra.mxu0 0
        %3134 = vmatprep.subr.bf16.mxu0 0
        %3135 = vmatpush1.bf16.xpose.msra.mxu0 0
        %3136 = vmatprep.subr.bf16.mxu0 0
        %3137 = vmatpush1.bf16.xpose.msra.mxu0 0
        %3138 = vmatprep.subr.bf16.mxu0 0
        %3139 = vmatpush1.bf16.xpose.msra.mxu0 0
        %3140 = vmatprep.subr.bf16.mxu0 0
        %3141 = vmatpush1.bf16.xpose.msra.mxu0 %v3124
        %3142 = vmatprep.subr.bf16.mxu0 0
        %3143 = vmatpush2.bf16.xpose.msra.mxu0 0
        %3144 = vmatprep.subr.bf16.mxu0 0
        %3145 = vmatpush2.bf16.xpose.msra.mxu0 0
        %3146 = vmatprep.subr.bf16.mxu0 0
        %3147 = vmatpush2.bf16.xpose.msra.mxu0 0
        %3148 = vmatprep.subr.bf16.mxu0 0
        %3149 = vmatpush2.bf16.xpose.msra.mxu0 0
        %3150 = vmatprep.subr.bf16.mxu0 0
        %3151 = vmatpush2.bf16.xpose.msra.mxu0 0
        %3152 = vmatprep.subr.bf16.mxu0 0
        %3153 = vmatpush2.bf16.xpose.msra.mxu0 0
        %3154 = vmatprep.subr.bf16.mxu0 0
        %3155 = vmatpush2.bf16.xpose.msra.mxu0 0
        %3156 = vmatprep.subr.bf16.mxu0 0
        %3157 = vmatpush2.bf16.xpose.msra.mxu0 0
        %3158 = vmatprep.mubr.bf16.mxu0 0
        %3159 = vmatmul.mubr.bf16.gmra.mxu0 %v3121
        %v3160 = vpop.f32.mrf.mxu0
        %v3161 = vadd.f32 %v2016, %v3160
        %v3162 = vpop.f32.mrf.mxu0
        %v3163 = vpop.f32.mrf.mxu0
        %v3164 = vpop.f32.mrf.mxu0
        %3165 = vdwg.mxu0
        %v3166 = vsel %vm2064, %v3161, -inf
        %3167 = vmax.xlane.f32.xlu0 %v3166
        %v3168 = vpop.xlane.xlu0 %3167
        %v3169 = vsub.f32 %v3161, %v3168
        %v3170 = vmul.f32 %v3169, 1.442695
        %v3171 = vpow.pop %v3170
        %v3172 = vsel %vm2064, %v3171, 0.0
        %3173 = vadd.xlane.f32.xlu0 %v3172
        %v3174 = vpop.xlane.xlu0 %3173
        %v3175 = vrcp.pop %v3174
        %v3176 = vpack.c.bf16 %v3171, %v3171
        %v3178 = vsel %vm2064, %v3176, 0
        %v3181 = vsel %vm2079, %v2010, 0
        %3183 = vmatprep.subr.bf16.mxu0 0
        %3184 = vmatpush1.bf16.msra.mxu0 0
        %3185 = vmatprep.subr.bf16.mxu0 0
        %3186 = vmatpush1.bf16.msra.mxu0 0
        %3187 = vmatprep.subr.bf16.mxu0 0
        %3188 = vmatpush1.bf16.msra.mxu0 0
        %3189 = vmatprep.subr.bf16.mxu0 0
        %3190 = vmatpush1.bf16.msra.mxu0 0
        %3191 = vmatprep.subr.bf16.mxu0 0
        %3192 = vmatpush1.bf16.msra.mxu0 0
        %3193 = vmatprep.subr.bf16.mxu0 0
        %3194 = vmatpush1.bf16.msra.mxu0 0
        %3195 = vmatprep.subr.bf16.mxu0 0
        %3196 = vmatpush1.bf16.msra.mxu0 0
        %3197 = vmatprep.subr.bf16.mxu0 0
        %3198 = vmatpush1.bf16.msra.mxu0 %v3181
        %3199 = vmatprep.subr.bf16.mxu0 0
        %3200 = vmatpush2.bf16.msra.mxu0 0
        %3201 = vmatprep.subr.bf16.mxu0 0
        %3202 = vmatpush2.bf16.msra.mxu0 0
        %3203 = vmatprep.subr.bf16.mxu0 0
        %3204 = vmatpush2.bf16.msra.mxu0 0
        %3205 = vmatprep.subr.bf16.mxu0 0
        %3206 = vmatpush2.bf16.msra.mxu0 0
        %3207 = vmatprep.subr.bf16.mxu0 0
        %3208 = vmatpush2.bf16.msra.mxu0 0
        %3209 = vmatprep.subr.bf16.mxu0 0
        %3210 = vmatpush2.bf16.msra.mxu0 0
        %3211 = vmatprep.subr.bf16.mxu0 0
        %3212 = vmatpush2.bf16.msra.mxu0 0
        %3213 = vmatprep.subr.bf16.mxu0 0
        %3214 = vmatpush2.bf16.msra.mxu0 0
        %3215 = vmatprep.mubr.bf16.mxu0 0
        %3216 = vmatmul.mubr.bf16.gmra.mxu0 %v3178
        %v3217 = vpop.f32.mrf.mxu0
        %v3218 = vadd.f32 0.0, %v3217
        %v3219 = vpop.f32.mrf.mxu0
        %v3220 = vpop.f32.mrf.mxu0
        %v3221 = vpop.f32.mrf.mxu0
        %3222 = vdwg.mxu0
        %v3223 = vmul.f32 %v3218, %v3175
        %v3224 = vpack.c.bf16 %v3223, %v3223
        %v3225 = vld [vmem:[#allocation7 + $0x180] sm:$0xff]
        %v3226 = vld [vmem:[#allocation7 + $0x188] sm:$0xf]
        %v3227 = vld [vmem:[#allocation7 + $0x18c] sm:$0xff]
        %v3228 = vld [vmem:[#allocation7 + $0x194] sm:$0xf]
        %v3229 = vld [vmem:[#allocation7 + $0x198] sm:$0xff]
        %v3230 = vld [vmem:[#allocation7 + $0x1a0] sm:$0xf]
        %v3231 = vld [vmem:[#allocation7 + $0x1a4] sm:$0xff]
        %v3232 = vld [vmem:[#allocation7 + $0x1ac] sm:$0xf]
        %v3233 = vld [vmem:[#allocation7 + $0x1b0] sm:$0xff]
        %v3234 = vld [vmem:[#allocation7 + $0x1b8] sm:$0xf]
        %v3235 = vld [vmem:[#allocation7 + $0x1bc] sm:$0xff]
        %v3236 = vld [vmem:[#allocation7 + $0x1c4] sm:$0xf]
        %v3237 = vld [vmem:[#allocation7 + $0x1c8] sm:$0xff]
        %v3238 = vld [vmem:[#allocation7 + $0x1d0] sm:$0xf]
        %v3239 = vld [vmem:[#allocation7 + $0x1d4] sm:$0xff]
        %v3240 = vld [vmem:[#allocation7 + $0x1dc] sm:$0xf]
        %v3257 = vunpack.c.l.b16 %v3225
        %v3258 = vunpack.c.h.b16 %v3225
        %v3259 = vunpack.c.l.b16 %v3226
        %v3260 = vunpack.c.l.b16 %v3227
        %v3261 = vunpack.c.h.b16 %v3227
        %v3262 = vunpack.c.l.b16 %v3228
        %v3263 = vunpack.c.l.b16 %v3229
        %v3264 = vunpack.c.h.b16 %v3229
        %v3265 = vunpack.c.l.b16 %v3230
        %v3266 = vunpack.c.l.b16 %v3231
        %v3267 = vunpack.c.h.b16 %v3231
        %v3268 = vunpack.c.l.b16 %v3232
        %v3269 = vunpack.c.l.b16 %v3233
        %v3270 = vunpack.c.h.b16 %v3233
        %v3271 = vunpack.c.l.b16 %v3234
        %v3272 = vunpack.c.l.b16 %v3235
        %v3273 = vunpack.c.h.b16 %v3235
        %v3274 = vunpack.c.l.b16 %v3236
        %v3275 = vunpack.c.l.b16 %v3237
        %v3276 = vunpack.c.h.b16 %v3237
        %v3277 = vunpack.c.l.b16 %v3238
        %v3278 = vunpack.c.l.b16 %v3239
        %v3279 = vunpack.c.h.b16 %v3239
        %v3280 = vunpack.c.l.b16 %v3240
        %v3281 = vpack.c.b16 %v3260, %v3257
        %v3282 = vpack.c.b16 %v3261, %v3258
        %v3283 = vpack.c.b16 %v3262, %v3259
        %v3284 = vpack.c.b16 %v3266, %v3263
        %v3285 = vpack.c.b16 %v3267, %v3264
        %v3286 = vpack.c.b16 %v3268, %v3265
        %v3287 = vpack.c.b16 %v3272, %v3269
        %v3288 = vpack.c.b16 %v3273, %v3270
        %v3289 = vpack.c.b16 %v3274, %v3271
        %v3290 = vpack.c.b16 %v3278, %v3275
        %v3291 = vpack.c.b16 %v3279, %v3276
        %v3292 = vpack.c.b16 %v3280, %v3277
        %v3306 = vsel %vm2017, %v3224, 0
        %3308 = vmatprep.subr.bf16.mxu0 0
        %3309 = vmatpush1.bf16.msra.mxu0 0
        %3310 = vmatprep.subr.bf16.mxu0 0
        %3311 = vmatpush1.bf16.msra.mxu0 0
        %3312 = vmatprep.subr.bf16.mxu0 0
        %3313 = vmatpush1.bf16.msra.mxu0 0
        %3314 = vmatprep.subr.bf16.mxu0 0
        %3315 = vmatpush1.bf16.msra.mxu0 0
        %3316 = vmatprep.subr.bf16.mxu0 %v3291
        %3317 = vmatpush1.bf16.msra.mxu0 %v3290
        %3318 = vmatprep.subr.bf16.mxu0 %v3288
        %3319 = vmatpush1.bf16.msra.mxu0 %v3287
        %3320 = vmatprep.subr.bf16.mxu0 %v3285
        %3321 = vmatpush1.bf16.msra.mxu0 %v3284
        %3322 = vmatprep.subr.bf16.mxu0 %v3282
        %3323 = vmatpush1.bf16.msra.mxu0 %v3281
        %3324 = vmatprep.subr.bf16.mxu0 0
        %3325 = vmatpush2.bf16.msra.mxu0 0
        %3326 = vmatprep.subr.bf16.mxu0 0
        %3327 = vmatpush2.bf16.msra.mxu0 0
        %3328 = vmatprep.subr.bf16.mxu0 0
        %3329 = vmatpush2.bf16.msra.mxu0 0
        %3330 = vmatprep.subr.bf16.mxu0 0
        %3331 = vmatpush2.bf16.msra.mxu0 0
        %3332 = vmatprep.subr.bf16.mxu0 0
        %3333 = vmatpush2.bf16.msra.mxu0 0
        %3334 = vmatprep.subr.bf16.mxu0 0
        %3335 = vmatpush2.bf16.msra.mxu0 0
        %3336 = vmatprep.subr.bf16.mxu0 0
        %3337 = vmatpush2.bf16.msra.mxu0 0
        %3338 = vmatprep.subr.bf16.mxu0 0
        %3339 = vmatpush2.bf16.msra.mxu0 0
        %3340 = vmatprep.mubr.bf16.mxu0 0
        %3341 = vmatmul.mubr.bf16.gmra.mxu0 %v3306
        %v3342 = vpop.f32.mrf.mxu0
        %v3343 = vadd.f32 0.0, %v3342
        %v3344 = vpop.f32.mrf.mxu0
        %v3345 = vadd.f32 0.0, %v3344
        %v3346 = vpop.f32.mrf.mxu0
        %v3347 = vpop.f32.mrf.mxu0
        %3348 = vdwg.mxu0
        %3349 = vmatprep.subr.bf16.mxu0 0
        %3350 = vmatpush1.bf16.msra.mxu0 0
        %3351 = vmatprep.subr.bf16.mxu0 0
        %3352 = vmatpush1.bf16.msra.mxu0 0
        %3353 = vmatprep.subr.bf16.mxu0 0
        %3354 = vmatpush1.bf16.msra.mxu0 0
        %3355 = vmatprep.subr.bf16.mxu0 0
        %3356 = vmatpush1.bf16.msra.mxu0 0
        %3357 = vmatprep.subr.bf16.mxu0 0
        %3358 = vmatpush1.bf16.msra.mxu0 %v3292
        %3359 = vmatprep.subr.bf16.mxu0 0
        %3360 = vmatpush1.bf16.msra.mxu0 %v3289
        %3361 = vmatprep.subr.bf16.mxu0 0
        %3362 = vmatpush1.bf16.msra.mxu0 %v3286
        %3363 = vmatprep.subr.bf16.mxu0 0
        %3364 = vmatpush1.bf16.msra.mxu0 %v3283
        %3365 = vmatprep.subr.bf16.mxu0 0
        %3366 = vmatpush2.bf16.msra.mxu0 0
        %3367 = vmatprep.subr.bf16.mxu0 0
        %3368 = vmatpush2.bf16.msra.mxu0 0
        %3369 = vmatprep.subr.bf16.mxu0 0
        %3370 = vmatpush2.bf16.msra.mxu0 0
        %3371 = vmatprep.subr.bf16.mxu0 0
        %3372 = vmatpush2.bf16.msra.mxu0 0
        %3373 = vmatprep.subr.bf16.mxu0 0
        %3374 = vmatpush2.bf16.msra.mxu0 0
        %3375 = vmatprep.subr.bf16.mxu0 0
        %3376 = vmatpush2.bf16.msra.mxu0 0
        %3377 = vmatprep.subr.bf16.mxu0 0
        %3378 = vmatpush2.bf16.msra.mxu0 0
        %3379 = vmatprep.subr.bf16.mxu0 0
        %3380 = vmatpush2.bf16.msra.mxu0 0
        %3381 = vmatprep.mubr.bf16.mxu0 0
        %3382 = vmatmul.mubr.bf16.gmra.mxu0 %v3306
        %v3383 = vpop.f32.mrf.mxu0
        %v3384 = vadd.f32 0.0, %v3383
        %v3385 = vpop.f32.mrf.mxu0
        %v3386 = vpop.f32.mrf.mxu0
        %v3387 = vpop.f32.mrf.mxu0
        %3388 = vdwg.mxu0
        %v3389 = vadd.f32 %v3117, %v3343
        %v3390 = vadd.f32 %v3118, %v3345
        %v3391 = vadd.f32 %v3119, %v3384
        %3393 = vrot.lane.b32.xlu0 %v2004, 64
        %v3394 = vpop.permute.xlu0 %3393
        %3396 = vrot.lane.b32.xlu0 %v2007, 64
        %v3397 = vpop.permute.xlu0 %3396
        %v3399 = vsel %vm2017, %v3394, 0
        %v3402 = vsel %vm2017, %v3397, 0
        %3404 = vmatprep.subr.bf16.mxu0 0
        %3405 = vmatpush1.bf16.xpose.msra.mxu0 0
        %3406 = vmatprep.subr.bf16.mxu0 0
        %3407 = vmatpush1.bf16.xpose.msra.mxu0 0
        %3408 = vmatprep.subr.bf16.mxu0 0
        %3409 = vmatpush1.bf16.xpose.msra.mxu0 0
        %3410 = vmatprep.subr.bf16.mxu0 0
        %3411 = vmatpush1.bf16.xpose.msra.mxu0 0
        %3412 = vmatprep.subr.bf16.mxu0 0
        %3413 = vmatpush1.bf16.xpose.msra.mxu0 0
        %3414 = vmatprep.subr.bf16.mxu0 0
        %3415 = vmatpush1.bf16.xpose.msra.mxu0 0
        %3416 = vmatprep.subr.bf16.mxu0 0
        %3417 = vmatpush1.bf16.xpose.msra.mxu0 0
        %3418 = vmatprep.subr.bf16.mxu0 0
        %3419 = vmatpush1.bf16.xpose.msra.mxu0 %v3402
        %3420 = vmatprep.subr.bf16.mxu0 0
        %3421 = vmatpush2.bf16.xpose.msra.mxu0 0
        %3422 = vmatprep.subr.bf16.mxu0 0
        %3423 = vmatpush2.bf16.xpose.msra.mxu0 0
        %3424 = vmatprep.subr.bf16.mxu0 0
        %3425 = vmatpush2.bf16.xpose.msra.mxu0 0
        %3426 = vmatprep.subr.bf16.mxu0 0
        %3427 = vmatpush2.bf16.xpose.msra.mxu0 0
        %3428 = vmatprep.subr.bf16.mxu0 0
        %3429 = vmatpush2.bf16.xpose.msra.mxu0 0
        %3430 = vmatprep.subr.bf16.mxu0 0
        %3431 = vmatpush2.bf16.xpose.msra.mxu0 0
        %3432 = vmatprep.subr.bf16.mxu0 0
        %3433 = vmatpush2.bf16.xpose.msra.mxu0 0
        %3434 = vmatprep.subr.bf16.mxu0 0
        %3435 = vmatpush2.bf16.xpose.msra.mxu0 0
        %3436 = vmatprep.mubr.bf16.mxu0 0
        %3437 = vmatmul.mubr.bf16.gmra.mxu0 %v3399
        %v3438 = vpop.f32.mrf.mxu0
        %v3439 = vadd.f32 %v2016, %v3438
        %v3440 = vpop.f32.mrf.mxu0
        %v3441 = vpop.f32.mrf.mxu0
        %v3442 = vpop.f32.mrf.mxu0
        %3443 = vdwg.mxu0
        %v3444 = vsel %vm2064, %v3439, -inf
        %3445 = vmax.xlane.f32.xlu0 %v3444
        %v3446 = vpop.xlane.xlu0 %3445
        %v3447 = vsub.f32 %v3439, %v3446
        %v3448 = vmul.f32 %v3447, 1.442695
        %v3449 = vpow.pop %v3448
        %v3450 = vsel %vm2064, %v3449, 0.0
        %3451 = vadd.xlane.f32.xlu0 %v3450
        %v3452 = vpop.xlane.xlu0 %3451
        %v3453 = vrcp.pop %v3452
        %v3454 = vpack.c.bf16 %v3449, %v3449
        %3456 = vrot.lane.b32.xlu0 %v2010, 64
        %v3457 = vpop.permute.xlu0 %3456
        %v3459 = vsel %vm2064, %v3454, 0
        %v3462 = vsel %vm2079, %v3457, 0
        %3464 = vmatprep.subr.bf16.mxu0 0
        %3465 = vmatpush1.bf16.msra.mxu0 0
        %3466 = vmatprep.subr.bf16.mxu0 0
        %3467 = vmatpush1.bf16.msra.mxu0 0
        %3468 = vmatprep.subr.bf16.mxu0 0
        %3469 = vmatpush1.bf16.msra.mxu0 0
        %3470 = vmatprep.subr.bf16.mxu0 0
        %3471 = vmatpush1.bf16.msra.mxu0 0
        %3472 = vmatprep.subr.bf16.mxu0 0
        %3473 = vmatpush1.bf16.msra.mxu0 0
        %3474 = vmatprep.subr.bf16.mxu0 0
        %3475 = vmatpush1.bf16.msra.mxu0 0
        %3476 = vmatprep.subr.bf16.mxu0 0
        %3477 = vmatpush1.bf16.msra.mxu0 0
        %3478 = vmatprep.subr.bf16.mxu0 0
        %3479 = vmatpush1.bf16.msra.mxu0 %v3462
        %3480 = vmatprep.subr.bf16.mxu0 0
        %3481 = vmatpush2.bf16.msra.mxu0 0
        %3482 = vmatprep.subr.bf16.mxu0 0
        %3483 = vmatpush2.bf16.msra.mxu0 0
        %3484 = vmatprep.subr.bf16.mxu0 0
        %3485 = vmatpush2.bf16.msra.mxu0 0
        %3486 = vmatprep.subr.bf16.mxu0 0
        %3487 = vmatpush2.bf16.msra.mxu0 0
        %3488 = vmatprep.subr.bf16.mxu0 0
        %3489 = vmatpush2.bf16.msra.mxu0 0
        %3490 = vmatprep.subr.bf16.mxu0 0
        %3491 = vmatpush2.bf16.msra.mxu0 0
        %3492 = vmatprep.subr.bf16.mxu0 0
        %3493 = vmatpush2.bf16.msra.mxu0 0
        %3494 = vmatprep.subr.bf16.mxu0 0
        %3495 = vmatpush2.bf16.msra.mxu0 0
        %3496 = vmatprep.mubr.bf16.mxu0 0
        %3497 = vmatmul.mubr.bf16.gmra.mxu0 %v3459
        %v3498 = vpop.f32.mrf.mxu0
        %v3499 = vadd.f32 0.0, %v3498
        %v3500 = vpop.f32.mrf.mxu0
        %v3501 = vpop.f32.mrf.mxu0
        %v3502 = vpop.f32.mrf.mxu0
        %3503 = vdwg.mxu0
        %v3504 = vmul.f32 %v3499, %v3453
        %v3505 = vpack.c.bf16 %v3504, %v3504
        %v3506 = vld [vmem:[#allocation7 + $0x1e0] sm:$0xff]
        %v3507 = vld [vmem:[#allocation7 + $0x1e8] sm:$0xf]
        %v3508 = vld [vmem:[#allocation7 + $0x1ec] sm:$0xff]
        %v3509 = vld [vmem:[#allocation7 + $0x1f4] sm:$0xf]
        %v3510 = vld [vmem:[#allocation7 + $0x1f8] sm:$0xff]
        %v3511 = vld [vmem:[#allocation7 + $0x200] sm:$0xf]
        %v3512 = vld [vmem:[#allocation7 + $0x204] sm:$0xff]
        %v3513 = vld [vmem:[#allocation7 + $0x20c] sm:$0xf]
        %v3514 = vld [vmem:[#allocation7 + $0x210] sm:$0xff]
        %v3515 = vld [vmem:[#allocation7 + $0x218] sm:$0xf]
        %v3516 = vld [vmem:[#allocation7 + $0x21c] sm:$0xff]
        %v3517 = vld [vmem:[#allocation7 + $0x224] sm:$0xf]
        %v3518 = vld [vmem:[#allocation7 + $0x228] sm:$0xff]
        %v3519 = vld [vmem:[#allocation7 + $0x230] sm:$0xf]
        %v3520 = vld [vmem:[#allocation7 + $0x234] sm:$0xff]
        %v3521 = vld [vmem:[#allocation7 + $0x23c] sm:$0xf]
        %v3538 = vunpack.c.l.b16 %v3506
        %v3539 = vunpack.c.h.b16 %v3506
        %v3540 = vunpack.c.l.b16 %v3507
        %v3541 = vunpack.c.l.b16 %v3508
        %v3542 = vunpack.c.h.b16 %v3508
        %v3543 = vunpack.c.l.b16 %v3509
        %v3544 = vunpack.c.l.b16 %v3510
        %v3545 = vunpack.c.h.b16 %v3510
        %v3546 = vunpack.c.l.b16 %v3511
        %v3547 = vunpack.c.l.b16 %v3512
        %v3548 = vunpack.c.h.b16 %v3512
        %v3549 = vunpack.c.l.b16 %v3513
        %v3550 = vunpack.c.l.b16 %v3514
        %v3551 = vunpack.c.h.b16 %v3514
        %v3552 = vunpack.c.l.b16 %v3515
        %v3553 = vunpack.c.l.b16 %v3516
        %v3554 = vunpack.c.h.b16 %v3516
        %v3555 = vunpack.c.l.b16 %v3517
        %v3556 = vunpack.c.l.b16 %v3518
        %v3557 = vunpack.c.h.b16 %v3518
        %v3558 = vunpack.c.l.b16 %v3519
        %v3559 = vunpack.c.l.b16 %v3520
        %v3560 = vunpack.c.h.b16 %v3520
        %v3561 = vunpack.c.l.b16 %v3521
        %v3562 = vpack.c.b16 %v3541, %v3538
        %v3563 = vpack.c.b16 %v3542, %v3539
        %v3564 = vpack.c.b16 %v3543, %v3540
        %v3565 = vpack.c.b16 %v3547, %v3544
        %v3566 = vpack.c.b16 %v3548, %v3545
        %v3567 = vpack.c.b16 %v3549, %v3546
        %v3568 = vpack.c.b16 %v3553, %v3550
        %v3569 = vpack.c.b16 %v3554, %v3551
        %v3570 = vpack.c.b16 %v3555, %v3552
        %v3571 = vpack.c.b16 %v3559, %v3556
        %v3572 = vpack.c.b16 %v3560, %v3557
        %v3573 = vpack.c.b16 %v3561, %v3558
        %v3587 = vsel %vm2017, %v3505, 0
        %3589 = vmatprep.subr.bf16.mxu0 0
        %3590 = vmatpush1.bf16.msra.mxu0 0
        %3591 = vmatprep.subr.bf16.mxu0 0
        %3592 = vmatpush1.bf16.msra.mxu0 0
        %3593 = vmatprep.subr.bf16.mxu0 0
        %3594 = vmatpush1.bf16.msra.mxu0 0
        %3595 = vmatprep.subr.bf16.mxu0 0
        %3596 = vmatpush1.bf16.msra.mxu0 0
        %3597 = vmatprep.subr.bf16.mxu0 %v3572
        %3598 = vmatpush1.bf16.msra.mxu0 %v3571
        %3599 = vmatprep.subr.bf16.mxu0 %v3569
        %3600 = vmatpush1.bf16.msra.mxu0 %v3568
        %3601 = vmatprep.subr.bf16.mxu0 %v3566
        %3602 = vmatpush1.bf16.msra.mxu0 %v3565
        %3603 = vmatprep.subr.bf16.mxu0 %v3563
        %3604 = vmatpush1.bf16.msra.mxu0 %v3562
        %3605 = vmatprep.subr.bf16.mxu0 0
        %3606 = vmatpush2.bf16.msra.mxu0 0
        %3607 = vmatprep.subr.bf16.mxu0 0
        %3608 = vmatpush2.bf16.msra.mxu0 0
        %3609 = vmatprep.subr.bf16.mxu0 0
        %3610 = vmatpush2.bf16.msra.mxu0 0
        %3611 = vmatprep.subr.bf16.mxu0 0
        %3612 = vmatpush2.bf16.msra.mxu0 0
        %3613 = vmatprep.subr.bf16.mxu0 0
        %3614 = vmatpush2.bf16.msra.mxu0 0
        %3615 = vmatprep.subr.bf16.mxu0 0
        %3616 = vmatpush2.bf16.msra.mxu0 0
        %3617 = vmatprep.subr.bf16.mxu0 0
        %3618 = vmatpush2.bf16.msra.mxu0 0
        %3619 = vmatprep.subr.bf16.mxu0 0
        %3620 = vmatpush2.bf16.msra.mxu0 0
        %3621 = vmatprep.mubr.bf16.mxu0 0
        %3622 = vmatmul.mubr.bf16.gmra.mxu0 %v3587
        %v3623 = vpop.f32.mrf.mxu0
        %v3624 = vadd.f32 0.0, %v3623
        %v3625 = vpop.f32.mrf.mxu0
        %v3626 = vadd.f32 0.0, %v3625
        %v3627 = vpop.f32.mrf.mxu0
        %v3628 = vpop.f32.mrf.mxu0
        %3629 = vdwg.mxu0
        %3630 = vmatprep.subr.bf16.mxu0 0
        %3631 = vmatpush1.bf16.msra.mxu0 0
        %3632 = vmatprep.subr.bf16.mxu0 0
        %3633 = vmatpush1.bf16.msra.mxu0 0
        %3634 = vmatprep.subr.bf16.mxu0 0
        %3635 = vmatpush1.bf16.msra.mxu0 0
        %3636 = vmatprep.subr.bf16.mxu0 0
        %3637 = vmatpush1.bf16.msra.mxu0 0
        %3638 = vmatprep.subr.bf16.mxu0 0
        %3639 = vmatpush1.bf16.msra.mxu0 %v3573
        %3640 = vmatprep.subr.bf16.mxu0 0
        %3641 = vmatpush1.bf16.msra.mxu0 %v3570
        %3642 = vmatprep.subr.bf16.mxu0 0
        %3643 = vmatpush1.bf16.msra.mxu0 %v3567
        %3644 = vmatprep.subr.bf16.mxu0 0
        %3645 = vmatpush1.bf16.msra.mxu0 %v3564
        %3646 = vmatprep.subr.bf16.mxu0 0
        %3647 = vmatpush2.bf16.msra.mxu0 0
        %3648 = vmatprep.subr.bf16.mxu0 0
        %3649 = vmatpush2.bf16.msra.mxu0 0
        %3650 = vmatprep.subr.bf16.mxu0 0
        %3651 = vmatpush2.bf16.msra.mxu0 0
        %3652 = vmatprep.subr.bf16.mxu0 0
        %3653 = vmatpush2.bf16.msra.mxu0 0
        %3654 = vmatprep.subr.bf16.mxu0 0
        %3655 = vmatpush2.bf16.msra.mxu0 0
        %3656 = vmatprep.subr.bf16.mxu0 0
        %3657 = vmatpush2.bf16.msra.mxu0 0
        %3658 = vmatprep.subr.bf16.mxu0 0
        %3659 = vmatpush2.bf16.msra.mxu0 0
        %3660 = vmatprep.subr.bf16.mxu0 0
        %3661 = vmatpush2.bf16.msra.mxu0 0
        %3662 = vmatprep.mubr.bf16.mxu0 0
        %3663 = vmatmul.mubr.bf16.gmra.mxu0 %v3587
        %v3664 = vpop.f32.mrf.mxu0
        %v3665 = vadd.f32 0.0, %v3664
        %v3666 = vpop.f32.mrf.mxu0
        %v3667 = vpop.f32.mrf.mxu0
        %v3668 = vpop.f32.mrf.mxu0
        %3669 = vdwg.mxu0
        %v3670 = vadd.f32 %v3389, %v3624
        %v3671 = vadd.f32 %v3390, %v3626
        %v3672 = vadd.f32 %v3391, %v3665
        %v3673 = vld [vmem:[%s3] sm:$0x7]
        %v3675 = vlaneseq
        %v3676 = vshrl.u32 %v3675, 7
        %v3677 = vsub.s32 0, %v3676
        %v3678 = vrot.slane %v3673, %v3677
        %v3679 = vlaneseq
        %v3680 = vshrl.u32 %v3679, 7
        %v3681 = vsub.s32 1, %v3680
        %v3682 = vrot.slane %v3673, %v3681
        %v3683 = vlaneseq
        %v3684 = vshrl.u32 %v3683, 7
        %v3685 = vsub.s32 2, %v3684
        %v3686 = vrot.slane %v3673, %v3685
        %v3690 = vadd.f32 %v3670, %v3678
        %v3691 = vadd.f32 %v3671, %v3682
        %v3692 = vadd.f32 %v3672, %v3686
        %3693 = vst [vmem:[%s242] sm:$0xff] %v3690
        %3694 = vst [vmem:[%s242 + $0x8] sm:$0xff] %v3691
        %3695 = vst [vmem:[%s242 + $0x10] sm:$0xff] %v3692
        %s3696 = sand.u32 %s119, 1
        %s3697 = scalar_lea.sflag [#allocation4], %s3696
        %s3698 = sand.u32 %s119, 1
        %s3699 = smul.addr %s3698, 24
        %s3700 = scalar_lea.vmem [#allocation8], %s3699
        // Predicated region
        $region49: #{tpu_custom_call.1} parent=35 // pred_check
          %p3701 = pneg %p129
        $region50: #{tpu_custom_call.1} parent=35 // pred_check_branch
          %3703 = sbr.rel (%p3701) target = $region52
        $region51: #{tpu_custom_call.1} parent=35 // pred_region
          %s3705 = ssub.s32 384, 384
          %3706 = vsyncadd %s3697, %s3705
          %s3707 = smul.addr %s22, 3
          %s3708 = smul.addr %s3707, 128
          %s3709 = scalar_lea.hbm %s4, %s3708
          %s3711 = sshll.u32 %s3700, 4
          %s3712 = int_to_ptr.vmem [resolvable:$true] %s3711
          %3714 = dma.vmem_to_hbm [thread:$0]  %s3712, 384, %s3709, %s3697
        $region52: #{tpu_custom_call.1} parent=35 // pred_fallthru
          _
      $region36: #{tpu_custom_call.1} parent=5 // pred_fallthru
        _
      %p3715 = scmp.le.s32.totalorder 2, %s17
      // Predicated region
      $region53: #{tpu_custom_call.1} parent=5 // pred_check
        %p3716 = pneg %p3715
      $region54: #{tpu_custom_call.1} parent=5 // pred_check_branch
        %3718 = sbr.rel (%p3716) target = $region56
      $region55: #{tpu_custom_call.1} parent=5 // pred_region
        %s3719 = ssub.s32 %s17, 2
        // Predicated region
        $region57: #{tpu_custom_call.1} parent=55 // pred_check
          %p3720 = pneg %p135
        $region58: #{tpu_custom_call.1} parent=55 // pred_check_branch
          %3722 = sbr.rel (%p3720) target = $region60
        $region59: #{tpu_custom_call.1} parent=55 // pred_region
          %s3723 = sand.u32 %s120, 1
          %s3724 = scalar_lea.sflag [#allocation4], %s3723
          %s3725 = sand.u32 %s120, 1
          %s3726 = smul.addr %s3725, 24
          %s3727 = scalar_lea.vmem [#allocation8], %s3726
          %3728 = dma.done %s3724, 384
        $region60: #{tpu_custom_call.1} parent=55 // pred_fallthru
          _
      $region56: #{tpu_custom_call.1} parent=5 // pred_fallthru
        _
    $region6: #{tpu_custom_call.1} parent=1 // loop_footer
      %s21 = sadd.s32 1, %s17
    $region7: #{tpu_custom_call.1} parent=1 // loop_footer_branch
      %16 = sbr.rel target = $region3
    $region8: #{tpu_custom_call.1} parent=1 // loop_exit
      _
    %3729 = vsyncpa [#allocation3], 1
    %s3730 = scalar_lea.sflag [#allocation3], 1
    %3731 = vsyncpa %s3730, 1
    %3732 = vsyncpa [#allocation6], 1
    %3733 = vsyncpa [#allocation4], 1
    %s3734 = scalar_lea.sflag [#allocation4], 1
    %3735 = vsyncpa %s3734, 1

</llo_original>
